<compile_context>
chip_gen: v7x
topology: tpu7x:2x2x1
jax: 0.10.0
libtpu: 0.0.40
codegen_flags: <defaults>
</compile_context>

<pallas_src>
import functools
import math

import jax
import jax.numpy as jnp
from jax.experimental import pallas as pl
from jax.experimental.pallas import tpu as pltpu


def _layernorm(v, g, b, eps=1e-5):
    mu = jnp.mean(v, axis=-1, keepdims=True)
    var = jnp.mean((v - mu) ** 2, axis=-1, keepdims=True)
    return (v - mu) * jax.lax.rsqrt(var + eps) * g + b


def perceiver_xattn_kernel(
    # inputs (per-batch-tile)
    x_f_ref, x_ref, mask_ref,
    # layernorm params
    g_kv_ref, b_kv_ref, g_q_ref, b_q_ref, g2_ref, b2_ref,
    # attention params (K|V fused)
    wq_ref, bq_ref, wkv_ref, bkv_ref, wo_ref, bo_ref,
    # feedforward params
    w1_ref, b1_ref, w2_ref, b2f_ref,
    # output
    out_ref,
    *, num_heads,
):
    f32 = jnp.float32
    bf16 = jnp.bfloat16

    Bt, S_f, D = x_f_ref.shape
    _, S_q, _ = x_ref.shape
    S_kv = S_f + S_q
    H = num_heads
    Dh = D // H
    scale = 1.0 / math.sqrt(Dh)

    x_f = x_f_ref[...].astype(f32)                     # [Bt, S_f, D] (bf16 DMA -> f32 for LN)
    x = x_ref[...].astype(f32)                         # [Bt, S_q, D]
    x2 = x.reshape(Bt * S_q, D)

    # ---- pre-attention LayerNorms (f32 on VPU) ----------------------------------
    # ln1_kv is row-wise, so LN(cat([x_f, x])) == cat(LN(x_f), LN(x)): normalize
    # separately, cast to bf16, THEN concat -> half the copy bytes, no f32 concat.
    kvf_ln = _layernorm(x_f, g_kv_ref[...], b_kv_ref[...]).astype(bf16)   # [Bt, S_f, D]
    kvx_ln = _layernorm(x, g_kv_ref[...], b_kv_ref[...]).astype(bf16)     # [Bt, S_q, D]
    kv_ln = jnp.concatenate([kvf_ln, kvx_ln], axis=1).reshape(Bt * S_kv, D)
    q_ln = _layernorm(x2, g_q_ref[...], b_q_ref[...]).astype(bf16)        # [Bt*S_q, D]

    # ---- Q projection + fused K|V projection (bf16 x bf16 -> f32 accum) --------
    q = jnp.dot(q_ln, wq_ref[...], preferred_element_type=f32) + bq_ref[...]       # [Bt*S_q, D]
    q = (q * scale).astype(bf16)                 # fold softmax scale into q
    kvp = jnp.dot(kv_ln, wkv_ref[...], preferred_element_type=f32) + bkv_ref[...]  # [Bt*S_kv, 2D]
    # narrow to bf16 immediately -- the f32 kvp is the largest activation
    k = kvp[:, :D].astype(bf16)                  # [Bt*S_kv, D]
    v = kvp[:, D:].astype(bf16)                  # [Bt*S_kv, D]

    q3 = q.reshape(Bt, S_q, D)
    k3 = k.reshape(Bt, S_kv, D)
    v3 = v.reshape(Bt, S_kv, D)

    # ---- batched multi-head attention (no per-batch / per-head Python loop) ----
    # Head split once per tensor: H lane-slices concatenated along a new leading
    # "head*batch" axis (h-major: z = h*Bt + b). Relayout cost is independent of
    # the batch tile, and all (b, h) matmuls become one batched einsum pair.
    def split_heads(t3):                                   # [Bt, S, D] -> [H*Bt, S, Dh]
        return jnp.concatenate([t3[:, :, h * Dh:(h + 1) * Dh] for h in range(H)], axis=0)

    qh = split_heads(q3)                                   # [H*Bt, S_q,  Dh]
    kh = split_heads(k3)                                   # [H*Bt, S_kv, Dh]
    vh = split_heads(v3)                                   # [H*Bt, S_kv, Dh]

    # additive key-padding bias, computed once and tiled across heads
    bias = jnp.where(mask_ref[...].astype(f32) > 0.0, 0.0, -1e9)   # [Bt, 1, S_kv]
    bias_z = jnp.concatenate([bias] * H, axis=0)                   # [H*Bt, 1, S_kv]

    logits = jnp.einsum('zqd,zkd->zqk', qh, kh,
                        preferred_element_type=f32)        # [H*Bt, S_q, S_kv]
    logits = logits + bias_z
    m = jnp.max(logits, axis=-1, keepdims=True)
    e = jnp.exp(logits - m)
    p = e * pl.reciprocal(jnp.sum(e, axis=-1, keepdims=True), approx=True)
    ctx = jnp.einsum('zqk,zkd->zqd', p.astype(bf16), vh,
                     preferred_element_type=f32)           # [H*Bt, S_q, Dh]

    # merge heads back: head h -> output columns [h*Dh, (h+1)*Dh)
    attn = jnp.concatenate([ctx[h * Bt:(h + 1) * Bt] for h in range(H)], axis=-1)  # [Bt, S_q, D]
    attn = attn.reshape(Bt * S_q, D)
    attn = jnp.dot(attn.astype(bf16), wo_ref[...], preferred_element_type=f32) + bo_ref[...]

    # ---- residual 1 (dropout == identity, eval mode) ----------------------------
    x_res = attn + x2

    # ---- post-attention LayerNorm + feedforward ---------------------------------
    h2 = _layernorm(x_res, g2_ref[...], b2_ref[...]).astype(bf16)
    ff = jnp.dot(h2, w1_ref[...], preferred_element_type=f32) + b1_ref[...]
    ff = jax.nn.gelu(ff)   # TODO(synk): tanh approx; PyTorch nn.GELU default is exact erf
    ff = jnp.dot(ff.astype(bf16), w2_ref[...], preferred_element_type=f32) + b2f_ref[...]

    # ---- residual 2 + single lane-dense store -----------------------------------
    out = ff + x_res                                       # [Bt*S_q, D]
    out_ref[...] = out.reshape(Bt, S_q, D).astype(out_ref.dtype)


def _vmem_limit_bytes():
    """Per-generation scoped-VMEM limit: ~96 MiB on v5e/v6e (128 MiB physical),
    48 MiB on v7x (64 MiB physical); conservative fallback if info unavailable."""
    try:
        cap = getattr(pltpu.get_tpu_info(), "vmem_capacity_bytes", None)
    except Exception:
        cap = None
    if cap is not None and cap >= 100 * 1024 * 1024:
        return 96 * 1024 * 1024
    return 48 * 1024 * 1024


def _pick_block_b(B, S_f, S_q, D, Dff, num_heads, vmem_limit, weight_bytes):
    """Batch tile per grid step: keep >= 2 grid steps (v7x has 2 TensorCores),
    make the row blocks tall enough to fill the 256-row MXU, bound by VMEM."""
    S_kv = S_f + S_q
    divisors = [d for d in range(1, B + 1) if B % d == 0]
    cands = [d for d in divisors if B // d >= 2] or divisors   # >=2 steps when possible

    act_budget = max(vmem_limit - weight_bytes - (6 << 20), 2 << 20)

    def act_bytes(bb):
        rq, rkv = bb * S_q, bb * S_kv
        return (2 * rkv * D * 2                 # x_f input block (bf16, double-buffered)
                + 2 * rq * D * (4 + 4)          # x input + output blocks (f32, double-buffered)
                + rkv * D * 2 * 3               # kv_ln, k, v (bf16)
                + rkv * 2 * D * 4               # transient kvp (f32)
                + rq * D * 4 * 3                # q / attn / residual (f32)
                + rq * Dff * 4                  # FFN hidden (f32)
                + 2 * bb * num_heads * S_q * S_kv * 4)   # logits + probs (f32)

    fitting = [d for d in cands if act_bytes(d) <= act_budget] or [cands[0]]
    tall = [d for d in fitting if d * S_q >= 256 and d * S_kv >= 256]
    # smallest tile that already fills the MXU rows (keeps more parallel grid
    # steps); otherwise the largest tile that fits VMEM.
    return min(tall) if tall else max(fitting)


def perceiver_xattn(x_f, x, mask_padding, params, *, num_heads, block_b=None):
    B, S_f, D = x_f.shape
    _, S_q, _ = x.shape
    S_kv = S_f + S_q
    Dff = params["w1"].shape[-1]
    assert D % num_heads == 0
    assert mask_padding.shape == (B, S_kv)
    out_dtype = x.dtype

    bf16 = jnp.bfloat16
    # bf16 matmul weights (halves HBM DMA bytes, doubles MXU throughput);
    # LN params + biases stay f32. K|V projection fused into one [D, 2D] matmul.
    wq = params["wq"].astype(bf16)
    wkv = jnp.concatenate([params["wk"], params["wv"]], axis=1).astype(bf16)
    bkv = jnp.concatenate([params["bk"], params["bv"]], axis=1)
    wo = params["wo"].astype(bf16)
    w1 = params["w1"].astype(bf16)
    w2 = params["w2"].astype(bf16)

    # Stream the (large) frame features in bf16 -> half the per-step DMA bytes.
    # x (latent queries) stays f32: it feeds both residual adds directly.
    x_f = x_f.astype(bf16)

    heavy = (wq, wkv, wo, w1, w2)
    light = (params["g_kv"], params["b_kv"], params["g_q"], params["b_q"],
             params["g2"], params["b2"], params["bq"], bkv, params["bo"],
             params["b1"], params["b2f"])
    weight_bytes = sum(int(a.size) * a.dtype.itemsize for a in heavy + light)

    vmem_limit = _vmem_limit_bytes()
    if block_b is None:
        block_b = _pick_block_b(B, S_f, S_q, D, Dff, num_heads, vmem_limit, weight_bytes)
    assert B % block_b == 0
    grid = (B // block_b,)

    # Keep the mask 3D so its minor-two block dims always equal the full array
    # dims (independent of block_b).
    mask3 = mask_padding.reshape(B, 1, S_kv).astype(jnp.float32)

    kernel = functools.partial(perceiver_xattn_kernel, num_heads=num_heads)

    def _call(single_buffer_weights):
        def const(shape):
            idx = lambda *_: (0,) * len(shape)
            if single_buffer_weights:
                # grid-invariant block: one VMEM buffer instead of the default
                # double-buffering (halves weight VMEM, zero perf cost)
                return pl.BlockSpec(shape, idx, pipeline_mode=pl.Buffered(1))
            return pl.BlockSpec(shape, idx)

        in_specs = [
            pl.BlockSpec((block_b, S_f, D), lambda i: (i, 0, 0)),     # x_f (bf16)
            pl.BlockSpec((block_b, S_q, D), lambda i: (i, 0, 0)),     # x
            pl.BlockSpec((block_b, 1, S_kv), lambda i: (i, 0, 0)),    # mask_padding
            const((1, D)), const((1, D)),                             # ln1_kv gamma/beta
            const((1, D)), const((1, D)),                             # ln1_q  gamma/beta
            const((1, D)), const((1, D)),                             # ln2    gamma/beta
            const((D, D)), const((1, D)),                             # Wq, bq
            const((D, 2 * D)), const((1, 2 * D)),                     # W[k|v], b[k|v]
            const((D, D)), const((1, D)),                             # Wo, bo
            const((D, Dff)), const((1, Dff)),                         # W1, b1
            const((Dff, D)), const((1, D)),                           # W2, b2
        ]

        return pl.pallas_call(
            kernel,
            out_shape=jax.ShapeDtypeStruct((B, S_q, D), out_dtype),
            grid=grid,
            in_specs=in_specs,
            out_specs=pl.BlockSpec((block_b, S_q, D), lambda i: (i, 0, 0)),
            compiler_params=pltpu.CompilerParams(
                dimension_semantics=("parallel",),
                vmem_limit_bytes=vmem_limit,
            ),
        )(
            x_f, x, mask3,
            params["g_kv"], params["b_kv"],
            params["g_q"], params["b_q"],
            params["g2"], params["b2"],
            wq, params["bq"],
            wkv, bkv,
            wo, params["bo"],
            w1, params["b1"],
            w2, params["b2f"],
        )

    try:
        return _call(True)
    except Exception:
        # TODO(synk): fallback for jax builds that reject Buffered(1) single-buffering
        return _call(False)


def init_params(key, dim, dff):
    keys = jax.random.split(key, 6)
    s = 0.02
    return {
        # LayerNorms
        "g_kv": jnp.ones((1, dim), jnp.float32), "b_kv": jnp.zeros((1, dim), jnp.float32),
        "g_q": jnp.ones((1, dim), jnp.float32), "b_q": jnp.zeros((1, dim), jnp.float32),
        "g2": jnp.ones((1, dim), jnp.float32), "b2": jnp.zeros((1, dim), jnp.float32),
        # attention (xattn)
        "wq": s * jax.random.normal(keys[0], (dim, dim), jnp.float32),
        "bq": jnp.zeros((1, dim), jnp.float32),
        "wk": s * jax.random.normal(keys[1], (dim, dim), jnp.float32),
        "bk": jnp.zeros((1, dim), jnp.float32),
        "wv": s * jax.random.normal(keys[2], (dim, dim), jnp.float32),
        "bv": jnp.zeros((1, dim), jnp.float32),
        "wo": s * jax.random.normal(keys[3], (dim, dim), jnp.float32),
        "bo": jnp.zeros((1, dim), jnp.float32),
        # feedforward (ff)
        "w1": s * jax.random.normal(keys[4], (dim, dff), jnp.float32),
        "b1": jnp.zeros((1, dff), jnp.float32),
        "w2": s * jax.random.normal(keys[5], (dff, dim), jnp.float32),
        "b2f": jnp.zeros((1, dim), jnp.float32),
    }


if __name__ == "__main__":
    # lane-dense demo config: D a multiple of 128, small sequences/batch
    B, S_f, S_q, D, H = 2, 8, 8, 128, 4
    Dff = 4 * D

    key = jax.random.PRNGKey(0)
    k1, k2, k3 = jax.random.split(key, 3)

    x_f = jax.random.normal(k1, (B, S_f, D), jnp.float32)
    x = jax.random.normal(k2, (B, S_q, D), jnp.float32)

    # key-padding mask over the concatenated kv sequence: 1 = valid, 0 = padded.
    mask_padding = jnp.ones((B, S_f + S_q), jnp.float32)
    mask_padding = mask_padding.at[0, S_f - 2:S_f].set(0.0)   # pad last two frames of batch 0

    params = init_params(k3, D, Dff)

    out = perceiver_xattn(x_f, x, mask_padding, params, num_heads=H)
    jax.block_until_ready(out)
    assert out.shape == (B, S_q, D)
    assert bool(jnp.all(jnp.isfinite(out)))
    print("KERNEL_OK")
</pallas_src>

<mosaic_0001>
module attributes {stable_mosaic.version = 11 : i64} {
  func.func @perceiver_xattn_kernel(%arg0: i32, %arg1: memref<1x8x128xbf16, #tpu.memory_space<vmem>>, %arg2: memref<1x8x128xf32, #tpu.memory_space<vmem>>, %arg3: memref<1x1x16xf32, #tpu.memory_space<vmem>>, %arg4: memref<1x128xf32, #tpu.memory_space<vmem>>, %arg5: memref<1x128xf32, #tpu.memory_space<vmem>>, %arg6: memref<1x128xf32, #tpu.memory_space<vmem>>, %arg7: memref<1x128xf32, #tpu.memory_space<vmem>>, %arg8: memref<1x128xf32, #tpu.memory_space<vmem>>, %arg9: memref<1x128xf32, #tpu.memory_space<vmem>>, %arg10: memref<128x128xbf16, #tpu.memory_space<vmem>>, %arg11: memref<1x128xf32, #tpu.memory_space<vmem>>, %arg12: memref<128x256xbf16, #tpu.memory_space<vmem>>, %arg13: memref<1x256xf32, #tpu.memory_space<vmem>>, %arg14: memref<128x128xbf16, #tpu.memory_space<vmem>>, %arg15: memref<1x128xf32, #tpu.memory_space<vmem>>, %arg16: memref<128x512xbf16, #tpu.memory_space<vmem>>, %arg17: memref<1x512xf32, #tpu.memory_space<vmem>>, %arg18: memref<512x128xbf16, #tpu.memory_space<vmem>>, %arg19: memref<1x128xf32, #tpu.memory_space<vmem>>, %arg20: memref<1x8x128xf32, #tpu.memory_space<vmem>>) attributes {dimension_semantics = [#tpu.dimension_semantics<parallel>], iteration_bounds = array<i64: 2>, scalar_prefetch = 0 : i64, scratch_operands = 0 : i64, tpu.core_type = #tpu.core_type<tc>, window_params = [{transform_indices = @transform_0, window_bounds = array<i64: 1, 8, 128>}, {transform_indices = @transform_1, window_bounds = array<i64: 1, 8, 128>}, {transform_indices = @transform_2, window_bounds = array<i64: 1, 1, 16>}, {pipeline_mode = #tpu.pipeline_mode<synchronous>, transform_indices = @transform_3, window_bounds = array<i64: 1, 128>}, {pipeline_mode = #tpu.pipeline_mode<synchronous>, transform_indices = @transform_4, window_bounds = array<i64: 1, 128>}, {pipeline_mode = #tpu.pipeline_mode<synchronous>, transform_indices = @transform_5, window_bounds = array<i64: 1, 128>}, {pipeline_mode = #tpu.pipeline_mode<synchronous>, transform_indices = @transform_6, window_bounds = array<i64: 1, 128>}, {pipeline_mode = #tpu.pipeline_mode<synchronous>, transform_indices = @transform_7, window_bounds = array<i64: 1, 128>}, {pipeline_mode = #tpu.pipeline_mode<synchronous>, transform_indices = @transform_8, window_bounds = array<i64: 1, 128>}, {pipeline_mode = #tpu.pipeline_mode<synchronous>, transform_indices = @transform_9, window_bounds = array<i64: 128, 128>}, {pipeline_mode = #tpu.pipeline_mode<synchronous>, transform_indices = @transform_10, window_bounds = array<i64: 1, 128>}, {pipeline_mode = #tpu.pipeline_mode<synchronous>, transform_indices = @transform_11, window_bounds = array<i64: 128, 256>}, {pipeline_mode = #tpu.pipeline_mode<synchronous>, transform_indices = @transform_12, window_bounds = array<i64: 1, 256>}, {pipeline_mode = #tpu.pipeline_mode<synchronous>, transform_indices = @transform_13, window_bounds = array<i64: 128, 128>}, {pipeline_mode = #tpu.pipeline_mode<synchronous>, transform_indices = @transform_14, window_bounds = array<i64: 1, 128>}, {pipeline_mode = #tpu.pipeline_mode<synchronous>, transform_indices = @transform_15, window_bounds = array<i64: 128, 512>}, {pipeline_mode = #tpu.pipeline_mode<synchronous>, transform_indices = @transform_16, window_bounds = array<i64: 1, 512>}, {pipeline_mode = #tpu.pipeline_mode<synchronous>, transform_indices = @transform_17, window_bounds = array<i64: 512, 128>}, {pipeline_mode = #tpu.pipeline_mode<synchronous>, transform_indices = @transform_18, window_bounds = array<i64: 1, 128>}, {transform_indices = @transform_19, window_bounds = array<i64: 1, 8, 128>}]} {
    %c0 = arith.constant 0 : index
    %c0_0 = arith.constant 0 : index
    %c0_1 = arith.constant 0 : index
    %0 = vector.load %arg1[%c0, %c0_0, %c0_1] : memref<1x8x128xbf16, #tpu.memory_space<vmem>>, vector<1x8x128xbf16>
    %1 = arith.extf %0 : vector<1x8x128xbf16> to vector<1x8x128xf32>
    %c0_2 = arith.constant 0 : index
    %c0_3 = arith.constant 0 : index
    %c0_4 = arith.constant 0 : index
    %2 = vector.load %arg2[%c0_2, %c0_3, %c0_4] : memref<1x8x128xf32, #tpu.memory_space<vmem>>, vector<1x8x128xf32>
    %3 = vector.shape_cast %2 : vector<1x8x128xf32> to vector<8x128xf32>
    %c0_5 = arith.constant 0 : index
    %c0_6 = arith.constant 0 : index
    %4 = vector.load %arg4[%c0_5, %c0_6] : memref<1x128xf32, #tpu.memory_space<vmem>>, vector<1x128xf32>
    %c0_7 = arith.constant 0 : index
    %c0_8 = arith.constant 0 : index
    %5 = vector.load %arg5[%c0_7, %c0_8] : memref<1x128xf32, #tpu.memory_space<vmem>>, vector<1x128xf32>
    %cst = arith.constant dense<0.000000e+00> : vector<1x8xf32>
    %6 = vector.multi_reduction <add>, %1, %cst [2] : vector<1x8x128xf32> to vector<1x8xf32>
    %7 = vector.shape_cast %6 : vector<1x8xf32> to vector<1x8x1xf32>
    %cst_9 = arith.constant 1.280000e+02 : f32
    %8 = vector.broadcast %cst_9 : f32 to vector<1x8x1xf32>
    %9 = arith.divf %7, %8 : vector<1x8x1xf32>
    %10 = vector.broadcast %9 : vector<1x8x1xf32> to vector<1x8x128xf32>
    %11 = arith.subf %1, %10 : vector<1x8x128xf32>
    %12 = arith.mulf %11, %11 : vector<1x8x128xf32>
    %cst_10 = arith.constant dense<0.000000e+00> : vector<1x8xf32>
    %13 = vector.multi_reduction <add>, %12, %cst_10 [2] : vector<1x8x128xf32> to vector<1x8xf32>
    %14 = vector.shape_cast %13 : vector<1x8xf32> to vector<1x8x1xf32>
    %cst_11 = arith.constant 1.280000e+02 : f32
    %15 = vector.broadcast %cst_11 : f32 to vector<1x8x1xf32>
    %16 = arith.divf %14, %15 : vector<1x8x1xf32>
    %17 = vector.broadcast %9 : vector<1x8x1xf32> to vector<1x8x128xf32>
    %18 = arith.subf %1, %17 : vector<1x8x128xf32>
    %cst_12 = arith.constant 9.99999974E-6 : f32
    %19 = vector.broadcast %cst_12 : f32 to vector<1x8x1xf32>
    %20 = arith.addf %16, %19 : vector<1x8x1xf32>
    %21 = math.rsqrt %20 : vector<1x8x1xf32>
    %22 = vector.broadcast %21 : vector<1x8x1xf32> to vector<1x8x128xf32>
    %23 = arith.mulf %18, %22 : vector<1x8x128xf32>
    %24 = vector.shape_cast %4 : vector<1x128xf32> to vector<1x1x128xf32>
    %25 = vector.broadcast %24 : vector<1x1x128xf32> to vector<1x8x128xf32>
    %26 = arith.mulf %23, %25 : vector<1x8x128xf32>
    %27 = vector.shape_cast %5 : vector<1x128xf32> to vector<1x1x128xf32>
    %28 = vector.broadcast %27 : vector<1x1x128xf32> to vector<1x8x128xf32>
    %29 = arith.addf %26, %28 : vector<1x8x128xf32>
    %30 = arith.truncf %29 : vector<1x8x128xf32> to vector<1x8x128xbf16>
    %c0_13 = arith.constant 0 : index
    %c0_14 = arith.constant 0 : index
    %31 = vector.load %arg4[%c0_13, %c0_14] : memref<1x128xf32, #tpu.memory_space<vmem>>, vector<1x128xf32>
    %c0_15 = arith.constant 0 : index
    %c0_16 = arith.constant 0 : index
    %32 = vector.load %arg5[%c0_15, %c0_16] : memref<1x128xf32, #tpu.memory_space<vmem>>, vector<1x128xf32>
    %cst_17 = arith.constant dense<0.000000e+00> : vector<1x8xf32>
    %33 = vector.multi_reduction <add>, %2, %cst_17 [2] : vector<1x8x128xf32> to vector<1x8xf32>
    %34 = vector.shape_cast %33 : vector<1x8xf32> to vector<1x8x1xf32>
    %cst_18 = arith.constant 1.280000e+02 : f32
    %35 = vector.broadcast %cst_18 : f32 to vector<1x8x1xf32>
    %36 = arith.divf %34, %35 : vector<1x8x1xf32>
    %37 = vector.broadcast %36 : vector<1x8x1xf32> to vector<1x8x128xf32>
    %38 = arith.subf %2, %37 : vector<1x8x128xf32>
    %39 = arith.mulf %38, %38 : vector<1x8x128xf32>
    %cst_19 = arith.constant dense<0.000000e+00> : vector<1x8xf32>
    %40 = vector.multi_reduction <add>, %39, %cst_19 [2] : vector<1x8x128xf32> to vector<1x8xf32>
    %41 = vector.shape_cast %40 : vector<1x8xf32> to vector<1x8x1xf32>
    %cst_20 = arith.constant 1.280000e+02 : f32
    %42 = vector.broadcast %cst_20 : f32 to vector<1x8x1xf32>
    %43 = arith.divf %41, %42 : vector<1x8x1xf32>
    %44 = vector.broadcast %36 : vector<1x8x1xf32> to vector<1x8x128xf32>
    %45 = arith.subf %2, %44 : vector<1x8x128xf32>
    %cst_21 = arith.constant 9.99999974E-6 : f32
    %46 = vector.broadcast %cst_21 : f32 to vector<1x8x1xf32>
    %47 = arith.addf %43, %46 : vector<1x8x1xf32>
    %48 = math.rsqrt %47 : vector<1x8x1xf32>
    %49 = vector.broadcast %48 : vector<1x8x1xf32> to vector<1x8x128xf32>
    %50 = arith.mulf %45, %49 : vector<1x8x128xf32>
    %51 = vector.shape_cast %31 : vector<1x128xf32> to vector<1x1x128xf32>
    %52 = vector.broadcast %51 : vector<1x1x128xf32> to vector<1x8x128xf32>
    %53 = arith.mulf %50, %52 : vector<1x8x128xf32>
    %54 = vector.shape_cast %32 : vector<1x128xf32> to vector<1x1x128xf32>
    %55 = vector.broadcast %54 : vector<1x1x128xf32> to vector<1x8x128xf32>
    %56 = arith.addf %53, %55 : vector<1x8x128xf32>
    %57 = arith.truncf %56 : vector<1x8x128xf32> to vector<1x8x128xbf16>
    %58 = tpu.concatenate %30, %57 in 1 : vector<1x8x128xbf16>, vector<1x8x128xbf16> -> vector<1x16x128xbf16>
    %59 = vector.shape_cast %58 : vector<1x16x128xbf16> to vector<16x128xbf16>
    %c0_22 = arith.constant 0 : index
    %c0_23 = arith.constant 0 : index
    %60 = vector.load %arg6[%c0_22, %c0_23] : memref<1x128xf32, #tpu.memory_space<vmem>>, vector<1x128xf32>
    %c0_24 = arith.constant 0 : index
    %c0_25 = arith.constant 0 : index
    %61 = vector.load %arg7[%c0_24, %c0_25] : memref<1x128xf32, #tpu.memory_space<vmem>>, vector<1x128xf32>
    %cst_26 = arith.constant dense<0.000000e+00> : vector<8xf32>
    %62 = vector.multi_reduction <add>, %3, %cst_26 [1] : vector<8x128xf32> to vector<8xf32>
    %63 = vector.shape_cast %62 : vector<8xf32> to vector<8x1xf32>
    %cst_27 = arith.constant 1.280000e+02 : f32
    %64 = vector.broadcast %cst_27 : f32 to vector<8x1xf32>
    %65 = arith.divf %63, %64 : vector<8x1xf32>
    %66 = vector.broadcast %65 : vector<8x1xf32> to vector<8x128xf32>
    %67 = arith.subf %3, %66 : vector<8x128xf32>
    %68 = arith.mulf %67, %67 : vector<8x128xf32>
    %cst_28 = arith.constant dense<0.000000e+00> : vector<8xf32>
    %69 = vector.multi_reduction <add>, %68, %cst_28 [1] : vector<8x128xf32> to vector<8xf32>
    %70 = vector.shape_cast %69 : vector<8xf32> to vector<8x1xf32>
    %cst_29 = arith.constant 1.280000e+02 : f32
    %71 = vector.broadcast %cst_29 : f32 to vector<8x1xf32>
    %72 = arith.divf %70, %71 : vector<8x1xf32>
    %73 = vector.broadcast %65 : vector<8x1xf32> to vector<8x128xf32>
    %74 = arith.subf %3, %73 : vector<8x128xf32>
    %cst_30 = arith.constant 9.99999974E-6 : f32
    %75 = vector.broadcast %cst_30 : f32 to vector<8x1xf32>
    %76 = arith.addf %72, %75 : vector<8x1xf32>
    %77 = math.rsqrt %76 : vector<8x1xf32>
    %78 = vector.broadcast %77 : vector<8x1xf32> to vector<8x128xf32>
    %79 = arith.mulf %74, %78 : vector<8x128xf32>
    %80 = vector.broadcast %60 : vector<1x128xf32> to vector<8x128xf32>
    %81 = arith.mulf %79, %80 : vector<8x128xf32>
    %82 = vector.broadcast %61 : vector<1x128xf32> to vector<8x128xf32>
    %83 = arith.addf %81, %82 : vector<8x128xf32>
    %84 = arith.truncf %83 : vector<8x128xf32> to vector<8x128xbf16>
    %c0_31 = arith.constant 0 : index
    %c0_32 = arith.constant 0 : index
    %85 = vector.load %arg10[%c0_31, %c0_32] : memref<128x128xbf16, #tpu.memory_space<vmem>>, vector<128x128xbf16>
    %cst_33 = arith.constant dense<0.000000e+00> : vector<8x128xf32>
    %86 = tpu.matmul %84, %85, %cst_33 {dimension_numbers = #tpu.dot_dimension_numbers<[1], [0], [0], [1], [0, 0, 1, 1], [], []>} : vector<8x128xbf16>, vector<128x128xbf16>, vector<8x128xf32> -> vector<8x128xf32>
    %c0_34 = arith.constant 0 : index
    %c0_35 = arith.constant 0 : index
    %87 = vector.load %arg11[%c0_34, %c0_35] : memref<1x128xf32, #tpu.memory_space<vmem>>, vector<1x128xf32>
    %88 = vector.broadcast %87 : vector<1x128xf32> to vector<8x128xf32>
    %89 = arith.addf %86, %88 : vector<8x128xf32>
    %cst_36 = arith.constant 0.176776692 : f32
    %90 = vector.broadcast %cst_36 : f32 to vector<8x128xf32>
    %91 = arith.mulf %89, %90 : vector<8x128xf32>
    %92 = arith.truncf %91 : vector<8x128xf32> to vector<8x128xbf16>
    %c0_37 = arith.constant 0 : index
    %c0_38 = arith.constant 0 : index
    %93 = vector.load %arg12[%c0_37, %c0_38] : memref<128x256xbf16, #tpu.memory_space<vmem>>, vector<128x256xbf16>
    %cst_39 = arith.constant dense<0.000000e+00> : vector<16x256xf32>
    %94 = tpu.matmul %59, %93, %cst_39 {dimension_numbers = #tpu.dot_dimension_numbers<[1], [0], [0], [1], [0, 0, 1, 1], [], []>} : vector<16x128xbf16>, vector<128x256xbf16>, vector<16x256xf32> -> vector<16x256xf32>
    %c0_40 = arith.constant 0 : index
    %c0_41 = arith.constant 0 : index
    %95 = vector.load %arg13[%c0_40, %c0_41] : memref<1x256xf32, #tpu.memory_space<vmem>>, vector<1x256xf32>
    %96 = vector.broadcast %95 : vector<1x256xf32> to vector<16x256xf32>
    %97 = arith.addf %94, %96 : vector<16x256xf32>
    %98 = vector.extract_strided_slice %97 {offsets = [0, 0], sizes = [16, 128], strides = [1, 1]} : vector<16x256xf32> to vector<16x128xf32>
    %99 = arith.truncf %98 : vector<16x128xf32> to vector<16x128xbf16>
    %100 = vector.extract_strided_slice %97 {offsets = [0, 128], sizes = [16, 128], strides = [1, 1]} : vector<16x256xf32> to vector<16x128xf32>
    %101 = arith.truncf %100 : vector<16x128xf32> to vector<16x128xbf16>
    %102 = vector.shape_cast %92 : vector<8x128xbf16> to vector<1x8x128xbf16>
    %103 = vector.shape_cast %99 : vector<16x128xbf16> to vector<1x16x128xbf16>
    %104 = vector.shape_cast %101 : vector<16x128xbf16> to vector<1x16x128xbf16>
    %105 = vector.extract_strided_slice %102 {offsets = [0, 0, 0], sizes = [1, 8, 32], strides = [1, 1, 1]} : vector<1x8x128xbf16> to vector<1x8x32xbf16>
    %106 = vector.extract_strided_slice %102 {offsets = [0, 0, 32], sizes = [1, 8, 32], strides = [1, 1, 1]} : vector<1x8x128xbf16> to vector<1x8x32xbf16>
    %107 = vector.extract_strided_slice %102 {offsets = [0, 0, 64], sizes = [1, 8, 32], strides = [1, 1, 1]} : vector<1x8x128xbf16> to vector<1x8x32xbf16>
    %108 = vector.extract_strided_slice %102 {offsets = [0, 0, 96], sizes = [1, 8, 32], strides = [1, 1, 1]} : vector<1x8x128xbf16> to vector<1x8x32xbf16>
    %109 = tpu.concatenate %105, %106, %107, %108 in 0 : vector<1x8x32xbf16>, vector<1x8x32xbf16>, vector<1x8x32xbf16>, vector<1x8x32xbf16> -> vector<4x8x32xbf16>
    %110 = vector.extract_strided_slice %103 {offsets = [0, 0, 0], sizes = [1, 16, 32], strides = [1, 1, 1]} : vector<1x16x128xbf16> to vector<1x16x32xbf16>
    %111 = vector.extract_strided_slice %103 {offsets = [0, 0, 32], sizes = [1, 16, 32], strides = [1, 1, 1]} : vector<1x16x128xbf16> to vector<1x16x32xbf16>
    %112 = vector.extract_strided_slice %103 {offsets = [0, 0, 64], sizes = [1, 16, 32], strides = [1, 1, 1]} : vector<1x16x128xbf16> to vector<1x16x32xbf16>
    %113 = vector.extract_strided_slice %103 {offsets = [0, 0, 96], sizes = [1, 16, 32], strides = [1, 1, 1]} : vector<1x16x128xbf16> to vector<1x16x32xbf16>
    %114 = tpu.concatenate %110, %111, %112, %113 in 0 : vector<1x16x32xbf16>, vector<1x16x32xbf16>, vector<1x16x32xbf16>, vector<1x16x32xbf16> -> vector<4x16x32xbf16>
    %115 = vector.extract_strided_slice %104 {offsets = [0, 0, 0], sizes = [1, 16, 32], strides = [1, 1, 1]} : vector<1x16x128xbf16> to vector<1x16x32xbf16>
    %116 = vector.extract_strided_slice %104 {offsets = [0, 0, 32], sizes = [1, 16, 32], strides = [1, 1, 1]} : vector<1x16x128xbf16> to vector<1x16x32xbf16>
    %117 = vector.extract_strided_slice %104 {offsets = [0, 0, 64], sizes = [1, 16, 32], strides = [1, 1, 1]} : vector<1x16x128xbf16> to vector<1x16x32xbf16>
    %118 = vector.extract_strided_slice %104 {offsets = [0, 0, 96], sizes = [1, 16, 32], strides = [1, 1, 1]} : vector<1x16x128xbf16> to vector<1x16x32xbf16>
    %119 = tpu.concatenate %115, %116, %117, %118 in 0 : vector<1x16x32xbf16>, vector<1x16x32xbf16>, vector<1x16x32xbf16>, vector<1x16x32xbf16> -> vector<4x16x32xbf16>
    %c0_42 = arith.constant 0 : index
    %c0_43 = arith.constant 0 : index
    %c0_44 = arith.constant 0 : index
    %120 = vector.load %arg3[%c0_42, %c0_43, %c0_44] : memref<1x1x16xf32, #tpu.memory_space<vmem>>, vector<1x1x16xf32>
    %cst_45 = arith.constant 0.000000e+00 : f32
    %121 = vector.broadcast %cst_45 : f32 to vector<1x1x16xf32>
    %122 = arith.cmpf ogt, %120, %121 : vector<1x1x16xf32>
    %cst_46 = arith.constant 0.000000e+00 : f32
    %cst_47 = arith.constant -1.000000e+09 : f32
    %123 = vector.broadcast %cst_46 : f32 to vector<1x1x16xf32>
    %124 = vector.broadcast %cst_47 : f32 to vector<1x1x16xf32>
    %125 = arith.select %122, %123, %124 : vector<1x1x16xi1>, vector<1x1x16xf32>
    %126 = tpu.concatenate %125, %125, %125, %125 in 0 : vector<1x1x16xf32>, vector<1x1x16xf32>, vector<1x1x16xf32>, vector<1x1x16xf32> -> vector<4x1x16xf32>
    "tpu.trace_start"() <{level = 10 : i32, message = "zqd,zkd->zqk"}> : () -> ()
    %cst_48 = arith.constant dense<0.000000e+00> : vector<4x8x16xf32>
    %127 = tpu.matmul %109, %114, %cst_48 {dimension_numbers = #tpu.dot_dimension_numbers<[2], [2], [1], [1], [0, 0, 0, 1, 1, 1], [0], [0]>} : vector<4x8x32xbf16>, vector<4x16x32xbf16>, vector<4x8x16xf32> -> vector<4x8x16xf32>
    "tpu.trace_stop"() : () -> ()
    %128 = vector.broadcast %126 : vector<4x1x16xf32> to vector<4x8x16xf32>
    %129 = arith.addf %127, %128 : vector<4x8x16xf32>
    %cst_49 = arith.constant dense<0xFF800000> : vector<4x8xf32>
    %130 = vector.multi_reduction <maximumf>, %129, %cst_49 [2] : vector<4x8x16xf32> to vector<4x8xf32>
    %131 = vector.shape_cast %130 : vector<4x8xf32> to vector<4x8x1xf32>
    %132 = vector.broadcast %131 : vector<4x8x1xf32> to vector<4x8x16xf32>
    %133 = arith.subf %129, %132 : vector<4x8x16xf32>
    %134 = math.exp %133 : vector<4x8x16xf32>
    %cst_50 = arith.constant dense<0.000000e+00> : vector<4x8xf32>
    %135 = vector.multi_reduction <add>, %134, %cst_50 [2] : vector<4x8x16xf32> to vector<4x8xf32>
    %136 = vector.shape_cast %135 : vector<4x8xf32> to vector<4x8x1xf32>
    %137 = tpu.reciprocal %136 {approx = true} : vector<4x8x1xf32> -> vector<4x8x1xf32>
    %138 = vector.broadcast %137 : vector<4x8x1xf32> to vector<4x8x16xf32>
    %139 = arith.mulf %134, %138 : vector<4x8x16xf32>
    %140 = arith.truncf %139 : vector<4x8x16xf32> to vector<4x8x16xbf16>
    "tpu.trace_start"() <{level = 10 : i32, message = "zqk,zkd->zqd"}> : () -> ()
    %cst_51 = arith.constant dense<0.000000e+00> : vector<4x8x32xf32>
    %141 = tpu.matmul %140, %119, %cst_51 {dimension_numbers = #tpu.dot_dimension_numbers<[2], [1], [1], [2], [0, 0, 0, 1, 1, 2], [0], [0]>} : vector<4x8x16xbf16>, vector<4x16x32xbf16>, vector<4x8x32xf32> -> vector<4x8x32xf32>
    "tpu.trace_stop"() : () -> ()
    %142 = vector.extract_strided_slice %141 {offsets = [0, 0, 0], sizes = [1, 8, 32], strides = [1, 1, 1]} : vector<4x8x32xf32> to vector<1x8x32xf32>
    %143 = vector.extract_strided_slice %141 {offsets = [1, 0, 0], sizes = [1, 8, 32], strides = [1, 1, 1]} : vector<4x8x32xf32> to vector<1x8x32xf32>
    %144 = vector.extract_strided_slice %141 {offsets = [2, 0, 0], sizes = [1, 8, 32], strides = [1, 1, 1]} : vector<4x8x32xf32> to vector<1x8x32xf32>
    %145 = vector.extract_strided_slice %141 {offsets = [3, 0, 0], sizes = [1, 8, 32], strides = [1, 1, 1]} : vector<4x8x32xf32> to vector<1x8x32xf32>
    %146 = tpu.concatenate %142, %143, %144, %145 in 2 : vector<1x8x32xf32>, vector<1x8x32xf32>, vector<1x8x32xf32>, vector<1x8x32xf32> -> vector<1x8x128xf32>
    %147 = vector.shape_cast %146 : vector<1x8x128xf32> to vector<8x128xf32>
    %148 = arith.truncf %147 : vector<8x128xf32> to vector<8x128xbf16>
    %c0_52 = arith.constant 0 : index
    %c0_53 = arith.constant 0 : index
    %149 = vector.load %arg14[%c0_52, %c0_53] : memref<128x128xbf16, #tpu.memory_space<vmem>>, vector<128x128xbf16>
    %cst_54 = arith.constant dense<0.000000e+00> : vector<8x128xf32>
    %150 = tpu.matmul %148, %149, %cst_54 {dimension_numbers = #tpu.dot_dimension_numbers<[1], [0], [0], [1], [0, 0, 1, 1], [], []>} : vector<8x128xbf16>, vector<128x128xbf16>, vector<8x128xf32> -> vector<8x128xf32>
    %c0_55 = arith.constant 0 : index
    %c0_56 = arith.constant 0 : index
    %151 = vector.load %arg15[%c0_55, %c0_56] : memref<1x128xf32, #tpu.memory_space<vmem>>, vector<1x128xf32>
    %152 = vector.broadcast %151 : vector<1x128xf32> to vector<8x128xf32>
    %153 = arith.addf %150, %152 : vector<8x128xf32>
    %154 = arith.addf %153, %3 : vector<8x128xf32>
    %c0_57 = arith.constant 0 : index
    %c0_58 = arith.constant 0 : index
    %155 = vector.load %arg8[%c0_57, %c0_58] : memref<1x128xf32, #tpu.memory_space<vmem>>, vector<1x128xf32>
    %c0_59 = arith.constant 0 : index
    %c0_60 = arith.constant 0 : index
    %156 = vector.load %arg9[%c0_59, %c0_60] : memref<1x128xf32, #tpu.memory_space<vmem>>, vector<1x128xf32>
    %cst_61 = arith.constant dense<0.000000e+00> : vector<8xf32>
    %157 = vector.multi_reduction <add>, %154, %cst_61 [1] : vector<8x128xf32> to vector<8xf32>
    %158 = vector.shape_cast %157 : vector<8xf32> to vector<8x1xf32>
    %cst_62 = arith.constant 1.280000e+02 : f32
    %159 = vector.broadcast %cst_62 : f32 to vector<8x1xf32>
    %160 = arith.divf %158, %159 : vector<8x1xf32>
    %161 = vector.broadcast %160 : vector<8x1xf32> to vector<8x128xf32>
    %162 = arith.subf %154, %161 : vector<8x128xf32>
    %163 = arith.mulf %162, %162 : vector<8x128xf32>
    %cst_63 = arith.constant dense<0.000000e+00> : vector<8xf32>
    %164 = vector.multi_reduction <add>, %163, %cst_63 [1] : vector<8x128xf32> to vector<8xf32>
    %165 = vector.shape_cast %164 : vector<8xf32> to vector<8x1xf32>
    %cst_64 = arith.constant 1.280000e+02 : f32
    %166 = vector.broadcast %cst_64 : f32 to vector<8x1xf32>
    %167 = arith.divf %165, %166 : vector<8x1xf32>
    %168 = vector.broadcast %160 : vector<8x1xf32> to vector<8x128xf32>
    %169 = arith.subf %154, %168 : vector<8x128xf32>
    %cst_65 = arith.constant 9.99999974E-6 : f32
    %170 = vector.broadcast %cst_65 : f32 to vector<8x1xf32>
    %171 = arith.addf %167, %170 : vector<8x1xf32>
    %172 = math.rsqrt %171 : vector<8x1xf32>
    %173 = vector.broadcast %172 : vector<8x1xf32> to vector<8x128xf32>
    %174 = arith.mulf %169, %173 : vector<8x128xf32>
    %175 = vector.broadcast %155 : vector<1x128xf32> to vector<8x128xf32>
    %176 = arith.mulf %174, %175 : vector<8x128xf32>
    %177 = vector.broadcast %156 : vector<1x128xf32> to vector<8x128xf32>
    %178 = arith.addf %176, %177 : vector<8x128xf32>
    %179 = arith.truncf %178 : vector<8x128xf32> to vector<8x128xbf16>
    %c0_66 = arith.constant 0 : index
    %c0_67 = arith.constant 0 : index
    %180 = vector.load %arg16[%c0_66, %c0_67] : memref<128x512xbf16, #tpu.memory_space<vmem>>, vector<128x512xbf16>
    %cst_68 = arith.constant dense<0.000000e+00> : vector<8x512xf32>
    %181 = tpu.matmul %179, %180, %cst_68 {dimension_numbers = #tpu.dot_dimension_numbers<[1], [0], [0], [1], [0, 0, 1, 1], [], []>} : vector<8x128xbf16>, vector<128x512xbf16>, vector<8x512xf32> -> vector<8x512xf32>
    %c0_69 = arith.constant 0 : index
    %c0_70 = arith.constant 0 : index
    %182 = vector.load %arg17[%c0_69, %c0_70] : memref<1x512xf32, #tpu.memory_space<vmem>>, vector<1x512xf32>
    %183 = vector.broadcast %182 : vector<1x512xf32> to vector<8x512xf32>
    %184 = arith.addf %181, %183 : vector<8x512xf32>
    %185 = arith.mulf %184, %184 : vector<8x512xf32>
    %186 = arith.mulf %184, %185 : vector<8x512xf32>
    %cst_71 = arith.constant 4.471500e-02 : f32
    %187 = vector.broadcast %cst_71 : f32 to vector<8x512xf32>
    %188 = arith.mulf %187, %186 : vector<8x512xf32>
    %189 = arith.addf %184, %188 : vector<8x512xf32>
    %cst_72 = arith.constant 0.797884583 : f32
    %190 = vector.broadcast %cst_72 : f32 to vector<8x512xf32>
    %191 = arith.mulf %190, %189 : vector<8x512xf32>
    %192 = math.tanh %191 : vector<8x512xf32>
    %cst_73 = arith.constant 1.000000e+00 : f32
    %193 = vector.broadcast %cst_73 : f32 to vector<8x512xf32>
    %194 = arith.addf %193, %192 : vector<8x512xf32>
    %cst_74 = arith.constant 5.000000e-01 : f32
    %195 = vector.broadcast %cst_74 : f32 to vector<8x512xf32>
    %196 = arith.mulf %195, %194 : vector<8x512xf32>
    %197 = arith.mulf %184, %196 : vector<8x512xf32>
    %198 = arith.truncf %197 : vector<8x512xf32> to vector<8x512xbf16>
    %c0_75 = arith.constant 0 : index
    %c0_76 = arith.constant 0 : index
    %199 = vector.load %arg18[%c0_75, %c0_76] : memref<512x128xbf16, #tpu.memory_space<vmem>>, vector<512x128xbf16>
    %cst_77 = arith.constant dense<0.000000e+00> : vector<8x128xf32>
    %200 = tpu.matmul %198, %199, %cst_77 {dimension_numbers = #tpu.dot_dimension_numbers<[1], [0], [0], [1], [0, 0, 1, 1], [], []>} : vector<8x512xbf16>, vector<512x128xbf16>, vector<8x128xf32> -> vector<8x128xf32>
    %c0_78 = arith.constant 0 : index
    %c0_79 = arith.constant 0 : index
    %201 = vector.load %arg19[%c0_78, %c0_79] : memref<1x128xf32, #tpu.memory_space<vmem>>, vector<1x128xf32>
    %202 = vector.broadcast %201 : vector<1x128xf32> to vector<8x128xf32>
    %203 = arith.addf %200, %202 : vector<8x128xf32>
    %204 = arith.addf %203, %154 : vector<8x128xf32>
    %205 = vector.shape_cast %204 : vector<8x128xf32> to vector<1x8x128xf32>
    %c0_80 = arith.constant 0 : index
    %c0_81 = arith.constant 0 : index
    %c0_82 = arith.constant 0 : index
    %206 = vector.load %arg20[%c0_80, %c0_81, %c0_82] : memref<1x8x128xf32, #tpu.memory_space<vmem>>, vector<1x8x128xf32>
    tpu.vector_store %arg20[%c0_80, %c0_81, %c0_82], %205 {strides = array<i32>} : memref<1x8x128xf32, #tpu.memory_space<vmem>>, vector<1x8x128xf32>,
    return
  }
  func.func @transform_0(%arg0: i32) -> (i32, i32, i32) {
    %c0_i32 = arith.constant 0 : i32
    %c0_i32_0 = arith.constant 0 : i32
    %c0_i32_1 = arith.constant 0 : i32
    return %arg0, %c0_i32, %c0_i32_0 : i32, i32, i32
  }
  func.func @transform_1(%arg0: i32) -> (i32, i32, i32) {
    %c0_i32 = arith.constant 0 : i32
    %c0_i32_0 = arith.constant 0 : i32
    %c0_i32_1 = arith.constant 0 : i32
    return %arg0, %c0_i32, %c0_i32_0 : i32, i32, i32
  }
  func.func @transform_2(%arg0: i32) -> (i32, i32, i32) {
    %c0_i32 = arith.constant 0 : i32
    %c0_i32_0 = arith.constant 0 : i32
    %c0_i32_1 = arith.constant 0 : i32
    return %arg0, %c0_i32, %c0_i32_0 : i32, i32, i32
  }
  func.func @transform_3(%arg0: i32) -> (i32, i32) {
    %c0_i32 = arith.constant 0 : i32
    %c0_i32_0 = arith.constant 0 : i32
    %c0_i32_1 = arith.constant 0 : i32
    return %c0_i32, %c0_i32_0 : i32, i32
  }
  func.func @transform_4(%arg0: i32) -> (i32, i32) {
    %c0_i32 = arith.constant 0 : i32
    %c0_i32_0 = arith.constant 0 : i32
    %c0_i32_1 = arith.constant 0 : i32
    return %c0_i32, %c0_i32_0 : i32, i32
  }
  func.func @transform_5(%arg0: i32) -> (i32, i32) {
    %c0_i32 = arith.constant 0 : i32
    %c0_i32_0 = arith.constant 0 : i32
    %c0_i32_1 = arith.constant 0 : i32
    return %c0_i32, %c0_i32_0 : i32, i32
  }
  func.func @transform_6(%arg0: i32) -> (i32, i32) {
    %c0_i32 = arith.constant 0 : i32
    %c0_i32_0 = arith.constant 0 : i32
    %c0_i32_1 = arith.constant 0 : i32
    return %c0_i32, %c0_i32_0 : i32, i32
  }
  func.func @transform_7(%arg0: i32) -> (i32, i32) {
    %c0_i32 = arith.constant 0 : i32
    %c0_i32_0 = arith.constant 0 : i32
    %c0_i32_1 = arith.constant 0 : i32
    return %c0_i32, %c0_i32_0 : i32, i32
  }
  func.func @transform_8(%arg0: i32) -> (i32, i32) {
    %c0_i32 = arith.constant 0 : i32
    %c0_i32_0 = arith.constant 0 : i32
    %c0_i32_1 = arith.constant 0 : i32
    return %c0_i32, %c0_i32_0 : i32, i32
  }
  func.func @transform_9(%arg0: i32) -> (i32, i32) {
    %c0_i32 = arith.constant 0 : i32
    %c0_i32_0 = arith.constant 0 : i32
    %c0_i32_1 = arith.constant 0 : i32
    return %c0_i32, %c0_i32_0 : i32, i32
  }
  func.func @transform_10(%arg0: i32) -> (i32, i32) {
    %c0_i32 = arith.constant 0 : i32
    %c0_i32_0 = arith.constant 0 : i32
    %c0_i32_1 = arith.constant 0 : i32
    return %c0_i32, %c0_i32_0 : i32, i32
  }
  func.func @transform_11(%arg0: i32) -> (i32, i32) {
    %c0_i32 = arith.constant 0 : i32
    %c0_i32_0 = arith.constant 0 : i32
    %c0_i32_1 = arith.constant 0 : i32
    return %c0_i32, %c0_i32_0 : i32, i32
  }
  func.func @transform_12(%arg0: i32) -> (i32, i32) {
    %c0_i32 = arith.constant 0 : i32
    %c0_i32_0 = arith.constant 0 : i32
    %c0_i32_1 = arith.constant 0 : i32
    return %c0_i32, %c0_i32_0 : i32, i32
  }
  func.func @transform_13(%arg0: i32) -> (i32, i32) {
    %c0_i32 = arith.constant 0 : i32
    %c0_i32_0 = arith.constant 0 : i32
    %c0_i32_1 = arith.constant 0 : i32
    return %c0_i32, %c0_i32_0 : i32, i32
  }
  func.func @transform_14(%arg0: i32) -> (i32, i32) {
    %c0_i32 = arith.constant 0 : i32
    %c0_i32_0 = arith.constant 0 : i32
    %c0_i32_1 = arith.constant 0 : i32
    return %c0_i32, %c0_i32_0 : i32, i32
  }
  func.func @transform_15(%arg0: i32) -> (i32, i32) {
    %c0_i32 = arith.constant 0 : i32
    %c0_i32_0 = arith.constant 0 : i32
    %c0_i32_1 = arith.constant 0 : i32
    return %c0_i32, %c0_i32_0 : i32, i32
  }
  func.func @transform_16(%arg0: i32) -> (i32, i32) {
    %c0_i32 = arith.constant 0 : i32
    %c0_i32_0 = arith.constant 0 : i32
    %c0_i32_1 = arith.constant 0 : i32
    return %c0_i32, %c0_i32_0 : i32, i32
  }
  func.func @transform_17(%arg0: i32) -> (i32, i32) {
    %c0_i32 = arith.constant 0 : i32
    %c0_i32_0 = arith.constant 0 : i32
    %c0_i32_1 = arith.constant 0 : i32
    return %c0_i32, %c0_i32_0 : i32, i32
  }
  func.func @transform_18(%arg0: i32) -> (i32, i32) {
    %c0_i32 = arith.constant 0 : i32
    %c0_i32_0 = arith.constant 0 : i32
    %c0_i32_1 = arith.constant 0 : i32
    return %c0_i32, %c0_i32_0 : i32, i32
  }
  func.func @transform_19(%arg0: i32) -> (i32, i32, i32) {
    %c0_i32 = arith.constant 0 : i32
    %c0_i32_0 = arith.constant 0 : i32
    %c0_i32_1 = arith.constant 0 : i32
    return %arg0, %c0_i32, %c0_i32_0 : i32, i32, i32
  }
}

module attributes {stable_mosaic.version = 11 : i64} {
  func.func @perceiver_xattn_kernel(%arg0: i32, %arg1: memref<1x8x128xbf16, #tpu.memory_space<vmem>>, %arg2: memref<1x8x128xf32, #tpu.memory_space<vmem>>, %arg3: memref<1x1x16xf32, #tpu.memory_space<vmem>>, %arg4: memref<1x128xf32, #tpu.memory_space<vmem>>, %arg5: memref<1x128xf32, #tpu.memory_space<vmem>>, %arg6: memref<1x128xf32, #tpu.memory_space<vmem>>, %arg7: memref<1x128xf32, #tpu.memory_space<vmem>>, %arg8: memref<1x128xf32, #tpu.memory_space<vmem>>, %arg9: memref<1x128xf32, #tpu.memory_space<vmem>>, %arg10: memref<128x128xbf16, #tpu.memory_space<vmem>>, %arg11: memref<1x128xf32, #tpu.memory_space<vmem>>, %arg12: memref<128x256xbf16, #tpu.memory_space<vmem>>, %arg13: memref<1x256xf32, #tpu.memory_space<vmem>>, %arg14: memref<128x128xbf16, #tpu.memory_space<vmem>>, %arg15: memref<1x128xf32, #tpu.memory_space<vmem>>, %arg16: memref<128x512xbf16, #tpu.memory_space<vmem>>, %arg17: memref<1x512xf32, #tpu.memory_space<vmem>>, %arg18: memref<512x128xbf16, #tpu.memory_space<vmem>>, %arg19: memref<1x128xf32, #tpu.memory_space<vmem>>, %arg20: memref<1x8x128xf32, #tpu.memory_space<vmem>>) attributes {dimension_semantics = [#tpu.dimension_semantics<parallel>], iteration_bounds = array<i64: 2>, scalar_prefetch = 0 : i64, scratch_operands = 0 : i64, tpu.core_type = #tpu.core_type<tc>, window_params = [{transform_indices = @transform_0, window_bounds = array<i64: 1, 8, 128>}, {transform_indices = @transform_1, window_bounds = array<i64: 1, 8, 128>}, {transform_indices = @transform_2, window_bounds = array<i64: 1, 1, 16>}, {pipeline_mode = #tpu.pipeline_mode<synchronous>, transform_indices = @transform_3, window_bounds = array<i64: 1, 128>}, {pipeline_mode = #tpu.pipeline_mode<synchronous>, transform_indices = @transform_4, window_bounds = array<i64: 1, 128>}, {pipeline_mode = #tpu.pipeline_mode<synchronous>, transform_indices = @transform_5, window_bounds = array<i64: 1, 128>}, {pipeline_mode = #tpu.pipeline_mode<synchronous>, transform_indices = @transform_6, window_bounds = array<i64: 1, 128>}, {pipeline_mode = #tpu.pipeline_mode<synchronous>, transform_indices = @transform_7, window_bounds = array<i64: 1, 128>}, {pipeline_mode = #tpu.pipeline_mode<synchronous>, transform_indices = @transform_8, window_bounds = array<i64: 1, 128>}, {pipeline_mode = #tpu.pipeline_mode<synchronous>, transform_indices = @transform_9, window_bounds = array<i64: 128, 128>}, {pipeline_mode = #tpu.pipeline_mode<synchronous>, transform_indices = @transform_10, window_bounds = array<i64: 1, 128>}, {pipeline_mode = #tpu.pipeline_mode<synchronous>, transform_indices = @transform_11, window_bounds = array<i64: 128, 256>}, {pipeline_mode = #tpu.pipeline_mode<synchronous>, transform_indices = @transform_12, window_bounds = array<i64: 1, 256>}, {pipeline_mode = #tpu.pipeline_mode<synchronous>, transform_indices = @transform_13, window_bounds = array<i64: 128, 128>}, {pipeline_mode = #tpu.pipeline_mode<synchronous>, transform_indices = @transform_14, window_bounds = array<i64: 1, 128>}, {pipeline_mode = #tpu.pipeline_mode<synchronous>, transform_indices = @transform_15, window_bounds = array<i64: 128, 512>}, {pipeline_mode = #tpu.pipeline_mode<synchronous>, transform_indices = @transform_16, window_bounds = array<i64: 1, 512>}, {pipeline_mode = #tpu.pipeline_mode<synchronous>, transform_indices = @transform_17, window_bounds = array<i64: 512, 128>}, {pipeline_mode = #tpu.pipeline_mode<synchronous>, transform_indices = @transform_18, window_bounds = array<i64: 1, 128>}, {transform_indices = @transform_19, window_bounds = array<i64: 1, 8, 128>}]} {
    %c0 = arith.constant 0 : index
    %c0_0 = arith.constant 0 : index
    %c0_1 = arith.constant 0 : index
    %0 = vector.load %arg1[%c0, %c0_0, %c0_1] : memref<1x8x128xbf16, #tpu.memory_space<vmem>>, vector<1x8x128xbf16>
    %1 = arith.extf %0 : vector<1x8x128xbf16> to vector<1x8x128xf32>
    %c0_2 = arith.constant 0 : index
    %c0_3 = arith.constant 0 : index
    %c0_4 = arith.constant 0 : index
    %2 = vector.load %arg2[%c0_2, %c0_3, %c0_4] : memref<1x8x128xf32, #tpu.memory_space<vmem>>, vector<1x8x128xf32>
    %3 = vector.shape_cast %2 : vector<1x8x128xf32> to vector<8x128xf32>
    %c0_5 = arith.constant 0 : index
    %c0_6 = arith.constant 0 : index
    %4 = vector.load %arg4[%c0_5, %c0_6] : memref<1x128xf32, #tpu.memory_space<vmem>>, vector<1x128xf32>
    %c0_7 = arith.constant 0 : index
    %c0_8 = arith.constant 0 : index
    %5 = vector.load %arg5[%c0_7, %c0_8] : memref<1x128xf32, #tpu.memory_space<vmem>>, vector<1x128xf32>
    %cst = arith.constant dense<0.000000e+00> : vector<1x8xf32>
    %6 = vector.multi_reduction <add>, %1, %cst [2] : vector<1x8x128xf32> to vector<1x8xf32>
    %7 = vector.shape_cast %6 : vector<1x8xf32> to vector<1x8x1xf32>
    %cst_9 = arith.constant 1.280000e+02 : f32
    %8 = vector.broadcast %cst_9 : f32 to vector<1x8x1xf32>
    %9 = arith.divf %7, %8 : vector<1x8x1xf32>
    %10 = vector.broadcast %9 : vector<1x8x1xf32> to vector<1x8x128xf32>
    %11 = arith.subf %1, %10 : vector<1x8x128xf32>
    %12 = arith.mulf %11, %11 : vector<1x8x128xf32>
    %cst_10 = arith.constant dense<0.000000e+00> : vector<1x8xf32>
    %13 = vector.multi_reduction <add>, %12, %cst_10 [2] : vector<1x8x128xf32> to vector<1x8xf32>
    %14 = vector.shape_cast %13 : vector<1x8xf32> to vector<1x8x1xf32>
    %cst_11 = arith.constant 1.280000e+02 : f32
    %15 = vector.broadcast %cst_11 : f32 to vector<1x8x1xf32>
    %16 = arith.divf %14, %15 : vector<1x8x1xf32>
    %17 = vector.broadcast %9 : vector<1x8x1xf32> to vector<1x8x128xf32>
    %18 = arith.subf %1, %17 : vector<1x8x128xf32>
    %cst_12 = arith.constant 9.99999974E-6 : f32
    %19 = vector.broadcast %cst_12 : f32 to vector<1x8x1xf32>
    %20 = arith.addf %16, %19 : vector<1x8x1xf32>
    %21 = math.rsqrt %20 : vector<1x8x1xf32>
    %22 = vector.broadcast %21 : vector<1x8x1xf32> to vector<1x8x128xf32>
    %23 = arith.mulf %18, %22 : vector<1x8x128xf32>
    %24 = vector.shape_cast %4 : vector<1x128xf32> to vector<1x1x128xf32>
    %25 = vector.broadcast %24 : vector<1x1x128xf32> to vector<1x8x128xf32>
    %26 = arith.mulf %23, %25 : vector<1x8x128xf32>
    %27 = vector.shape_cast %5 : vector<1x128xf32> to vector<1x1x128xf32>
    %28 = vector.broadcast %27 : vector<1x1x128xf32> to vector<1x8x128xf32>
    %29 = arith.addf %26, %28 : vector<1x8x128xf32>
    %30 = arith.truncf %29 : vector<1x8x128xf32> to vector<1x8x128xbf16>
    %c0_13 = arith.constant 0 : index
    %c0_14 = arith.constant 0 : index
    %31 = vector.load %arg4[%c0_13, %c0_14] : memref<1x128xf32, #tpu.memory_space<vmem>>, vector<1x128xf32>
    %c0_15 = arith.constant 0 : index
    %c0_16 = arith.constant 0 : index
    %32 = vector.load %arg5[%c0_15, %c0_16] : memref<1x128xf32, #tpu.memory_space<vmem>>, vector<1x128xf32>
    %cst_17 = arith.constant dense<0.000000e+00> : vector<1x8xf32>
    %33 = vector.multi_reduction <add>, %2, %cst_17 [2] : vector<1x8x128xf32> to vector<1x8xf32>
    %34 = vector.shape_cast %33 : vector<1x8xf32> to vector<1x8x1xf32>
    %cst_18 = arith.constant 1.280000e+02 : f32
    %35 = vector.broadcast %cst_18 : f32 to vector<1x8x1xf32>
    %36 = arith.divf %34, %35 : vector<1x8x1xf32>
    %37 = vector.broadcast %36 : vector<1x8x1xf32> to vector<1x8x128xf32>
    %38 = arith.subf %2, %37 : vector<1x8x128xf32>
    %39 = arith.mulf %38, %38 : vector<1x8x128xf32>
    %cst_19 = arith.constant dense<0.000000e+00> : vector<1x8xf32>
    %40 = vector.multi_reduction <add>, %39, %cst_19 [2] : vector<1x8x128xf32> to vector<1x8xf32>
    %41 = vector.shape_cast %40 : vector<1x8xf32> to vector<1x8x1xf32>
    %cst_20 = arith.constant 1.280000e+02 : f32
    %42 = vector.broadcast %cst_20 : f32 to vector<1x8x1xf32>
    %43 = arith.divf %41, %42 : vector<1x8x1xf32>
    %44 = vector.broadcast %36 : vector<1x8x1xf32> to vector<1x8x128xf32>
    %45 = arith.subf %2, %44 : vector<1x8x128xf32>
    %cst_21 = arith.constant 9.99999974E-6 : f32
    %46 = vector.broadcast %cst_21 : f32 to vector<1x8x1xf32>
    %47 = arith.addf %43, %46 : vector<1x8x1xf32>
    %48 = math.rsqrt %47 : vector<1x8x1xf32>
    %49 = vector.broadcast %48 : vector<1x8x1xf32> to vector<1x8x128xf32>
    %50 = arith.mulf %45, %49 : vector<1x8x128xf32>
    %51 = vector.shape_cast %31 : vector<1x128xf32> to vector<1x1x128xf32>
    %52 = vector.broadcast %51 : vector<1x1x128xf32> to vector<1x8x128xf32>
    %53 = arith.mulf %50, %52 : vector<1x8x128xf32>
    %54 = vector.shape_cast %32 : vector<1x128xf32> to vector<1x1x128xf32>
    %55 = vector.broadcast %54 : vector<1x1x128xf32> to vector<1x8x128xf32>
    %56 = arith.addf %53, %55 : vector<1x8x128xf32>
    %57 = arith.truncf %56 : vector<1x8x128xf32> to vector<1x8x128xbf16>
    %58 = tpu.concatenate %30, %57 in 1 : vector<1x8x128xbf16>, vector<1x8x128xbf16> -> vector<1x16x128xbf16>
    %59 = vector.shape_cast %58 : vector<1x16x128xbf16> to vector<16x128xbf16>
    %c0_22 = arith.constant 0 : index
    %c0_23 = arith.constant 0 : index
    %60 = vector.load %arg6[%c0_22, %c0_23] : memref<1x128xf32, #tpu.memory_space<vmem>>, vector<1x128xf32>
    %c0_24 = arith.constant 0 : index
    %c0_25 = arith.constant 0 : index
    %61 = vector.load %arg7[%c0_24, %c0_25] : memref<1x128xf32, #tpu.memory_space<vmem>>, vector<1x128xf32>
    %cst_26 = arith.constant dense<0.000000e+00> : vector<8xf32>
    %62 = vector.multi_reduction <add>, %3, %cst_26 [1] : vector<8x128xf32> to vector<8xf32>
    %63 = vector.shape_cast %62 : vector<8xf32> to vector<8x1xf32>
    %cst_27 = arith.constant 1.280000e+02 : f32
    %64 = vector.broadcast %cst_27 : f32 to vector<8x1xf32>
    %65 = arith.divf %63, %64 : vector<8x1xf32>
    %66 = vector.broadcast %65 : vector<8x1xf32> to vector<8x128xf32>
    %67 = arith.subf %3, %66 : vector<8x128xf32>
    %68 = arith.mulf %67, %67 : vector<8x128xf32>
    %cst_28 = arith.constant dense<0.000000e+00> : vector<8xf32>
    %69 = vector.multi_reduction <add>, %68, %cst_28 [1] : vector<8x128xf32> to vector<8xf32>
    %70 = vector.shape_cast %69 : vector<8xf32> to vector<8x1xf32>
    %cst_29 = arith.constant 1.280000e+02 : f32
    %71 = vector.broadcast %cst_29 : f32 to vector<8x1xf32>
    %72 = arith.divf %70, %71 : vector<8x1xf32>
    %73 = vector.broadcast %65 : vector<8x1xf32> to vector<8x128xf32>
    %74 = arith.subf %3, %73 : vector<8x128xf32>
    %cst_30 = arith.constant 9.99999974E-6 : f32
    %75 = vector.broadcast %cst_30 : f32 to vector<8x1xf32>
    %76 = arith.addf %72, %75 : vector<8x1xf32>
    %77 = math.rsqrt %76 : vector<8x1xf32>
    %78 = vector.broadcast %77 : vector<8x1xf32> to vector<8x128xf32>
    %79 = arith.mulf %74, %78 : vector<8x128xf32>
    %80 = vector.broadcast %60 : vector<1x128xf32> to vector<8x128xf32>
    %81 = arith.mulf %79, %80 : vector<8x128xf32>
    %82 = vector.broadcast %61 : vector<1x128xf32> to vector<8x128xf32>
    %83 = arith.addf %81, %82 : vector<8x128xf32>
    %84 = arith.truncf %83 : vector<8x128xf32> to vector<8x128xbf16>
    %c0_31 = arith.constant 0 : index
    %c0_32 = arith.constant 0 : index
    %85 = vector.load %arg10[%c0_31, %c0_32] : memref<128x128xbf16, #tpu.memory_space<vmem>>, vector<128x128xbf16>
    %cst_33 = arith.constant dense<0.000000e+00> : vector<8x128xf32>
    %86 = tpu.matmul %84, %85, %cst_33 {dimension_numbers = #tpu.dot_dimension_numbers<[1], [0], [0], [1], [0, 0, 1, 1], [], []>} : vector<8x128xbf16>, vector<128x128xbf16>, vector<8x128xf32> -> vector<8x128xf32>
    %c0_34 = arith.constant 0 : index
    %c0_35 = arith.constant 0 : index
    %87 = vector.load %arg11[%c0_34, %c0_35] : memref<1x128xf32, #tpu.memory_space<vmem>>, vector<1x128xf32>
    %88 = vector.broadcast %87 : vector<1x128xf32> to vector<8x128xf32>
    %89 = arith.addf %86, %88 : vector<8x128xf32>
    %cst_36 = arith.constant 0.176776692 : f32
    %90 = vector.broadcast %cst_36 : f32 to vector<8x128xf32>
    %91 = arith.mulf %89, %90 : vector<8x128xf32>
    %92 = arith.truncf %91 : vector<8x128xf32> to vector<8x128xbf16>
    %c0_37 = arith.constant 0 : index
    %c0_38 = arith.constant 0 : index
    %93 = vector.load %arg12[%c0_37, %c0_38] : memref<128x256xbf16, #tpu.memory_space<vmem>>, vector<128x256xbf16>
    %cst_39 = arith.constant dense<0.000000e+00> : vector<16x256xf32>
    %94 = tpu.matmul %59, %93, %cst_39 {dimension_numbers = #tpu.dot_dimension_numbers<[1], [0], [0], [1], [0, 0, 1, 1], [], []>} : vector<16x128xbf16>, vector<128x256xbf16>, vector<16x256xf32> -> vector<16x256xf32>
    %c0_40 = arith.constant 0 : index
    %c0_41 = arith.constant 0 : index
    %95 = vector.load %arg13[%c0_40, %c0_41] : memref<1x256xf32, #tpu.memory_space<vmem>>, vector<1x256xf32>
    %96 = vector.broadcast %95 : vector<1x256xf32> to vector<16x256xf32>
    %97 = arith.addf %94, %96 : vector<16x256xf32>
    %98 = vector.extract_strided_slice %97 {offsets = [0, 0], sizes = [16, 128], strides = [1, 1]} : vector<16x256xf32> to vector<16x128xf32>
    %99 = arith.truncf %98 : vector<16x128xf32> to vector<16x128xbf16>
    %100 = vector.extract_strided_slice %97 {offsets = [0, 128], sizes = [16, 128], strides = [1, 1]} : vector<16x256xf32> to vector<16x128xf32>
    %101 = arith.truncf %100 : vector<16x128xf32> to vector<16x128xbf16>
    %102 = vector.shape_cast %92 : vector<8x128xbf16> to vector<1x8x128xbf16>
    %103 = vector.shape_cast %99 : vector<16x128xbf16> to vector<1x16x128xbf16>
    %104 = vector.shape_cast %101 : vector<16x128xbf16> to vector<1x16x128xbf16>
    %105 = vector.extract_strided_slice %102 {offsets = [0, 0, 0], sizes = [1, 8, 32], strides = [1, 1, 1]} : vector<1x8x128xbf16> to vector<1x8x32xbf16>
    %106 = vector.extract_strided_slice %102 {offsets = [0, 0, 32], sizes = [1, 8, 32], strides = [1, 1, 1]} : vector<1x8x128xbf16> to vector<1x8x32xbf16>
    %107 = vector.extract_strided_slice %102 {offsets = [0, 0, 64], sizes = [1, 8, 32], strides = [1, 1, 1]} : vector<1x8x128xbf16> to vector<1x8x32xbf16>
    %108 = vector.extract_strided_slice %102 {offsets = [0, 0, 96], sizes = [1, 8, 32], strides = [1, 1, 1]} : vector<1x8x128xbf16> to vector<1x8x32xbf16>
    %109 = tpu.concatenate %105, %106, %107, %108 in 0 : vector<1x8x32xbf16>, vector<1x8x32xbf16>, vector<1x8x32xbf16>, vector<1x8x32xbf16> -> vector<4x8x32xbf16>
    %110 = vector.extract_strided_slice %103 {offsets = [0, 0, 0], sizes = [1, 16, 32], strides = [1, 1, 1]} : vector<1x16x128xbf16> to vector<1x16x32xbf16>
    %111 = vector.extract_strided_slice %103 {offsets = [0, 0, 32], sizes = [1, 16, 32], strides = [1, 1, 1]} : vector<1x16x128xbf16> to vector<1x16x32xbf16>
    %112 = vector.extract_strided_slice %103 {offsets = [0, 0, 64], sizes = [1, 16, 32], strides = [1, 1, 1]} : vector<1x16x128xbf16> to vector<1x16x32xbf16>
    %113 = vector.extract_strided_slice %103 {offsets = [0, 0, 96], sizes = [1, 16, 32], strides = [1, 1, 1]} : vector<1x16x128xbf16> to vector<1x16x32xbf16>
    %114 = tpu.concatenate %110, %111, %112, %113 in 0 : vector<1x16x32xbf16>, vector<1x16x32xbf16>, vector<1x16x32xbf16>, vector<1x16x32xbf16> -> vector<4x16x32xbf16>
    %115 = vector.extract_strided_slice %104 {offsets = [0, 0, 0], sizes = [1, 16, 32], strides = [1, 1, 1]} : vector<1x16x128xbf16> to vector<1x16x32xbf16>
    %116 = vector.extract_strided_slice %104 {offsets = [0, 0, 32], sizes = [1, 16, 32], strides = [1, 1, 1]} : vector<1x16x128xbf16> to vector<1x16x32xbf16>
    %117 = vector.extract_strided_slice %104 {offsets = [0, 0, 64], sizes = [1, 16, 32], strides = [1, 1, 1]} : vector<1x16x128xbf16> to vector<1x16x32xbf16>
    %118 = vector.extract_strided_slice %104 {offsets = [0, 0, 96], sizes = [1, 16, 32], strides = [1, 1, 1]} : vector<1x16x128xbf16> to vector<1x16x32xbf16>
    %119 = tpu.concatenate %115, %116, %117, %118 in 0 : vector<1x16x32xbf16>, vector<1x16x32xbf16>, vector<1x16x32xbf16>, vector<1x16x32xbf16> -> vector<4x16x32xbf16>
    %c0_42 = arith.constant 0 : index
    %c0_43 = arith.constant 0 : index
    %c0_44 = arith.constant 0 : index
    %120 = vector.load %arg3[%c0_42, %c0_43, %c0_44] : memref<1x1x16xf32, #tpu.memory_space<vmem>>, vector<1x1x16xf32>
    %cst_45 = arith.constant 0.000000e+00 : f32
    %121 = vector.broadcast %cst_45 : f32 to vector<1x1x16xf32>
    %122 = arith.cmpf ogt, %120, %121 : vector<1x1x16xf32>
    %cst_46 = arith.constant 0.000000e+00 : f32
    %cst_47 = arith.constant -1.000000e+09 : f32
    %123 = vector.broadcast %cst_46 : f32 to vector<1x1x16xf32>
    %124 = vector.broadcast %cst_47 : f32 to vector<1x1x16xf32>
    %125 = arith.select %122, %123, %124 : vector<1x1x16xi1>, vector<1x1x16xf32>
    %126 = tpu.concatenate %125, %125, %125, %125 in 0 : vector<1x1x16xf32>, vector<1x1x16xf32>, vector<1x1x16xf32>, vector<1x1x16xf32> -> vector<4x1x16xf32>
    "tpu.trace_start"() <{level = 10 : i32, message = "zqd,zkd->zqk"}> : () -> ()
    %cst_48 = arith.constant dense<0.000000e+00> : vector<4x8x16xf32>
    %127 = tpu.matmul %109, %114, %cst_48 {dimension_numbers = #tpu.dot_dimension_numbers<[2], [2], [1], [1], [0, 0, 0, 1, 1, 1], [0], [0]>} : vector<4x8x32xbf16>, vector<4x16x32xbf16>, vector<4x8x16xf32> -> vector<4x8x16xf32>
    "tpu.trace_stop"() : () -> ()
    %128 = vector.broadcast %126 : vector<4x1x16xf32> to vector<4x8x16xf32>
    %129 = arith.addf %127, %128 : vector<4x8x16xf32>
    %cst_49 = arith.constant dense<0xFF800000> : vector<4x8xf32>
    %130 = vector.multi_reduction <maximumf>, %129, %cst_49 [2] : vector<4x8x16xf32> to vector<4x8xf32>
    %131 = vector.shape_cast %130 : vector<4x8xf32> to vector<4x8x1xf32>
    %132 = vector.broadcast %131 : vector<4x8x1xf32> to vector<4x8x16xf32>
    %133 = arith.subf %129, %132 : vector<4x8x16xf32>
    %134 = math.exp %133 : vector<4x8x16xf32>
    %cst_50 = arith.constant dense<0.000000e+00> : vector<4x8xf32>
    %135 = vector.multi_reduction <add>, %134, %cst_50 [2] : vector<4x8x16xf32> to vector<4x8xf32>
    %136 = vector.shape_cast %135 : vector<4x8xf32> to vector<4x8x1xf32>
    %137 = tpu.reciprocal %136 {approx = true} : vector<4x8x1xf32> -> vector<4x8x1xf32>
    %138 = vector.broadcast %137 : vector<4x8x1xf32> to vector<4x8x16xf32>
    %139 = arith.mulf %134, %138 : vector<4x8x16xf32>
    %140 = arith.truncf %139 : vector<4x8x16xf32> to vector<4x8x16xbf16>
    "tpu.trace_start"() <{level = 10 : i32, message = "zqk,zkd->zqd"}> : () -> ()
    %cst_51 = arith.constant dense<0.000000e+00> : vector<4x8x32xf32>
    %141 = tpu.matmul %140, %119, %cst_51 {dimension_numbers = #tpu.dot_dimension_numbers<[2], [1], [1], [2], [0, 0, 0, 1, 1, 2], [0], [0]>} : vector<4x8x16xbf16>, vector<4x16x32xbf16>, vector<4x8x32xf32> -> vector<4x8x32xf32>
    "tpu.trace_stop"() : () -> ()
    %142 = vector.extract_strided_slice %141 {offsets = [0, 0, 0], sizes = [1, 8, 32], strides = [1, 1, 1]} : vector<4x8x32xf32> to vector<1x8x32xf32>
    %143 = vector.extract_strided_slice %141 {offsets = [1, 0, 0], sizes = [1, 8, 32], strides = [1, 1, 1]} : vector<4x8x32xf32> to vector<1x8x32xf32>
    %144 = vector.extract_strided_slice %141 {offsets = [2, 0, 0], sizes = [1, 8, 32], strides = [1, 1, 1]} : vector<4x8x32xf32> to vector<1x8x32xf32>
    %145 = vector.extract_strided_slice %141 {offsets = [3, 0, 0], sizes = [1, 8, 32], strides = [1, 1, 1]} : vector<4x8x32xf32> to vector<1x8x32xf32>
    %146 = tpu.concatenate %142, %143, %144, %145 in 2 : vector<1x8x32xf32>, vector<1x8x32xf32>, vector<1x8x32xf32>, vector<1x8x32xf32> -> vector<1x8x128xf32>
    %147 = vector.shape_cast %146 : vector<1x8x128xf32> to vector<8x128xf32>
    %148 = arith.truncf %147 : vector<8x128xf32> to vector<8x128xbf16>
    %c0_52 = arith.constant 0 : index
    %c0_53 = arith.constant 0 : index
    %149 = vector.load %arg14[%c0_52, %c0_53] : memref<128x128xbf16, #tpu.memory_space<vmem>>, vector<128x128xbf16>
    %cst_54 = arith.constant dense<0.000000e+00> : vector<8x128xf32>
    %150 = tpu.matmul %148, %149, %cst_54 {dimension_numbers = #tpu.dot_dimension_numbers<[1], [0], [0], [1], [0, 0, 1, 1], [], []>} : vector<8x128xbf16>, vector<128x128xbf16>, vector<8x128xf32> -> vector<8x128xf32>
    %c0_55 = arith.constant 0 : index
    %c0_56 = arith.constant 0 : index
    %151 = vector.load %arg15[%c0_55, %c0_56] : memref<1x128xf32, #tpu.memory_space<vmem>>, vector<1x128xf32>
    %152 = vector.broadcast %151 : vector<1x128xf32> to vector<8x128xf32>
    %153 = arith.addf %150, %152 : vector<8x128xf32>
    %154 = arith.addf %153, %3 : vector<8x128xf32>
    %c0_57 = arith.constant 0 : index
    %c0_58 = arith.constant 0 : index
    %155 = vector.load %arg8[%c0_57, %c0_58] : memref<1x128xf32, #tpu.memory_space<vmem>>, vector<1x128xf32>
    %c0_59 = arith.constant 0 : index
    %c0_60 = arith.constant 0 : index
    %156 = vector.load %arg9[%c0_59, %c0_60] : memref<1x128xf32, #tpu.memory_space<vmem>>, vector<1x128xf32>
    %cst_61 = arith.constant dense<0.000000e+00> : vector<8xf32>
    %157 = vector.multi_reduction <add>, %154, %cst_61 [1] : vector<8x128xf32> to vector<8xf32>
    %158 = vector.shape_cast %157 : vector<8xf32> to vector<8x1xf32>
    %cst_62 = arith.constant 1.280000e+02 : f32
    %159 = vector.broadcast %cst_62 : f32 to vector<8x1xf32>
    %160 = arith.divf %158, %159 : vector<8x1xf32>
    %161 = vector.broadcast %160 : vector<8x1xf32> to vector<8x128xf32>
    %162 = arith.subf %154, %161 : vector<8x128xf32>
    %163 = arith.mulf %162, %162 : vector<8x128xf32>
    %cst_63 = arith.constant dense<0.000000e+00> : vector<8xf32>
    %164 = vector.multi_reduction <add>, %163, %cst_63 [1] : vector<8x128xf32> to vector<8xf32>
    %165 = vector.shape_cast %164 : vector<8xf32> to vector<8x1xf32>
    %cst_64 = arith.constant 1.280000e+02 : f32
    %166 = vector.broadcast %cst_64 : f32 to vector<8x1xf32>
    %167 = arith.divf %165, %166 : vector<8x1xf32>
    %168 = vector.broadcast %160 : vector<8x1xf32> to vector<8x128xf32>
    %169 = arith.subf %154, %168 : vector<8x128xf32>
    %cst_65 = arith.constant 9.99999974E-6 : f32
    %170 = vector.broadcast %cst_65 : f32 to vector<8x1xf32>
    %171 = arith.addf %167, %170 : vector<8x1xf32>
    %172 = math.rsqrt %171 : vector<8x1xf32>
    %173 = vector.broadcast %172 : vector<8x1xf32> to vector<8x128xf32>
    %174 = arith.mulf %169, %173 : vector<8x128xf32>
    %175 = vector.broadcast %155 : vector<1x128xf32> to vector<8x128xf32>
    %176 = arith.mulf %174, %175 : vector<8x128xf32>
    %177 = vector.broadcast %156 : vector<1x128xf32> to vector<8x128xf32>
    %178 = arith.addf %176, %177 : vector<8x128xf32>
    %179 = arith.truncf %178 : vector<8x128xf32> to vector<8x128xbf16>
    %c0_66 = arith.constant 0 : index
    %c0_67 = arith.constant 0 : index
    %180 = vector.load %arg16[%c0_66, %c0_67] : memref<128x512xbf16, #tpu.memory_space<vmem>>, vector<128x512xbf16>
    %cst_68 = arith.constant dense<0.000000e+00> : vector<8x512xf32>
    %181 = tpu.matmul %179, %180, %cst_68 {dimension_numbers = #tpu.dot_dimension_numbers<[1], [0], [0], [1], [0, 0, 1, 1], [], []>} : vector<8x128xbf16>, vector<128x512xbf16>, vector<8x512xf32> -> vector<8x512xf32>
    %c0_69 = arith.constant 0 : index
    %c0_70 = arith.constant 0 : index
    %182 = vector.load %arg17[%c0_69, %c0_70] : memref<1x512xf32, #tpu.memory_space<vmem>>, vector<1x512xf32>
    %183 = vector.broadcast %182 : vector<1x512xf32> to vector<8x512xf32>
    %184 = arith.addf %181, %183 : vector<8x512xf32>
    %185 = arith.mulf %184, %184 : vector<8x512xf32>
    %186 = arith.mulf %184, %185 : vector<8x512xf32>
    %cst_71 = arith.constant 4.471500e-02 : f32
    %187 = vector.broadcast %cst_71 : f32 to vector<8x512xf32>
    %188 = arith.mulf %187, %186 : vector<8x512xf32>
    %189 = arith.addf %184, %188 : vector<8x512xf32>
    %cst_72 = arith.constant 0.797884583 : f32
    %190 = vector.broadcast %cst_72 : f32 to vector<8x512xf32>
    %191 = arith.mulf %190, %189 : vector<8x512xf32>
    %192 = math.tanh %191 : vector<8x512xf32>
    %cst_73 = arith.constant 1.000000e+00 : f32
    %193 = vector.broadcast %cst_73 : f32 to vector<8x512xf32>
    %194 = arith.addf %193, %192 : vector<8x512xf32>
    %cst_74 = arith.constant 5.000000e-01 : f32
    %195 = vector.broadcast %cst_74 : f32 to vector<8x512xf32>
    %196 = arith.mulf %195, %194 : vector<8x512xf32>
    %197 = arith.mulf %184, %196 : vector<8x512xf32>
    %198 = arith.truncf %197 : vector<8x512xf32> to vector<8x512xbf16>
    %c0_75 = arith.constant 0 : index
    %c0_76 = arith.constant 0 : index
    %199 = vector.load %arg18[%c0_75, %c0_76] : memref<512x128xbf16, #tpu.memory_space<vmem>>, vector<512x128xbf16>
    %cst_77 = arith.constant dense<0.000000e+00> : vector<8x128xf32>
    %200 = tpu.matmul %198, %199, %cst_77 {dimension_numbers = #tpu.dot_dimension_numbers<[1], [0], [0], [1], [0, 0, 1, 1], [], []>} : vector<8x512xbf16>, vector<512x128xbf16>, vector<8x128xf32> -> vector<8x128xf32>
    %c0_78 = arith.constant 0 : index
    %c0_79 = arith.constant 0 : index
    %201 = vector.load %arg19[%c0_78, %c0_79] : memref<1x128xf32, #tpu.memory_space<vmem>>, vector<1x128xf32>
    %202 = vector.broadcast %201 : vector<1x128xf32> to vector<8x128xf32>
    %203 = arith.addf %200, %202 : vector<8x128xf32>
    %204 = arith.addf %203, %154 : vector<8x128xf32>
    %205 = vector.shape_cast %204 : vector<8x128xf32> to vector<1x8x128xf32>
    %c0_80 = arith.constant 0 : index
    %c0_81 = arith.constant 0 : index
    %c0_82 = arith.constant 0 : index
    %206 = vector.load %arg20[%c0_80, %c0_81, %c0_82] : memref<1x8x128xf32, #tpu.memory_space<vmem>>, vector<1x8x128xf32>
    tpu.vector_store %arg20[%c0_80, %c0_81, %c0_82], %205 {strides = array<i32>} : memref<1x8x128xf32, #tpu.memory_space<vmem>>, vector<1x8x128xf32>,
    return
  }
  func.func @transform_0(%arg0: i32) -> (i32, i32, i32) {
    %c0_i32 = arith.constant 0 : i32
    %c0_i32_0 = arith.constant 0 : i32
    %c0_i32_1 = arith.constant 0 : i32
    return %arg0, %c0_i32, %c0_i32_0 : i32, i32, i32
  }
  func.func @transform_1(%arg0: i32) -> (i32, i32, i32) {
    %c0_i32 = arith.constant 0 : i32
    %c0_i32_0 = arith.constant 0 : i32
    %c0_i32_1 = arith.constant 0 : i32
    return %arg0, %c0_i32, %c0_i32_0 : i32, i32, i32
  }
  func.func @transform_2(%arg0: i32) -> (i32, i32, i32) {
    %c0_i32 = arith.constant 0 : i32
    %c0_i32_0 = arith.constant 0 : i32
    %c0_i32_1 = arith.constant 0 : i32
    return %arg0, %c0_i32, %c0_i32_0 : i32, i32, i32
  }
  func.func @transform_3(%arg0: i32) -> (i32, i32) {
    %c0_i32 = arith.constant 0 : i32
    %c0_i32_0 = arith.constant 0 : i32
    %c0_i32_1 = arith.constant 0 : i32
    return %c0_i32, %c0_i32_0 : i32, i32
  }
  func.func @transform_4(%arg0: i32) -> (i32, i32) {
    %c0_i32 = arith.constant 0 : i32
    %c0_i32_0 = arith.constant 0 : i32
    %c0_i32_1 = arith.constant 0 : i32
    return %c0_i32, %c0_i32_0 : i32, i32
  }
  func.func @transform_5(%arg0: i32) -> (i32, i32) {
    %c0_i32 = arith.constant 0 : i32
    %c0_i32_0 = arith.constant 0 : i32
    %c0_i32_1 = arith.constant 0 : i32
    return %c0_i32, %c0_i32_0 : i32, i32
  }
  func.func @transform_6(%arg0: i32) -> (i32, i32) {
    %c0_i32 = arith.constant 0 : i32
    %c0_i32_0 = arith.constant 0 : i32
    %c0_i32_1 = arith.constant 0 : i32
    return %c0_i32, %c0_i32_0 : i32, i32
  }
  func.func @transform_7(%arg0: i32) -> (i32, i32) {
    %c0_i32 = arith.constant 0 : i32
    %c0_i32_0 = arith.constant 0 : i32
    %c0_i32_1 = arith.constant 0 : i32
    return %c0_i32, %c0_i32_0 : i32, i32
  }
  func.func @transform_8(%arg0: i32) -> (i32, i32) {
    %c0_i32 = arith.constant 0 : i32
    %c0_i32_0 = arith.constant 0 : i32
    %c0_i32_1 = arith.constant 0 : i32
    return %c0_i32, %c0_i32_0 : i32, i32
  }
  func.func @transform_9(%arg0: i32) -> (i32, i32) {
    %c0_i32 = arith.constant 0 : i32
    %c0_i32_0 = arith.constant 0 : i32
    %c0_i32_1 = arith.constant 0 : i32
    return %c0_i32, %c0_i32_0 : i32, i32
  }
  func.func @transform_10(%arg0: i32) -> (i32, i32) {
    %c0_i32 = arith.constant 0 : i32
    %c0_i32_0 = arith.constant 0 : i32
    %c0_i32_1 = arith.constant 0 : i32
    return %c0_i32, %c0_i32_0 : i32, i32
  }
  func.func @transform_11(%arg0: i32) -> (i32, i32) {
    %c0_i32 = arith.constant 0 : i32
    %c0_i32_0 = arith.constant 0 : i32
    %c0_i32_1 = arith.constant 0 : i32
    return %c0_i32, %c0_i32_0 : i32, i32
  }
  func.func @transform_12(%arg0: i32) -> (i32, i32) {
    %c0_i32 = arith.constant 0 : i32
    %c0_i32_0 = arith.constant 0 : i32
    %c0_i32_1 = arith.constant 0 : i32
    return %c0_i32, %c0_i32_0 : i32, i32
  }
  func.func @transform_13(%arg0: i32) -> (i32, i32) {
    %c0_i32 = arith.constant 0 : i32
    %c0_i32_0 = arith.constant 0 : i32
    %c0_i32_1 = arith.constant 0 : i32
    return %c0_i32, %c0_i32_0 : i32, i32
  }
  func.func @transform_14(%arg0: i32) -> (i32, i32) {
    %c0_i32 = arith.constant 0 : i32
    %c0_i32_0 = arith.constant 0 : i32
    %c0_i32_1 = arith.constant 0 : i32
    return %c0_i32, %c0_i32_0 : i32, i32
  }
  func.func @transform_15(%arg0: i32) -> (i32, i32) {
    %c0_i32 = arith.constant 0 : i32
    %c0_i32_0 = arith.constant 0 : i32
    %c0_i32_1 = arith.constant 0 : i32
    return %c0_i32, %c0_i32_0 : i32, i32
  }
  func.func @transform_16(%arg0: i32) -> (i32, i32) {
    %c0_i32 = arith.constant 0 : i32
    %c0_i32_0 = arith.constant 0 : i32
    %c0_i32_1 = arith.constant 0 : i32
    return %c0_i32, %c0_i32_0 : i32, i32
  }
  func.func @transform_17(%arg0: i32) -> (i32, i32) {
    %c0_i32 = arith.constant 0 : i32
    %c0_i32_0 = arith.constant 0 : i32
    %c0_i32_1 = arith.constant 0 : i32
    return %c0_i32, %c0_i32_0 : i32, i32
  }
  func.func @transform_18(%arg0: i32) -> (i32, i32) {
    %c0_i32 = arith.constant 0 : i32
    %c0_i32_0 = arith.constant 0 : i32
    %c0_i32_1 = arith.constant 0 : i32
    return %c0_i32, %c0_i32_0 : i32, i32
  }
  func.func @transform_19(%arg0: i32) -> (i32, i32, i32) {
    %c0_i32 = arith.constant 0 : i32
    %c0_i32_0 = arith.constant 0 : i32
    %c0_i32_1 = arith.constant 0 : i32
    return %arg0, %c0_i32, %c0_i32_0 : i32, i32, i32
  }
}

</mosaic_0001>

<llo_original>
// kernel: tpu_custom_call.1
$region0: #{tpu_custom_call.1}
  #allocation0 [shape = 'u32[]', space=smem, size = 0x4, offset = 0x4, fixed_abs, tag = 'smem constant byte address 0x4 - core index']
  #allocation1 [shape = 'u32[144,128]{1,0:T(1,128)}', space=vmem, size = 0x12000, scoped, tag = 'internal scratch']
  %s0 = inlined_call_operand.hbm [shape: bf16[2,8,128], index: 0, kind: input, shape index: {}]
  %s1 = inlined_call_operand.hbm [shape: f32[2,8,128], index: 1, kind: input, shape index: {}]
  %s2 = inlined_call_operand.vmem [shape: f32[2,1,16], index: 2, kind: input, shape index: {}]
  %s3 = inlined_call_operand.vmem [shape: f32[1,128], index: 3, kind: input, shape index: {}]
  %s4 = inlined_call_operand.vmem [shape: f32[1,128], index: 4, kind: input, shape index: {}]
  %s5 = inlined_call_operand.vmem [shape: f32[1,128], index: 5, kind: input, shape index: {}]
  %s6 = inlined_call_operand.vmem [shape: f32[1,128], index: 6, kind: input, shape index: {}]
  %s7 = inlined_call_operand.vmem [shape: f32[1,128], index: 7, kind: input, shape index: {}]
  %s8 = inlined_call_operand.vmem [shape: f32[1,128], index: 8, kind: input, shape index: {}]
  %s9 = inlined_call_operand.hbm [shape: bf16[128,128], index: 9, kind: input, shape index: {}]
  %s10 = inlined_call_operand.vmem [shape: f32[1,128], index: 10, kind: input, shape index: {}]
  %s11 = inlined_call_operand.hbm [shape: bf16[128,256], index: 11, kind: input, shape index: {}]
  %s12 = inlined_call_operand.vmem [shape: f32[1,256], index: 12, kind: input, shape index: {}]
  %s13 = inlined_call_operand.hbm [shape: bf16[128,128], index: 13, kind: input, shape index: {}]
  %s14 = inlined_call_operand.vmem [shape: f32[1,128], index: 14, kind: input, shape index: {}]
  %s15 = inlined_call_operand.hbm [shape: bf16[128,512], index: 15, kind: input, shape index: {}]
  %s16 = inlined_call_operand.vmem [shape: f32[1,512], index: 16, kind: input, shape index: {}]
  %s17 = inlined_call_operand.hbm [shape: bf16[512,128], index: 17, kind: input, shape index: {}]
  %s18 = inlined_call_operand.vmem [shape: f32[1,128], index: 18, kind: input, shape index: {}]
  %s19 = inlined_call_operand.hbm [shape: f32[2,8,128], index: 19, kind: output, shape index: {}]
  %s20 = sld [smem:[#allocation0]]
  $region137: #{tpu_custom_call.1} parent=0
    _
  %s22 = ssub.s32 1, %s20
  %s23 = scalar_select 0, %s22, %s20
  $region1: #{tpu_custom_call.1} parent=0
    #allocation2 [shape = 'u8[4096]{0}', space=vmem, size = 0x1000, scoped, tag = 'input window, operand 0']
    #allocation3 [shape = 's32[2]{0}', space=sflag, size = 0x8, scoped, tag = 'scoped memory for tpu_custom_call.1']
    #allocation4 [shape = 's32[2]{0}', space=sflag, size = 0x8, scoped, tag = 'scoped memory for tpu_custom_call.1']
    #allocation5 [shape = 'u8[8192]{0}', space=vmem, size = 0x2000, scoped, tag = 'input window, operand 1']
    #allocation6 [shape = 's32[2]{0}', space=sflag, size = 0x8, scoped, tag = 'scoped memory for tpu_custom_call.1']
    #allocation7 [shape = 'u8[32768]{0}', space=vmem, size = 0x8000, scoped, tag = 'input window, operand 9, single buffered']
    #allocation8 [shape = 'u8[65536]{0}', space=vmem, size = 0x10000, scoped, tag = 'input window, operand 11, single buffered']
    #allocation9 [shape = 's32[1]{0}', space=sflag, size = 0x4, scoped, tag = 'scoped memory for tpu_custom_call.1']
    #allocation10 [shape = 'u8[32768]{0}', space=vmem, size = 0x8000, scoped, tag = 'input window, operand 13, single buffered']
    #allocation11 [shape = 'u8[131072]{0}', space=vmem, size = 0x20000, scoped, tag = 'input window, operand 15, single buffered']
    #allocation12 [shape = 's32[1]{0}', space=sflag, size = 0x4, scoped, tag = 'scoped memory for tpu_custom_call.1']
    #allocation13 [shape = 'u8[131072]{0}', space=vmem, size = 0x20000, scoped, tag = 'input window, operand 17, single buffered']
    #allocation14 [shape = 'u8[8192]{0}', space=vmem, size = 0x2000, scoped, tag = 'output window, operand 0']
    %24 = vsyncpa [#allocation3], 0
    %s25 = scalar_lea.sflag [#allocation3], 1
    %26 = vsyncpa %s25, 0
    %27 = vsyncpa [#allocation6], 0
    %s28 = scalar_lea.sflag [#allocation6], 1
    %29 = vsyncpa %s28, 0
    %30 = vsyncpa [#allocation9], 0
    %31 = vsyncpa [#allocation12], 0
    %32 = vsyncpa [#allocation4], 0
    %s33 = scalar_lea.sflag [#allocation4], 1
    %34 = vsyncpa %s33, 0
    loop: start=0, step=1, limit=4
    $region2: #{tpu_custom_call.1} parent=1 // loop_pre_header
      _
    $region3: #{tpu_custom_call.1} parent=1 // loop_header
      %s36 = sphi 0, %s40
      %p37 = scmp.ge.s32.totalorder %s36, 4
      %s46 = sphi 0, %s48
      %s49 = sphi 0, %s46
      %s50 = sphi 0, %s49
      %s66 = sphi 0, %s50
      %s72 = sphi 0, %s74
      %s75 = sphi 0, %s72
      %s76 = sphi 0, %s75
      %s92 = sphi 0, %s76
      %s98 = sphi 0, %s100
      %s101 = sphi 0, %s98
      %s102 = sphi 0, %s101
      %s118 = sphi 0, %s102
      %s122 = sphi 0, %s122
      %s124 = sphi 0, %s122
      %s125 = sphi 0, %s124
      %s139 = sphi 0, %s125
      %s143 = sphi 0, %s143
      %s145 = sphi 0, %s143
      %s146 = sphi 0, %s145
      %s160 = sphi 0, %s146
      %s164 = sphi 0, %s164
      %s166 = sphi 0, %s164
      %s167 = sphi 0, %s166
      %s181 = sphi 0, %s167
      %s185 = sphi 0, %s185
      %s187 = sphi 0, %s185
      %s188 = sphi 0, %s187
      %s202 = sphi 0, %s188
      %s206 = sphi 0, %s206
      %s208 = sphi 0, %s206
      %s209 = sphi 0, %s208
      %s223 = sphi 0, %s209
      %s227 = sphi 0, %s227
      %s229 = sphi 0, %s227
      %s230 = sphi 0, %s229
      %s244 = sphi 0, %s230
      %s248 = sphi 0, %s248
      %s250 = sphi 0, %s248
      %s251 = sphi 0, %s250
      %s265 = sphi 0, %s251
      %s269 = sphi 0, %s269
      %s271 = sphi 0, %s269
      %s272 = sphi 0, %s271
      %s286 = sphi 0, %s272
      %s290 = sphi 0, %s290
      %s292 = sphi 0, %s290
      %s293 = sphi 0, %s292
      %s307 = sphi 0, %s293
      %s311 = sphi 0, %s311
      %s313 = sphi 0, %s311
      %s314 = sphi 0, %s313
      %s328 = sphi 0, %s314
      %s332 = sphi 0, %s332
      %s334 = sphi 0, %s332
      %s335 = sphi 0, %s334
      %s349 = sphi 0, %s335
      %s353 = sphi 0, %s353
      %s355 = sphi 0, %s353
      %s356 = sphi 0, %s355
      %s370 = sphi 0, %s356
      %s374 = sphi 0, %s374
      %s376 = sphi 0, %s374
      %s377 = sphi 0, %s376
      %s391 = sphi 0, %s377
      %s395 = sphi 0, %s395
      %s397 = sphi 0, %s395
      %s398 = sphi 0, %s397
      %s412 = sphi 0, %s398
      %s416 = sphi 0, %s416
      %s418 = sphi 0, %s416
      %s419 = sphi 0, %s418
      %s433 = sphi 0, %s419
      %s437 = sphi 0, %s437
      %s439 = sphi 0, %s437
      %s440 = sphi 0, %s439
      %s454 = sphi 0, %s440
      %s460 = sphi 0, %s462
      %s463 = sphi 0, %s460
      %s464 = sphi 0, %s463
      %s480 = sphi 0, %s464
    $region4: #{tpu_custom_call.1} parent=1 // loop_header_branch
      %39 = sbr.rel (%p37) target = $region8
    $region5: #{tpu_custom_call.1} parent=1 // loop_body
      %s41 = ssub.s32 %s36, 1
      %s42 = ssub.s32 %s36, 2
      %s43 = sadd.s32 %s36, 1
      %s44 = ssub.s32 %s36, %s43
      %p45 = scmp.eq.s32.totalorder %s44, 0
      %s47 = sadd.s32 %s46, 1
      %s48 = scalar_select %p45, %s46, %s47
      %p51 = pneg %p45
      %p52 = scmp.eq.s32.totalorder %s36, 1
      %p53 = por %p51, %p52
      %p54 = scmp.ne.s32.totalorder %s46, %s49
      %p55 = scmp.eq.s32.totalorder %s36, 0
      %p56 = por %p54, %p55
      %p57 = scmp.ne.s32.totalorder %s46, %s49
      %p58 = scmp.eq.s32.totalorder %s41, 1
      %p59 = por %p57, %p58
      %p60 = scmp.ne.s32.totalorder %s49, %s50
      %p61 = scmp.eq.s32.totalorder %s41, 0
      %p62 = por %p60, %p61
      %p63 = scmp.ne.s32.totalorder %s49, %s50
      %p64 = scmp.eq.s32.totalorder %s42, 1
      %p65 = por %p63, %p64
      %p67 = scmp.ne.s32.totalorder %s50, %s66
      %p68 = scmp.eq.s32.totalorder %s42, 0
      %p69 = por %p67, %p68
      %s70 = ssub.s32 %s36, %s43
      %p71 = scmp.eq.s32.totalorder %s70, 0
      %s73 = sadd.s32 %s72, 1
      %s74 = scalar_select %p71, %s72, %s73
      %p77 = pneg %p71
      %p78 = scmp.eq.s32.totalorder %s36, 1
      %p79 = por %p77, %p78
      %p80 = scmp.ne.s32.totalorder %s72, %s75
      %p81 = scmp.eq.s32.totalorder %s36, 0
      %p82 = por %p80, %p81
      %p83 = scmp.ne.s32.totalorder %s72, %s75
      %p84 = scmp.eq.s32.totalorder %s41, 1
      %p85 = por %p83, %p84
      %p86 = scmp.ne.s32.totalorder %s75, %s76
      %p87 = scmp.eq.s32.totalorder %s41, 0
      %p88 = por %p86, %p87
      %p89 = scmp.ne.s32.totalorder %s75, %s76
      %p90 = scmp.eq.s32.totalorder %s42, 1
      %p91 = por %p89, %p90
      %p93 = scmp.ne.s32.totalorder %s76, %s92
      %p94 = scmp.eq.s32.totalorder %s42, 0
      %p95 = por %p93, %p94
      %s96 = ssub.s32 %s36, %s43
      %p97 = scmp.eq.s32.totalorder %s96, 0
      %s99 = sadd.s32 %s98, 1
      %s100 = scalar_select %p97, %s98, %s99
      %p103 = pneg %p97
      %p104 = scmp.eq.s32.totalorder %s36, 1
      %p105 = por %p103, %p104
      %p106 = scmp.ne.s32.totalorder %s98, %s101
      %p107 = scmp.eq.s32.totalorder %s36, 0
      %p108 = por %p106, %p107
      %p109 = scmp.ne.s32.totalorder %s98, %s101
      %p110 = scmp.eq.s32.totalorder %s41, 1
      %p111 = por %p109, %p110
      %p112 = scmp.ne.s32.totalorder %s101, %s102
      %p113 = scmp.eq.s32.totalorder %s41, 0
      %p114 = por %p112, %p113
      %p115 = scmp.ne.s32.totalorder %s101, %s102
      %p116 = scmp.eq.s32.totalorder %s42, 1
      %p117 = por %p115, %p116
      %p119 = scmp.ne.s32.totalorder %s102, %s118
      %p120 = scmp.eq.s32.totalorder %s42, 0
      %p121 = por %p119, %p120
      %s123 = sadd.s32 %s122, 1
      %p126 = scmp.eq.s32.totalorder %s36, 1
      %p127 = scmp.ne.s32.totalorder %s122, %s124
      %p128 = scmp.eq.s32.totalorder %s36, 0
      %p129 = por %p127, %p128
      %p130 = scmp.ne.s32.totalorder %s122, %s124
      %p131 = scmp.eq.s32.totalorder %s41, 1
      %p132 = por %p130, %p131
      %p133 = scmp.ne.s32.totalorder %s124, %s125
      %p134 = scmp.eq.s32.totalorder %s41, 0
      %p135 = por %p133, %p134
      %p136 = scmp.ne.s32.totalorder %s124, %s125
      %p137 = scmp.eq.s32.totalorder %s42, 1
      %p138 = por %p136, %p137
      %p140 = scmp.ne.s32.totalorder %s125, %s139
      %p141 = scmp.eq.s32.totalorder %s42, 0
      %p142 = por %p140, %p141
      %s144 = sadd.s32 %s143, 1
      %p147 = scmp.eq.s32.totalorder %s36, 1
      %p148 = scmp.ne.s32.totalorder %s143, %s145
      %p149 = scmp.eq.s32.totalorder %s36, 0
      %p150 = por %p148, %p149
      %p151 = scmp.ne.s32.totalorder %s143, %s145
      %p152 = scmp.eq.s32.totalorder %s41, 1
      %p153 = por %p151, %p152
      %p154 = scmp.ne.s32.totalorder %s145, %s146
      %p155 = scmp.eq.s32.totalorder %s41, 0
      %p156 = por %p154, %p155
      %p157 = scmp.ne.s32.totalorder %s145, %s146
      %p158 = scmp.eq.s32.totalorder %s42, 1
      %p159 = por %p157, %p158
      %p161 = scmp.ne.s32.totalorder %s146, %s160
      %p162 = scmp.eq.s32.totalorder %s42, 0
      %p163 = por %p161, %p162
      %s165 = sadd.s32 %s164, 1
      %p168 = scmp.eq.s32.totalorder %s36, 1
      %p169 = scmp.ne.s32.totalorder %s164, %s166
      %p170 = scmp.eq.s32.totalorder %s36, 0
      %p171 = por %p169, %p170
      %p172 = scmp.ne.s32.totalorder %s164, %s166
      %p173 = scmp.eq.s32.totalorder %s41, 1
      %p174 = por %p172, %p173
      %p175 = scmp.ne.s32.totalorder %s166, %s167
      %p176 = scmp.eq.s32.totalorder %s41, 0
      %p177 = por %p175, %p176
      %p178 = scmp.ne.s32.totalorder %s166, %s167
      %p179 = scmp.eq.s32.totalorder %s42, 1
      %p180 = por %p178, %p179
      %p182 = scmp.ne.s32.totalorder %s167, %s181
      %p183 = scmp.eq.s32.totalorder %s42, 0
      %p184 = por %p182, %p183
      %s186 = sadd.s32 %s185, 1
      %p189 = scmp.eq.s32.totalorder %s36, 1
      %p190 = scmp.ne.s32.totalorder %s185, %s187
      %p191 = scmp.eq.s32.totalorder %s36, 0
      %p192 = por %p190, %p191
      %p193 = scmp.ne.s32.totalorder %s185, %s187
      %p194 = scmp.eq.s32.totalorder %s41, 1
      %p195 = por %p193, %p194
      %p196 = scmp.ne.s32.totalorder %s187, %s188
      %p197 = scmp.eq.s32.totalorder %s41, 0
      %p198 = por %p196, %p197
      %p199 = scmp.ne.s32.totalorder %s187, %s188
      %p200 = scmp.eq.s32.totalorder %s42, 1
      %p201 = por %p199, %p200
      %p203 = scmp.ne.s32.totalorder %s188, %s202
      %p204 = scmp.eq.s32.totalorder %s42, 0
      %p205 = por %p203, %p204
      %s207 = sadd.s32 %s206, 1
      %p210 = scmp.eq.s32.totalorder %s36, 1
      %p211 = scmp.ne.s32.totalorder %s206, %s208
      %p212 = scmp.eq.s32.totalorder %s36, 0
      %p213 = por %p211, %p212
      %p214 = scmp.ne.s32.totalorder %s206, %s208
      %p215 = scmp.eq.s32.totalorder %s41, 1
      %p216 = por %p214, %p215
      %p217 = scmp.ne.s32.totalorder %s208, %s209
      %p218 = scmp.eq.s32.totalorder %s41, 0
      %p219 = por %p217, %p218
      %p220 = scmp.ne.s32.totalorder %s208, %s209
      %p221 = scmp.eq.s32.totalorder %s42, 1
      %p222 = por %p220, %p221
      %p224 = scmp.ne.s32.totalorder %s209, %s223
      %p225 = scmp.eq.s32.totalorder %s42, 0
      %p226 = por %p224, %p225
      %s228 = sadd.s32 %s227, 1
      %p231 = scmp.eq.s32.totalorder %s36, 1
      %p232 = scmp.ne.s32.totalorder %s227, %s229
      %p233 = scmp.eq.s32.totalorder %s36, 0
      %p234 = por %p232, %p233
      %p235 = scmp.ne.s32.totalorder %s227, %s229
      %p236 = scmp.eq.s32.totalorder %s41, 1
      %p237 = por %p235, %p236
      %p238 = scmp.ne.s32.totalorder %s229, %s230
      %p239 = scmp.eq.s32.totalorder %s41, 0
      %p240 = por %p238, %p239
      %p241 = scmp.ne.s32.totalorder %s229, %s230
      %p242 = scmp.eq.s32.totalorder %s42, 1
      %p243 = por %p241, %p242
      %p245 = scmp.ne.s32.totalorder %s230, %s244
      %p246 = scmp.eq.s32.totalorder %s42, 0
      %p247 = por %p245, %p246
      %s249 = sadd.s32 %s248, 1
      %p252 = scmp.eq.s32.totalorder %s36, 1
      %p253 = scmp.ne.s32.totalorder %s248, %s250
      %p254 = scmp.eq.s32.totalorder %s36, 0
      %p255 = por %p253, %p254
      %p256 = scmp.ne.s32.totalorder %s248, %s250
      %p257 = scmp.eq.s32.totalorder %s41, 1
      %p258 = por %p256, %p257
      %p259 = scmp.ne.s32.totalorder %s250, %s251
      %p260 = scmp.eq.s32.totalorder %s41, 0
      %p261 = por %p259, %p260
      %p262 = scmp.ne.s32.totalorder %s250, %s251
      %p263 = scmp.eq.s32.totalorder %s42, 1
      %p264 = por %p262, %p263
      %p266 = scmp.ne.s32.totalorder %s251, %s265
      %p267 = scmp.eq.s32.totalorder %s42, 0
      %p268 = por %p266, %p267
      %s270 = sadd.s32 %s269, 1
      %p273 = scmp.eq.s32.totalorder %s36, 1
      %p274 = scmp.ne.s32.totalorder %s269, %s271
      %p275 = scmp.eq.s32.totalorder %s36, 0
      %p276 = por %p274, %p275
      %p277 = scmp.ne.s32.totalorder %s269, %s271
      %p278 = scmp.eq.s32.totalorder %s41, 1
      %p279 = por %p277, %p278
      %p280 = scmp.ne.s32.totalorder %s271, %s272
      %p281 = scmp.eq.s32.totalorder %s41, 0
      %p282 = por %p280, %p281
      %p283 = scmp.ne.s32.totalorder %s271, %s272
      %p284 = scmp.eq.s32.totalorder %s42, 1
      %p285 = por %p283, %p284
      %p287 = scmp.ne.s32.totalorder %s272, %s286
      %p288 = scmp.eq.s32.totalorder %s42, 0
      %p289 = por %p287, %p288
      %s291 = sadd.s32 %s290, 1
      %p294 = scmp.eq.s32.totalorder %s36, 1
      %p295 = scmp.ne.s32.totalorder %s290, %s292
      %p296 = scmp.eq.s32.totalorder %s36, 0
      %p297 = por %p295, %p296
      %p298 = scmp.ne.s32.totalorder %s290, %s292
      %p299 = scmp.eq.s32.totalorder %s41, 1
      %p300 = por %p298, %p299
      %p301 = scmp.ne.s32.totalorder %s292, %s293
      %p302 = scmp.eq.s32.totalorder %s41, 0
      %p303 = por %p301, %p302
      %p304 = scmp.ne.s32.totalorder %s292, %s293
      %p305 = scmp.eq.s32.totalorder %s42, 1
      %p306 = por %p304, %p305
      %p308 = scmp.ne.s32.totalorder %s293, %s307
      %p309 = scmp.eq.s32.totalorder %s42, 0
      %p310 = por %p308, %p309
      %s312 = sadd.s32 %s311, 1
      %p315 = scmp.eq.s32.totalorder %s36, 1
      %p316 = scmp.ne.s32.totalorder %s311, %s313
      %p317 = scmp.eq.s32.totalorder %s36, 0
      %p318 = por %p316, %p317
      %p319 = scmp.ne.s32.totalorder %s311, %s313
      %p320 = scmp.eq.s32.totalorder %s41, 1
      %p321 = por %p319, %p320
      %p322 = scmp.ne.s32.totalorder %s313, %s314
      %p323 = scmp.eq.s32.totalorder %s41, 0
      %p324 = por %p322, %p323
      %p325 = scmp.ne.s32.totalorder %s313, %s314
      %p326 = scmp.eq.s32.totalorder %s42, 1
      %p327 = por %p325, %p326
      %p329 = scmp.ne.s32.totalorder %s314, %s328
      %p330 = scmp.eq.s32.totalorder %s42, 0
      %p331 = por %p329, %p330
      %s333 = sadd.s32 %s332, 1
      %p336 = scmp.eq.s32.totalorder %s36, 1
      %p337 = scmp.ne.s32.totalorder %s332, %s334
      %p338 = scmp.eq.s32.totalorder %s36, 0
      %p339 = por %p337, %p338
      %p340 = scmp.ne.s32.totalorder %s332, %s334
      %p341 = scmp.eq.s32.totalorder %s41, 1
      %p342 = por %p340, %p341
      %p343 = scmp.ne.s32.totalorder %s334, %s335
      %p344 = scmp.eq.s32.totalorder %s41, 0
      %p345 = por %p343, %p344
      %p346 = scmp.ne.s32.totalorder %s334, %s335
      %p347 = scmp.eq.s32.totalorder %s42, 1
      %p348 = por %p346, %p347
      %p350 = scmp.ne.s32.totalorder %s335, %s349
      %p351 = scmp.eq.s32.totalorder %s42, 0
      %p352 = por %p350, %p351
      %s354 = sadd.s32 %s353, 1
      %p357 = scmp.eq.s32.totalorder %s36, 1
      %p358 = scmp.ne.s32.totalorder %s353, %s355
      %p359 = scmp.eq.s32.totalorder %s36, 0
      %p360 = por %p358, %p359
      %p361 = scmp.ne.s32.totalorder %s353, %s355
      %p362 = scmp.eq.s32.totalorder %s41, 1
      %p363 = por %p361, %p362
      %p364 = scmp.ne.s32.totalorder %s355, %s356
      %p365 = scmp.eq.s32.totalorder %s41, 0
      %p366 = por %p364, %p365
      %p367 = scmp.ne.s32.totalorder %s355, %s356
      %p368 = scmp.eq.s32.totalorder %s42, 1
      %p369 = por %p367, %p368
      %p371 = scmp.ne.s32.totalorder %s356, %s370
      %p372 = scmp.eq.s32.totalorder %s42, 0
      %p373 = por %p371, %p372
      %s375 = sadd.s32 %s374, 1
      %p378 = scmp.eq.s32.totalorder %s36, 1
      %p379 = scmp.ne.s32.totalorder %s374, %s376
      %p380 = scmp.eq.s32.totalorder %s36, 0
      %p381 = por %p379, %p380
      %p382 = scmp.ne.s32.totalorder %s374, %s376
      %p383 = scmp.eq.s32.totalorder %s41, 1
      %p384 = por %p382, %p383
      %p385 = scmp.ne.s32.totalorder %s376, %s377
      %p386 = scmp.eq.s32.totalorder %s41, 0
      %p387 = por %p385, %p386
      %p388 = scmp.ne.s32.totalorder %s376, %s377
      %p389 = scmp.eq.s32.totalorder %s42, 1
      %p390 = por %p388, %p389
      %p392 = scmp.ne.s32.totalorder %s377, %s391
      %p393 = scmp.eq.s32.totalorder %s42, 0
      %p394 = por %p392, %p393
      %s396 = sadd.s32 %s395, 1
      %p399 = scmp.eq.s32.totalorder %s36, 1
      %p400 = scmp.ne.s32.totalorder %s395, %s397
      %p401 = scmp.eq.s32.totalorder %s36, 0
      %p402 = por %p400, %p401
      %p403 = scmp.ne.s32.totalorder %s395, %s397
      %p404 = scmp.eq.s32.totalorder %s41, 1
      %p405 = por %p403, %p404
      %p406 = scmp.ne.s32.totalorder %s397, %s398
      %p407 = scmp.eq.s32.totalorder %s41, 0
      %p408 = por %p406, %p407
      %p409 = scmp.ne.s32.totalorder %s397, %s398
      %p410 = scmp.eq.s32.totalorder %s42, 1
      %p411 = por %p409, %p410
      %p413 = scmp.ne.s32.totalorder %s398, %s412
      %p414 = scmp.eq.s32.totalorder %s42, 0
      %p415 = por %p413, %p414
      %s417 = sadd.s32 %s416, 1
      %p420 = scmp.eq.s32.totalorder %s36, 1
      %p421 = scmp.ne.s32.totalorder %s416, %s418
      %p422 = scmp.eq.s32.totalorder %s36, 0
      %p423 = por %p421, %p422
      %p424 = scmp.ne.s32.totalorder %s416, %s418
      %p425 = scmp.eq.s32.totalorder %s41, 1
      %p426 = por %p424, %p425
      %p427 = scmp.ne.s32.totalorder %s418, %s419
      %p428 = scmp.eq.s32.totalorder %s41, 0
      %p429 = por %p427, %p428
      %p430 = scmp.ne.s32.totalorder %s418, %s419
      %p431 = scmp.eq.s32.totalorder %s42, 1
      %p432 = por %p430, %p431
      %p434 = scmp.ne.s32.totalorder %s419, %s433
      %p435 = scmp.eq.s32.totalorder %s42, 0
      %p436 = por %p434, %p435
      %s438 = sadd.s32 %s437, 1
      %p441 = scmp.eq.s32.totalorder %s36, 1
      %p442 = scmp.ne.s32.totalorder %s437, %s439
      %p443 = scmp.eq.s32.totalorder %s36, 0
      %p444 = por %p442, %p443
      %p445 = scmp.ne.s32.totalorder %s437, %s439
      %p446 = scmp.eq.s32.totalorder %s41, 1
      %p447 = por %p445, %p446
      %p448 = scmp.ne.s32.totalorder %s439, %s440
      %p449 = scmp.eq.s32.totalorder %s41, 0
      %p450 = por %p448, %p449
      %p451 = scmp.ne.s32.totalorder %s439, %s440
      %p452 = scmp.eq.s32.totalorder %s42, 1
      %p453 = por %p451, %p452
      %p455 = scmp.ne.s32.totalorder %s440, %s454
      %p456 = scmp.eq.s32.totalorder %s42, 0
      %p457 = por %p455, %p456
      %s458 = ssub.s32 %s36, %s43
      %p459 = scmp.eq.s32.totalorder %s458, 0
      %s461 = sadd.s32 %s460, 1
      %s462 = scalar_select %p459, %s460, %s461
      %p465 = pneg %p459
      %p466 = scmp.eq.s32.totalorder %s36, 1
      %p467 = por %p465, %p466
      %p468 = scmp.ne.s32.totalorder %s460, %s463
      %p469 = scmp.eq.s32.totalorder %s36, 0
      %p470 = por %p468, %p469
      %p471 = scmp.ne.s32.totalorder %s460, %s463
      %p472 = scmp.eq.s32.totalorder %s41, 1
      %p473 = por %p471, %p472
      %p474 = scmp.ne.s32.totalorder %s463, %s464
      %p475 = scmp.eq.s32.totalorder %s41, 0
      %p476 = por %p474, %p475
      %p477 = scmp.ne.s32.totalorder %s463, %s464
      %p478 = scmp.eq.s32.totalorder %s42, 1
      %p479 = por %p477, %p478
      %p481 = scmp.ne.s32.totalorder %s464, %s480
      %p482 = scmp.eq.s32.totalorder %s42, 0
      %p483 = por %p481, %p482
      %p484 = scmp.le.s32.totalorder 1, %s36
      %p485 = scmp.lt.s32.totalorder %s36, 3
      %p486 = pnand %p484, %p485
      %p487 = pneg %p486
      // Predicated region
      $region9: #{tpu_custom_call.1} parent=5 // pred_check
        _
      $region10: #{tpu_custom_call.1} parent=5 // pred_check_branch
        %489 = sbr.rel (%p486) target = $region12
      $region11: #{tpu_custom_call.1} parent=5 // pred_region
        %s490 = ssub.s32 %s36, 1
        // Predicated region
        $region13: #{tpu_custom_call.1} parent=11 // pred_check
          %p491 = pneg %p135
        $region14: #{tpu_custom_call.1} parent=11 // pred_check_branch
          %493 = sbr.rel (%p491) target = $region16
        $region15: #{tpu_custom_call.1} parent=11 // pred_region
          _
        $region16: #{tpu_custom_call.1} parent=11 // pred_fallthru
          _
        // Predicated region
        $region17: #{tpu_custom_call.1} parent=11 // pred_check
          %p494 = pneg %p156
        $region18: #{tpu_custom_call.1} parent=11 // pred_check_branch
          %496 = sbr.rel (%p494) target = $region20
        $region19: #{tpu_custom_call.1} parent=11 // pred_region
          _
        $region20: #{tpu_custom_call.1} parent=11 // pred_fallthru
          _
        // Predicated region
        $region21: #{tpu_custom_call.1} parent=11 // pred_check
          %p497 = pneg %p177
        $region22: #{tpu_custom_call.1} parent=11 // pred_check_branch
          %499 = sbr.rel (%p497) target = $region24
        $region23: #{tpu_custom_call.1} parent=11 // pred_region
          _
        $region24: #{tpu_custom_call.1} parent=11 // pred_fallthru
          _
        // Predicated region
        $region25: #{tpu_custom_call.1} parent=11 // pred_check
          %p500 = pneg %p198
        $region26: #{tpu_custom_call.1} parent=11 // pred_check_branch
          %502 = sbr.rel (%p500) target = $region28
        $region27: #{tpu_custom_call.1} parent=11 // pred_region
          _
        $region28: #{tpu_custom_call.1} parent=11 // pred_fallthru
          _
        // Predicated region
        $region29: #{tpu_custom_call.1} parent=11 // pred_check
          %p503 = pneg %p219
        $region30: #{tpu_custom_call.1} parent=11 // pred_check_branch
          %505 = sbr.rel (%p503) target = $region32
        $region31: #{tpu_custom_call.1} parent=11 // pred_region
          _
        $region32: #{tpu_custom_call.1} parent=11 // pred_fallthru
          _
        // Predicated region
        $region33: #{tpu_custom_call.1} parent=11 // pred_check
          %p506 = pneg %p240
        $region34: #{tpu_custom_call.1} parent=11 // pred_check_branch
          %508 = sbr.rel (%p506) target = $region36
        $region35: #{tpu_custom_call.1} parent=11 // pred_region
          _
        $region36: #{tpu_custom_call.1} parent=11 // pred_fallthru
          _
        // Predicated region
        $region37: #{tpu_custom_call.1} parent=11 // pred_check
          %p509 = pneg %p261
        $region38: #{tpu_custom_call.1} parent=11 // pred_check_branch
          %511 = sbr.rel (%p509) target = $region40
        $region39: #{tpu_custom_call.1} parent=11 // pred_region
          %s513 = ssub.s32 1024, 1024
          %514 = vsyncadd [#allocation6], %s513
          %s515 = sshll.u32 [#allocation7], 4
          %s516 = int_to_ptr.vmem [resolvable:$true] %s515
          %521 = dma.hbm_to_vmem [thread:$0]  %s9, 1024, %s516, [#allocation6], 64, 64, 4
        $region40: #{tpu_custom_call.1} parent=11 // pred_fallthru
          _
        // Predicated region
        $region41: #{tpu_custom_call.1} parent=11 // pred_check
          %p522 = pneg %p282
        $region42: #{tpu_custom_call.1} parent=11 // pred_check_branch
          %524 = sbr.rel (%p522) target = $region44
        $region43: #{tpu_custom_call.1} parent=11 // pred_region
          _
        $region44: #{tpu_custom_call.1} parent=11 // pred_fallthru
          _
        // Predicated region
        $region45: #{tpu_custom_call.1} parent=11 // pred_check
          %p525 = pneg %p303
        $region46: #{tpu_custom_call.1} parent=11 // pred_check_branch
          %527 = sbr.rel (%p525) target = $region48
        $region47: #{tpu_custom_call.1} parent=11 // pred_region
          %s529 = ssub.s32 2048, 2048
          %530 = vsyncadd [#allocation9], %s529
          %s531 = sshll.u32 [#allocation8], 4
          %s532 = int_to_ptr.vmem [resolvable:$true] %s531
          %537 = dma.hbm_to_vmem [thread:$0]  %s11, 2048, %s532, [#allocation9], 128, 128, 8
        $region48: #{tpu_custom_call.1} parent=11 // pred_fallthru
          _
        // Predicated region
        $region49: #{tpu_custom_call.1} parent=11 // pred_check
          %p538 = pneg %p324
        $region50: #{tpu_custom_call.1} parent=11 // pred_check_branch
          %540 = sbr.rel (%p538) target = $region52
        $region51: #{tpu_custom_call.1} parent=11 // pred_region
          _
        $region52: #{tpu_custom_call.1} parent=11 // pred_fallthru
          _
        // Predicated region
        $region53: #{tpu_custom_call.1} parent=11 // pred_check
          %p541 = pneg %p345
        $region54: #{tpu_custom_call.1} parent=11 // pred_check_branch
          %543 = sbr.rel (%p541) target = $region56
        $region55: #{tpu_custom_call.1} parent=11 // pred_region
          %s545 = ssub.s32 1024, 1024
          %546 = vsyncadd [#allocation9], %s545
          %s547 = sshll.u32 [#allocation10], 4
          %s548 = int_to_ptr.vmem [resolvable:$true] %s547
          %553 = dma.hbm_to_vmem [thread:$0]  %s13, 1024, %s548, [#allocation9], 64, 64, 4
        $region56: #{tpu_custom_call.1} parent=11 // pred_fallthru
          _
        // Predicated region
        $region57: #{tpu_custom_call.1} parent=11 // pred_check
          %p554 = pneg %p366
        $region58: #{tpu_custom_call.1} parent=11 // pred_check_branch
          %556 = sbr.rel (%p554) target = $region60
        $region59: #{tpu_custom_call.1} parent=11 // pred_region
          _
        $region60: #{tpu_custom_call.1} parent=11 // pred_fallthru
          _
        // Predicated region
        $region61: #{tpu_custom_call.1} parent=11 // pred_check
          %p557 = pneg %p387
        $region62: #{tpu_custom_call.1} parent=11 // pred_check_branch
          %559 = sbr.rel (%p557) target = $region64
        $region63: #{tpu_custom_call.1} parent=11 // pred_region
          %s561 = ssub.s32 4096, 4096
          %562 = vsyncadd [#allocation12], %s561
          %s563 = sshll.u32 [#allocation11], 4
          %s564 = int_to_ptr.vmem [resolvable:$true] %s563
          %569 = dma.hbm_to_vmem [thread:$0]  %s15, 4096, %s564, [#allocation12], 256, 256, 16
        $region64: #{tpu_custom_call.1} parent=11 // pred_fallthru
          _
        // Predicated region
        $region65: #{tpu_custom_call.1} parent=11 // pred_check
          %p570 = pneg %p408
        $region66: #{tpu_custom_call.1} parent=11 // pred_check_branch
          %572 = sbr.rel (%p570) target = $region68
        $region67: #{tpu_custom_call.1} parent=11 // pred_region
          _
        $region68: #{tpu_custom_call.1} parent=11 // pred_fallthru
          _
        // Predicated region
        $region69: #{tpu_custom_call.1} parent=11 // pred_check
          %p573 = pneg %p429
        $region70: #{tpu_custom_call.1} parent=11 // pred_check_branch
          %575 = sbr.rel (%p573) target = $region72
        $region71: #{tpu_custom_call.1} parent=11 // pred_region
          %s577 = ssub.s32 4096, 4096
          %578 = vsyncadd [#allocation12], %s577
          %s579 = sshll.u32 [#allocation13], 4
          %s580 = int_to_ptr.vmem [resolvable:$true] %s579
          %585 = dma.hbm_to_vmem [thread:$0]  %s17, 4096, %s580, [#allocation12], 64, 64, 4
        $region72: #{tpu_custom_call.1} parent=11 // pred_fallthru
          _
        // Predicated region
        $region73: #{tpu_custom_call.1} parent=11 // pred_check
          %p586 = pneg %p450
        $region74: #{tpu_custom_call.1} parent=11 // pred_check_branch
          %588 = sbr.rel (%p586) target = $region76
        $region75: #{tpu_custom_call.1} parent=11 // pred_region
          _
        $region76: #{tpu_custom_call.1} parent=11 // pred_fallthru
          _
      $region12: #{tpu_custom_call.1} parent=5 // pred_fallthru
        _
      %p589 = scmp.lt.s32.totalorder %s36, 2
      // Predicated region
      $region77: #{tpu_custom_call.1} parent=5 // pred_check
        %p590 = pneg %p589
      $region78: #{tpu_custom_call.1} parent=5 // pred_check_branch
        %592 = sbr.rel (%p590) target = $region80
      $region79: #{tpu_custom_call.1} parent=5 // pred_region
        // Predicated region
        $region81: #{tpu_custom_call.1} parent=79 // pred_check
          %p593 = pneg %p56
        $region82: #{tpu_custom_call.1} parent=79 // pred_check_branch
          %595 = sbr.rel (%p593) target = $region84
        $region83: #{tpu_custom_call.1} parent=79 // pred_region
          %s596 = sand.u32 %s46, 1
          %s597 = scalar_lea.sflag [#allocation3], %s596
          %s598 = sand.u32 %s46, 1
          %s599 = smul.addr %s598, 4
          %s600 = scalar_lea.vmem [#allocation2], %s599
          %s602 = ssub.s32 64, 64
          %603 = vsyncadd %s597, %s602
          %s604 = smul.addr %s36, 64
          %s605 = scalar_lea.hbm %s0, %s604
          %s607 = sshll.u32 %s600, 4
          %s608 = int_to_ptr.vmem [resolvable:$true] %s607
          %610 = dma.hbm_to_vmem [thread:$0]  %s605, 64, %s608, %s597
        $region84: #{tpu_custom_call.1} parent=79 // pred_fallthru
          _
        // Predicated region
        $region85: #{tpu_custom_call.1} parent=79 // pred_check
          %p611 = pneg %p82
        $region86: #{tpu_custom_call.1} parent=79 // pred_check_branch
          %613 = sbr.rel (%p611) target = $region88
        $region87: #{tpu_custom_call.1} parent=79 // pred_region
          %s614 = sand.u32 %s36, 1
          %s615 = scalar_lea.sflag [#allocation6], %s614
          %s616 = sand.u32 %s72, 1
          %s617 = smul.addr %s616, 8
          %s618 = scalar_lea.vmem [#allocation5], %s617
          %s620 = ssub.s32 128, 128
          %621 = vsyncadd %s615, %s620
          %s622 = smul.addr %s36, 128
          %s623 = scalar_lea.hbm %s1, %s622
          %s625 = sshll.u32 %s618, 4
          %s626 = int_to_ptr.vmem [resolvable:$true] %s625
          %628 = dma.hbm_to_vmem [thread:$0]  %s623, 128, %s626, %s615
        $region88: #{tpu_custom_call.1} parent=79 // pred_fallthru
          _
        // Predicated region
        $region89: #{tpu_custom_call.1} parent=79 // pred_check
          %p629 = pneg %p108
        $region90: #{tpu_custom_call.1} parent=79 // pred_check_branch
          %631 = sbr.rel (%p629) target = $region92
        $region91: #{tpu_custom_call.1} parent=79 // pred_region
          %p632 = scmp.lt.s32.totalorder %s36, 1
          %s633 = scalar_select %p632, %s36, 1
          %s634 = scalar_lea.vmem %s2, %s633
        $region92: #{tpu_custom_call.1} parent=79 // pred_fallthru
          _
      $region80: #{tpu_custom_call.1} parent=5 // pred_fallthru
        _
      %p635 = scmp.le.s32.totalorder 1, %s36
      %p636 = scmp.lt.s32.totalorder %s36, 3
      %p637 = pnand %p635, %p636
      %p638 = pneg %p637
      // Predicated region
      $region93: #{tpu_custom_call.1} parent=5 // pred_check
        _
      $region94: #{tpu_custom_call.1} parent=5 // pred_check_branch
        %640 = sbr.rel (%p637) target = $region96
      $region95: #{tpu_custom_call.1} parent=5 // pred_region
        %s641 = ssub.s32 %s36, 1
        %s642 = sand.u32 %s49, 1
        %s643 = scalar_lea.sflag [#allocation3], %s642
        %s644 = sand.u32 %s49, 1
        %s645 = smul.addr %s644, 4
        %s646 = scalar_lea.vmem [#allocation2], %s645
        // Predicated region
        $region97: #{tpu_custom_call.1} parent=95 // pred_check
          %p647 = pneg %p62
        $region98: #{tpu_custom_call.1} parent=95 // pred_check_branch
          %649 = sbr.rel (%p647) target = $region100
        $region99: #{tpu_custom_call.1} parent=95 // pred_region
          %650 = dma.done %s643, 64
        $region100: #{tpu_custom_call.1} parent=95 // pred_fallthru
          _
        %s651 = sand.u32 %s41, 1
        %s652 = scalar_lea.sflag [#allocation6], %s651
        %s653 = sand.u32 %s75, 1
        %s654 = smul.addr %s653, 8
        %s655 = scalar_lea.vmem [#allocation5], %s654
        // Predicated region
        $region101: #{tpu_custom_call.1} parent=95 // pred_check
          %p656 = pneg %p88
        $region102: #{tpu_custom_call.1} parent=95 // pred_check_branch
          %658 = sbr.rel (%p656) target = $region104
        $region103: #{tpu_custom_call.1} parent=95 // pred_region
          %659 = dma.done %s652, 128
        $region104: #{tpu_custom_call.1} parent=95 // pred_fallthru
          _
        // Predicated region
        $region105: #{tpu_custom_call.1} parent=95 // pred_check
          %p660 = pneg %p261
        $region106: #{tpu_custom_call.1} parent=95 // pred_check_branch
          %662 = sbr.rel (%p660) target = $region108
        $region107: #{tpu_custom_call.1} parent=95 // pred_region
          %663 = dma.done [#allocation6], 1024
        $region108: #{tpu_custom_call.1} parent=95 // pred_fallthru
          _
        // Predicated region
        $region109: #{tpu_custom_call.1} parent=95 // pred_check
          %p664 = pneg %p303
        $region110: #{tpu_custom_call.1} parent=95 // pred_check_branch
          %666 = sbr.rel (%p664) target = $region112
        $region111: #{tpu_custom_call.1} parent=95 // pred_region
          %667 = dma.done [#allocation9], 2048
        $region112: #{tpu_custom_call.1} parent=95 // pred_fallthru
          _
        // Predicated region
        $region113: #{tpu_custom_call.1} parent=95 // pred_check
          %p668 = pneg %p345
        $region114: #{tpu_custom_call.1} parent=95 // pred_check_branch
          %670 = sbr.rel (%p668) target = $region116
        $region115: #{tpu_custom_call.1} parent=95 // pred_region
          %671 = dma.done [#allocation9], 1024
        $region116: #{tpu_custom_call.1} parent=95 // pred_fallthru
          _
        // Predicated region
        $region117: #{tpu_custom_call.1} parent=95 // pred_check
          %p672 = pneg %p387
        $region118: #{tpu_custom_call.1} parent=95 // pred_check_branch
          %674 = sbr.rel (%p672) target = $region120
        $region119: #{tpu_custom_call.1} parent=95 // pred_region
          %675 = dma.done [#allocation12], 4096
        $region120: #{tpu_custom_call.1} parent=95 // pred_fallthru
          _
        // Predicated region
        $region121: #{tpu_custom_call.1} parent=95 // pred_check
          %p676 = pneg %p429
        $region122: #{tpu_custom_call.1} parent=95 // pred_check_branch
          %678 = sbr.rel (%p676) target = $region124
        $region123: #{tpu_custom_call.1} parent=95 // pred_region
          %679 = dma.done [#allocation12], 4096
        $region124: #{tpu_custom_call.1} parent=95 // pred_fallthru
          _
        %s680 = sand.u32 %s49, 1
        %s681 = scalar_lea.sflag [#allocation3], %s680
        %s682 = sand.u32 %s49, 1
        %s683 = smul.addr %s682, 4
        %s684 = scalar_lea.vmem [#allocation2], %s683
        %p685 = pneg %p62
        %p686 = pneg %p59
        %s687 = sand.u32 %s41, 1
        %s688 = scalar_lea.sflag [#allocation6], %s687
        %s689 = sand.u32 %s75, 1
        %s690 = smul.addr %s689, 8
        %s691 = scalar_lea.vmem [#allocation5], %s690
        %p692 = pneg %p88
        %p693 = pneg %p85
        %p694 = scmp.lt.s32.totalorder %s41, 1
        %s695 = scalar_select %p694, %s41, 1
        %s696 = scalar_lea.vmem %s2, %s695
        %p697 = pneg %p114
        %p698 = pneg %p111
        %p699 = pneg %p135
        %p700 = pneg %p132
        %p701 = pneg %p156
        %p702 = pneg %p153
        %p703 = pneg %p177
        %p704 = pneg %p174
        %p705 = pneg %p198
        %p706 = pneg %p195
        %p707 = pneg %p219
        %p708 = pneg %p216
        %p709 = pneg %p240
        %p710 = pneg %p237
        %p711 = pneg %p261
        %p712 = pneg %p258
        %p713 = pneg %p282
        %p714 = pneg %p279
        %p715 = pneg %p303
        %p716 = pneg %p300
        %p717 = pneg %p324
        %p718 = pneg %p321
        %p719 = pneg %p345
        %p720 = pneg %p342
        %p721 = pneg %p366
        %p722 = pneg %p363
        %p723 = pneg %p387
        %p724 = pneg %p384
        %p725 = pneg %p408
        %p726 = pneg %p405
        %p727 = pneg %p429
        %p728 = pneg %p426
        %p729 = pneg %p450
        %p730 = pneg %p447
        %p731 = pneg %p476
        %p732 = pneg %p473
        %s733 = sand.u32 %s463, 1
        %s734 = scalar_lea.sflag [#allocation4], %s733
        %s735 = sand.u32 %s463, 1
        %s736 = smul.addr %s735, 8
        %s737 = scalar_lea.vmem [#allocation14], %s736
        %p738 = scmp.lt.s32.totalorder %s41, 1
        %s739 = scalar_select %p738, %s41, 1
        %s740 = scalar_lea.vmem %s2, %s739
        %v742 = vld [vmem:[%s646] sm:$0xf]
        %v743 = vunpack.c.l.bf16 %v742
        %v744 = vld [vmem:[%s655] sm:$0xff]
        %v745 = vld [vmem:[%s3] sm:$0x1]
        %v746 = vld [vmem:[%s4] sm:$0x1]
        %747 = vadd.xlane.f32.xlu0 %v743
        %v748 = vpop.xlane.xlu0 %747
        %v749 = vrcp.pop 128.0
        %v750 = vmul.f32 %v748, %v749
        %v751 = vsub.f32 %v743, %v750
        %v752 = vmul.f32 %v751, %v751
        %753 = vadd.xlane.f32.xlu0 %v752
        %v754 = vpop.xlane.xlu0 %753
        %v755 = vmul.f32 %v754, %v749
        %v756 = vadd.f32 %v755, 1e-05
        %v757 = vrsqrt.pop %v756
        %v758 = vmul.f32 %v751, %v757
        %v760 = vlaneseq
        %v761 = vshrl.u32 %v760, 7
        %v762 = vsub.s32 0, %v761
        %v763 = vrot.slane %v745, %v762
        %v765 = vmul.f32 %v758, %v763
        %v767 = vlaneseq
        %v768 = vshrl.u32 %v767, 7
        %v769 = vsub.s32 0, %v768
        %v770 = vrot.slane %v746, %v769
        %v772 = vadd.f32 %v765, %v770
        %v773 = vpack.c.bf16 %v772, %v772
        %774 = vadd.xlane.f32.xlu0 %v744
        %v775 = vpop.xlane.xlu0 %774
        %v776 = vmul.f32 %v775, %v749
        %v777 = vsub.f32 %v744, %v776
        %v778 = vmul.f32 %v777, %v777
        %779 = vadd.xlane.f32.xlu0 %v778
        %v780 = vpop.xlane.xlu0 %779
        %v781 = vmul.f32 %v780, %v749
        %v782 = vadd.f32 %v781, 1e-05
        %v783 = vrsqrt.pop %v782
        %v784 = vmul.f32 %v777, %v783
        %v785 = vmul.f32 %v784, %v763
        %v786 = vadd.f32 %v785, %v770
        %v787 = vpack.c.bf16 %v786, %v786
        %v789 = vrot.slane %v787, 4
        %vm790 = vcmask 1043456
        %v793 = vsel %vm790, %v773, %v789
        %v795 = vld [vmem:[%s5] sm:$0x1]
        %v796 = vld [vmem:[%s6] sm:$0x1]
        %v798 = vlaneseq
        %v799 = vshrl.u32 %v798, 7
        %v800 = vsub.s32 0, %v799
        %v801 = vrot.slane %v795, %v800
        %v803 = vmul.f32 %v784, %v801
        %v805 = vlaneseq
        %v806 = vshrl.u32 %v805, 7
        %v807 = vsub.s32 0, %v806
        %v808 = vrot.slane %v796, %v807
        %v810 = vadd.f32 %v803, %v808
        %v811 = vpack.c.bf16 %v810, %v810
        %v812 = vld [vmem:[#allocation7] sm:$0xf]
        %v813 = vld [vmem:[#allocation7 + $0x4] sm:$0xf]
        %v814 = vld [vmem:[#allocation7 + $0x8] sm:$0xf]
        %v815 = vld [vmem:[#allocation7 + $0xc] sm:$0xf]
        %v816 = vld [vmem:[#allocation7 + $0x10] sm:$0xf]
        %v817 = vld [vmem:[#allocation7 + $0x14] sm:$0xf]
        %v818 = vld [vmem:[#allocation7 + $0x18] sm:$0xf]
        %v819 = vld [vmem:[#allocation7 + $0x1c] sm:$0xf]
        %v820 = vld [vmem:[#allocation7 + $0x20] sm:$0xf]
        %v821 = vld [vmem:[#allocation7 + $0x24] sm:$0xf]
        %v822 = vld [vmem:[#allocation7 + $0x28] sm:$0xf]
        %v823 = vld [vmem:[#allocation7 + $0x2c] sm:$0xf]
        %v824 = vld [vmem:[#allocation7 + $0x30] sm:$0xf]
        %v825 = vld [vmem:[#allocation7 + $0x34] sm:$0xf]
        %v826 = vld [vmem:[#allocation7 + $0x38] sm:$0xf]
        %v827 = vld [vmem:[#allocation7 + $0x3c] sm:$0xf]
        %v828 = vld [vmem:[%s10] sm:$0x1]
        %v830 = vlaneseq
        %v831 = vshrl.u32 %v830, 7
        %v832 = vsub.s32 0, %v831
        %v833 = vrot.slane %v828, %v832
        %v851 = vunpack.c.l.b16 %v812
        %v852 = vunpack.c.l.b16 %v813
        %v853 = vunpack.c.l.b16 %v814
        %v854 = vunpack.c.l.b16 %v815
        %v855 = vunpack.c.l.b16 %v816
        %v856 = vunpack.c.l.b16 %v817
        %v857 = vunpack.c.l.b16 %v818
        %v858 = vunpack.c.l.b16 %v819
        %v859 = vunpack.c.l.b16 %v820
        %v860 = vunpack.c.l.b16 %v821
        %v861 = vunpack.c.l.b16 %v822
        %v862 = vunpack.c.l.b16 %v823
        %v863 = vunpack.c.l.b16 %v824
        %v864 = vunpack.c.l.b16 %v825
        %v865 = vunpack.c.l.b16 %v826
        %v866 = vunpack.c.l.b16 %v827
        %v867 = vpack.c.b16 %v852, %v851
        %v868 = vpack.c.b16 %v854, %v853
        %v869 = vpack.c.b16 %v856, %v855
        %v870 = vpack.c.b16 %v858, %v857
        %v871 = vpack.c.b16 %v860, %v859
        %v872 = vpack.c.b16 %v862, %v861
        %v873 = vpack.c.b16 %v864, %v863
        %v874 = vpack.c.b16 %v866, %v865
        %883 = vmatprep.subr.bf16.mxu0 0
        %884 = vmatpush1.bf16.msra.mxu0 %v867
        %885 = vmatprep.subr.bf16.mxu0 0
        %886 = vmatpush1.bf16.msra.mxu0 %v868
        %887 = vmatprep.subr.bf16.mxu0 0
        %888 = vmatpush1.bf16.msra.mxu0 %v869
        %889 = vmatprep.subr.bf16.mxu0 0
        %890 = vmatpush1.bf16.msra.mxu0 %v870
        %891 = vmatprep.subr.bf16.mxu0 0
        %892 = vmatpush1.bf16.msra.mxu0 %v871
        %893 = vmatprep.subr.bf16.mxu0 0
        %894 = vmatpush1.bf16.msra.mxu0 %v872
        %895 = vmatprep.subr.bf16.mxu0 0
        %896 = vmatpush1.bf16.msra.mxu0 %v873
        %897 = vmatprep.subr.bf16.mxu0 0
        %898 = vmatpush1.bf16.msra.mxu0 %v874
        %899 = vmatprep.subr.bf16.mxu0 0
        %900 = vmatpush1.bf16.msra.mxu0 0
        %901 = vmatprep.subr.bf16.mxu0 0
        %902 = vmatpush1.bf16.msra.mxu0 0
        %903 = vmatprep.subr.bf16.mxu0 0
        %904 = vmatpush1.bf16.msra.mxu0 0
        %905 = vmatprep.subr.bf16.mxu0 0
        %906 = vmatpush1.bf16.msra.mxu0 0
        %907 = vmatprep.subr.bf16.mxu0 0
        %908 = vmatpush1.bf16.msra.mxu0 0
        %909 = vmatprep.subr.bf16.mxu0 0
        %910 = vmatpush1.bf16.msra.mxu0 0
        %911 = vmatprep.subr.bf16.mxu0 0
        %912 = vmatpush1.bf16.msra.mxu0 0
        %913 = vmatprep.subr.bf16.mxu0 0
        %914 = vmatpush1.bf16.msra.mxu0 0
        %915 = vmatprep.mubr.bf16.mxu0 0
        %916 = vmatmul.mubr.bf16.gmra.mrb[0].mxu0 %v811
        %v917 = vpop.f32.mrb[0].mxu0
        %v918 = vadd.f32 %v833, %v917
        %v919 = vpop.f32.mrb[0].mxu0
        %v920 = vpop.f32.mrb[0].mxu0
        %v921 = vpop.f32.mrb[0].mxu0
        %922 = vdwg.mxu0
        %v923 = vmul.f32 %v918, 0.17677669
        %v924 = vpack.c.bf16 %v923, %v923
        %v925 = vld [vmem:[#allocation8] sm:$0xff]
        %v926 = vld [vmem:[#allocation8 + $0x8] sm:$0xff]
        %v927 = vld [vmem:[#allocation8 + $0x10] sm:$0xff]
        %v928 = vld [vmem:[#allocation8 + $0x18] sm:$0xff]
        %v929 = vld [vmem:[#allocation8 + $0x20] sm:$0xff]
        %v930 = vld [vmem:[#allocation8 + $0x28] sm:$0xff]
        %v931 = vld [vmem:[#allocation8 + $0x30] sm:$0xff]
        %v932 = vld [vmem:[#allocation8 + $0x38] sm:$0xff]
        %v933 = vld [vmem:[#allocation8 + $0x40] sm:$0xff]
        %v934 = vld [vmem:[#allocation8 + $0x48] sm:$0xff]
        %v935 = vld [vmem:[#allocation8 + $0x50] sm:$0xff]
        %v936 = vld [vmem:[#allocation8 + $0x58] sm:$0xff]
        %v937 = vld [vmem:[#allocation8 + $0x60] sm:$0xff]
        %v938 = vld [vmem:[#allocation8 + $0x68] sm:$0xff]
        %v939 = vld [vmem:[#allocation8 + $0x70] sm:$0xff]
        %v940 = vld [vmem:[#allocation8 + $0x78] sm:$0xff]
        %v941 = vld [vmem:[%s12] sm:$0x3]
        %v943 = vlaneseq
        %v944 = vshrl.u32 %v943, 7
        %v945 = vsub.s32 0, %v944
        %v946 = vrot.slane %v941, %v945
        %v947 = vlaneseq
        %v948 = vshrl.u32 %v947, 7
        %v949 = vsub.s32 1, %v948
        %v950 = vrot.slane %v941, %v949
        %v969 = vunpack.c.l.b16 %v925
        %v970 = vunpack.c.h.b16 %v925
        %v971 = vunpack.c.l.b16 %v926
        %v972 = vunpack.c.h.b16 %v926
        %v973 = vunpack.c.l.b16 %v927
        %v974 = vunpack.c.h.b16 %v927
        %v975 = vunpack.c.l.b16 %v928
        %v976 = vunpack.c.h.b16 %v928
        %v977 = vunpack.c.l.b16 %v929
        %v978 = vunpack.c.h.b16 %v929
        %v979 = vunpack.c.l.b16 %v930
        %v980 = vunpack.c.h.b16 %v930
        %v981 = vunpack.c.l.b16 %v931
        %v982 = vunpack.c.h.b16 %v931
        %v983 = vunpack.c.l.b16 %v932
        %v984 = vunpack.c.h.b16 %v932
        %v985 = vunpack.c.l.b16 %v933
        %v986 = vunpack.c.h.b16 %v933
        %v987 = vunpack.c.l.b16 %v934
        %v988 = vunpack.c.h.b16 %v934
        %v989 = vunpack.c.l.b16 %v935
        %v990 = vunpack.c.h.b16 %v935
        %v991 = vunpack.c.l.b16 %v936
        %v992 = vunpack.c.h.b16 %v936
        %v993 = vunpack.c.l.b16 %v937
        %v994 = vunpack.c.h.b16 %v937
        %v995 = vunpack.c.l.b16 %v938
        %v996 = vunpack.c.h.b16 %v938
        %v997 = vunpack.c.l.b16 %v939
        %v998 = vunpack.c.h.b16 %v939
        %v999 = vunpack.c.l.b16 %v940
        %v1000 = vunpack.c.h.b16 %v940
        %v1001 = vpack.c.b16 %v971, %v969
        %v1002 = vpack.c.b16 %v972, %v970
        %v1003 = vpack.c.b16 %v975, %v973
        %v1004 = vpack.c.b16 %v976, %v974
        %v1005 = vpack.c.b16 %v979, %v977
        %v1006 = vpack.c.b16 %v980, %v978
        %v1007 = vpack.c.b16 %v983, %v981
        %v1008 = vpack.c.b16 %v984, %v982
        %v1009 = vpack.c.b16 %v987, %v985
        %v1010 = vpack.c.b16 %v988, %v986
        %v1011 = vpack.c.b16 %v991, %v989
        %v1012 = vpack.c.b16 %v992, %v990
        %v1013 = vpack.c.b16 %v995, %v993
        %v1014 = vpack.c.b16 %v996, %v994
        %v1015 = vpack.c.b16 %v999, %v997
        %v1016 = vpack.c.b16 %v1000, %v998
        %1033 = vmatprep.subr.bf16.mxu0 %v1002
        %1034 = vmatpush1.bf16.msra.mxu0 %v1001
        %1035 = vmatprep.subr.bf16.mxu0 %v1004
        %1036 = vmatpush1.bf16.msra.mxu0 %v1003
        %1037 = vmatprep.subr.bf16.mxu0 %v1006
        %1038 = vmatpush1.bf16.msra.mxu0 %v1005
        %1039 = vmatprep.subr.bf16.mxu0 %v1008
        %1040 = vmatpush1.bf16.msra.mxu0 %v1007
        %1041 = vmatprep.subr.bf16.mxu0 %v1010
        %1042 = vmatpush1.bf16.msra.mxu0 %v1009
        %1043 = vmatprep.subr.bf16.mxu0 %v1012
        %1044 = vmatpush1.bf16.msra.mxu0 %v1011
        %1045 = vmatprep.subr.bf16.mxu0 %v1014
        %1046 = vmatpush1.bf16.msra.mxu0 %v1013
        %1047 = vmatprep.subr.bf16.mxu0 %v1016
        %1048 = vmatpush1.bf16.msra.mxu0 %v1015
        %1049 = vmatprep.subr.bf16.mxu0 0
        %1050 = vmatpush1.bf16.msra.mxu0 0
        %1051 = vmatprep.subr.bf16.mxu0 0
        %1052 = vmatpush1.bf16.msra.mxu0 0
        %1053 = vmatprep.subr.bf16.mxu0 0
        %1054 = vmatpush1.bf16.msra.mxu0 0
        %1055 = vmatprep.subr.bf16.mxu0 0
        %1056 = vmatpush1.bf16.msra.mxu0 0
        %1057 = vmatprep.subr.bf16.mxu0 0
        %1058 = vmatpush1.bf16.msra.mxu0 0
        %1059 = vmatprep.subr.bf16.mxu0 0
        %1060 = vmatpush1.bf16.msra.mxu0 0
        %1061 = vmatprep.subr.bf16.mxu0 0
        %1062 = vmatpush1.bf16.msra.mxu0 0
        %1063 = vmatprep.subr.bf16.mxu0 0
        %1064 = vmatpush1.bf16.msra.mxu0 0
        %1065 = vmatprep.mubr.bf16.mxu0 0
        %1066 = vmatmul.mubr.bf16.gmra.mrb[0].mxu0 %v793
        %v1067 = vpop.f32.mrb[0].mxu0
        %v1068 = vadd.f32 %v946, %v1067
        %v1069 = vpop.f32.mrb[0].mxu0
        %v1070 = vadd.f32 %v950, %v1069
        %v1071 = vpop.f32.mrb[0].mxu0
        %v1072 = vadd.f32 %v946, %v1071
        %v1073 = vpop.f32.mrb[0].mxu0
        %v1074 = vadd.f32 %v950, %v1073
        %1075 = vdwg.mxu0
        %v1076 = vpack.c.bf16 %v1072, %v1068
        %v1077 = vpack.c.bf16 %v1074, %v1070
        %1079 = vrot.lane.b32.xlu0 %v924, 96
        %v1080 = vpop.permute.xlu0 %1079
        %1081 = vrot.lane.b32.xlu0 %v924, 64
        %v1082 = vpop.permute.xlu0 %1081
        %1083 = vrot.lane.b32.xlu0 %v924, 32
        %v1084 = vpop.permute.xlu0 %1083
        %1086 = vrot.lane.b32.xlu0 %v1076, 96
        %v1087 = vpop.permute.xlu0 %1086
        %1088 = vrot.lane.b32.xlu0 %v1076, 64
        %v1089 = vpop.permute.xlu0 %1088
        %1090 = vrot.lane.b32.xlu0 %v1076, 32
        %v1091 = vpop.permute.xlu0 %1090
        %1093 = vrot.lane.b32.xlu0 %v1077, 96
        %v1094 = vpop.permute.xlu0 %1093
        %1096 = vrot.lane.b32.xlu0 %v1077, 64
        %v1097 = vpop.permute.xlu0 %1096
        %1099 = vrot.lane.b32.xlu0 %v1077, 32
        %v1100 = vpop.permute.xlu0 %1099
        %v1102 = vld [vmem:[%s740] sm:$0x1]
        %vm1103 = vcmp.gt.f32.partialorder %v1102, 0.0
        %v1104 = vsel %vm1103, 0.0, -1e+09
        %v1106 = vlaneseq
        %v1107 = vshrl.u32 %v1106, 7
        %v1108 = vsub.s32 0, %v1107
        %v1109 = vrot.slane %v1104, %v1108
        %vm1111 = vcmask 261120
        %v1113 = vsel %vm1111, %v924, 0
        %v1116 = vsel %vm1111, %v1076, 0
        %1118 = vmatprep.subr.bf16.mxu0 0
        %1119 = vmatpush1.bf16.xpose.msra.mxu0 %v1116
        %1120 = vmatprep.subr.bf16.mxu0 0
        %1121 = vmatpush1.bf16.xpose.msra.mxu0 0
        %1122 = vmatprep.subr.bf16.mxu0 0
        %1123 = vmatpush1.bf16.xpose.msra.mxu0 0
        %1124 = vmatprep.subr.bf16.mxu0 0
        %1125 = vmatpush1.bf16.xpose.msra.mxu0 0
        %1126 = vmatprep.subr.bf16.mxu0 0
        %1127 = vmatpush1.bf16.xpose.msra.mxu0 0
        %1128 = vmatprep.subr.bf16.mxu0 0
        %1129 = vmatpush1.bf16.xpose.msra.mxu0 0
        %1130 = vmatprep.subr.bf16.mxu0 0
        %1131 = vmatpush1.bf16.xpose.msra.mxu0 0
        %1132 = vmatprep.subr.bf16.mxu0 0
        %1133 = vmatpush1.bf16.xpose.msra.mxu0 0
        %1134 = vmatprep.subr.bf16.mxu0 0
        %1135 = vmatpush1.bf16.xpose.msra.mxu0 0
        %1136 = vmatprep.subr.bf16.mxu0 0
        %1137 = vmatpush1.bf16.xpose.msra.mxu0 0
        %1138 = vmatprep.subr.bf16.mxu0 0
        %1139 = vmatpush1.bf16.xpose.msra.mxu0 0
        %1140 = vmatprep.subr.bf16.mxu0 0
        %1141 = vmatpush1.bf16.xpose.msra.mxu0 0
        %1142 = vmatprep.subr.bf16.mxu0 0
        %1143 = vmatpush1.bf16.xpose.msra.mxu0 0
        %1144 = vmatprep.subr.bf16.mxu0 0
        %1145 = vmatpush1.bf16.xpose.msra.mxu0 0
        %1146 = vmatprep.subr.bf16.mxu0 0
        %1147 = vmatpush1.bf16.xpose.msra.mxu0 0
        %1148 = vmatprep.subr.bf16.mxu0 0
        %1149 = vmatpush1.bf16.xpose.msra.mxu0 0
        %1150 = vmatprep.mubr.bf16.mxu0 0
        %1151 = vmatmul.mubr.bf16.gmra.mrb[0].mxu0 %v1113
        %v1152 = vpop.f32.mrb[0].mxu0
        %v1153 = vadd.f32 %v1109, %v1152
        %v1154 = vpop.f32.mrb[0].mxu0
        %v1155 = vpop.f32.mrb[0].mxu0
        %v1156 = vpop.f32.mrb[0].mxu0
        %1157 = vdwg.mxu0
        %v1159 = vsel %vm1111, %v1080, 0
        %v1162 = vsel %vm1111, %v1087, 0
        %1164 = vmatprep.subr.bf16.mxu0 0
        %1165 = vmatpush1.bf16.xpose.msra.mxu0 %v1162
        %1166 = vmatprep.subr.bf16.mxu0 0
        %1167 = vmatpush1.bf16.xpose.msra.mxu0 0
        %1168 = vmatprep.subr.bf16.mxu0 0
        %1169 = vmatpush1.bf16.xpose.msra.mxu0 0
        %1170 = vmatprep.subr.bf16.mxu0 0
        %1171 = vmatpush1.bf16.xpose.msra.mxu0 0
        %1172 = vmatprep.subr.bf16.mxu0 0
        %1173 = vmatpush1.bf16.xpose.msra.mxu0 0
        %1174 = vmatprep.subr.bf16.mxu0 0
        %1175 = vmatpush1.bf16.xpose.msra.mxu0 0
        %1176 = vmatprep.subr.bf16.mxu0 0
        %1177 = vmatpush1.bf16.xpose.msra.mxu0 0
        %1178 = vmatprep.subr.bf16.mxu0 0
        %1179 = vmatpush1.bf16.xpose.msra.mxu0 0
        %1180 = vmatprep.subr.bf16.mxu0 0
        %1181 = vmatpush1.bf16.xpose.msra.mxu0 0
        %1182 = vmatprep.subr.bf16.mxu0 0
        %1183 = vmatpush1.bf16.xpose.msra.mxu0 0
        %1184 = vmatprep.subr.bf16.mxu0 0
        %1185 = vmatpush1.bf16.xpose.msra.mxu0 0
        %1186 = vmatprep.subr.bf16.mxu0 0
        %1187 = vmatpush1.bf16.xpose.msra.mxu0 0
        %1188 = vmatprep.subr.bf16.mxu0 0
        %1189 = vmatpush1.bf16.xpose.msra.mxu0 0
        %1190 = vmatprep.subr.bf16.mxu0 0
        %1191 = vmatpush1.bf16.xpose.msra.mxu0 0
        %1192 = vmatprep.subr.bf16.mxu0 0
        %1193 = vmatpush1.bf16.xpose.msra.mxu0 0
        %1194 = vmatprep.subr.bf16.mxu0 0
        %1195 = vmatpush1.bf16.xpose.msra.mxu0 0
        %1196 = vmatprep.mubr.bf16.mxu0 0
        %1197 = vmatmul.mubr.bf16.gmra.mrb[0].mxu0 %v1159
        %v1198 = vpop.f32.mrb[0].mxu0
        %v1199 = vadd.f32 %v1109, %v1198
        %v1200 = vpop.f32.mrb[0].mxu0
        %v1201 = vpop.f32.mrb[0].mxu0
        %v1202 = vpop.f32.mrb[0].mxu0
        %1203 = vdwg.mxu0
        %v1205 = vsel %vm1111, %v1082, 0
        %v1208 = vsel %vm1111, %v1089, 0
        %1210 = vmatprep.subr.bf16.mxu0 0
        %1211 = vmatpush1.bf16.xpose.msra.mxu0 %v1208
        %1212 = vmatprep.subr.bf16.mxu0 0
        %1213 = vmatpush1.bf16.xpose.msra.mxu0 0
        %1214 = vmatprep.subr.bf16.mxu0 0
        %1215 = vmatpush1.bf16.xpose.msra.mxu0 0
        %1216 = vmatprep.subr.bf16.mxu0 0
        %1217 = vmatpush1.bf16.xpose.msra.mxu0 0
        %1218 = vmatprep.subr.bf16.mxu0 0
        %1219 = vmatpush1.bf16.xpose.msra.mxu0 0
        %1220 = vmatprep.subr.bf16.mxu0 0
        %1221 = vmatpush1.bf16.xpose.msra.mxu0 0
        %1222 = vmatprep.subr.bf16.mxu0 0
        %1223 = vmatpush1.bf16.xpose.msra.mxu0 0
        %1224 = vmatprep.subr.bf16.mxu0 0
        %1225 = vmatpush1.bf16.xpose.msra.mxu0 0
        %1226 = vmatprep.subr.bf16.mxu0 0
        %1227 = vmatpush1.bf16.xpose.msra.mxu0 0
        %1228 = vmatprep.subr.bf16.mxu0 0
        %1229 = vmatpush1.bf16.xpose.msra.mxu0 0
        %1230 = vmatprep.subr.bf16.mxu0 0
        %1231 = vmatpush1.bf16.xpose.msra.mxu0 0
        %1232 = vmatprep.subr.bf16.mxu0 0
        %1233 = vmatpush1.bf16.xpose.msra.mxu0 0
        %1234 = vmatprep.subr.bf16.mxu0 0
        %1235 = vmatpush1.bf16.xpose.msra.mxu0 0
        %1236 = vmatprep.subr.bf16.mxu0 0
        %1237 = vmatpush1.bf16.xpose.msra.mxu0 0
        %1238 = vmatprep.subr.bf16.mxu0 0
        %1239 = vmatpush1.bf16.xpose.msra.mxu0 0
        %1240 = vmatprep.subr.bf16.mxu0 0
        %1241 = vmatpush1.bf16.xpose.msra.mxu0 0
        %1242 = vmatprep.mubr.bf16.mxu0 0
        %1243 = vmatmul.mubr.bf16.gmra.mrb[0].mxu0 %v1205
        %v1244 = vpop.f32.mrb[0].mxu0
        %v1245 = vadd.f32 %v1109, %v1244
        %v1246 = vpop.f32.mrb[0].mxu0
        %v1247 = vpop.f32.mrb[0].mxu0
        %v1248 = vpop.f32.mrb[0].mxu0
        %1249 = vdwg.mxu0
        %v1251 = vsel %vm1111, %v1084, 0
        %v1254 = vsel %vm1111, %v1091, 0
        %1256 = vmatprep.subr.bf16.mxu0 0
        %1257 = vmatpush1.bf16.xpose.msra.mxu0 %v1254
        %1258 = vmatprep.subr.bf16.mxu0 0
        %1259 = vmatpush1.bf16.xpose.msra.mxu0 0
        %1260 = vmatprep.subr.bf16.mxu0 0
        %1261 = vmatpush1.bf16.xpose.msra.mxu0 0
        %1262 = vmatprep.subr.bf16.mxu0 0
        %1263 = vmatpush1.bf16.xpose.msra.mxu0 0
        %1264 = vmatprep.subr.bf16.mxu0 0
        %1265 = vmatpush1.bf16.xpose.msra.mxu0 0
        %1266 = vmatprep.subr.bf16.mxu0 0
        %1267 = vmatpush1.bf16.xpose.msra.mxu0 0
        %1268 = vmatprep.subr.bf16.mxu0 0
        %1269 = vmatpush1.bf16.xpose.msra.mxu0 0
        %1270 = vmatprep.subr.bf16.mxu0 0
        %1271 = vmatpush1.bf16.xpose.msra.mxu0 0
        %1272 = vmatprep.subr.bf16.mxu0 0
        %1273 = vmatpush1.bf16.xpose.msra.mxu0 0
        %1274 = vmatprep.subr.bf16.mxu0 0
        %1275 = vmatpush1.bf16.xpose.msra.mxu0 0
        %1276 = vmatprep.subr.bf16.mxu0 0
        %1277 = vmatpush1.bf16.xpose.msra.mxu0 0
        %1278 = vmatprep.subr.bf16.mxu0 0
        %1279 = vmatpush1.bf16.xpose.msra.mxu0 0
        %1280 = vmatprep.subr.bf16.mxu0 0
        %1281 = vmatpush1.bf16.xpose.msra.mxu0 0
        %1282 = vmatprep.subr.bf16.mxu0 0
        %1283 = vmatpush1.bf16.xpose.msra.mxu0 0
        %1284 = vmatprep.subr.bf16.mxu0 0
        %1285 = vmatpush1.bf16.xpose.msra.mxu0 0
        %1286 = vmatprep.subr.bf16.mxu0 0
        %1287 = vmatpush1.bf16.xpose.msra.mxu0 0
        %1288 = vmatprep.mubr.bf16.mxu0 0
        %1289 = vmatmul.mubr.bf16.gmra.mrb[0].mxu0 %v1251
        %v1290 = vpop.f32.mrb[0].mxu0
        %v1291 = vadd.f32 %v1109, %v1290
        %v1292 = vpop.f32.mrb[0].mxu0
        %v1293 = vpop.f32.mrb[0].mxu0
        %v1294 = vpop.f32.mrb[0].mxu0
        %1295 = vdwg.mxu0
        %vm1296 = vcmask 130048
        %v1297 = vsel %vm1296, %v1153, -inf
        %1298 = vmax.xlane.f32.xlu0 %v1297
        %v1299 = vpop.xlane.xlu0 %1298
        %v1300 = vsel %vm1296, %v1199, -inf
        %1301 = vmax.xlane.f32.xlu0 %v1300
        %v1302 = vpop.xlane.xlu0 %1301
        %v1303 = vsel %vm1296, %v1245, -inf
        %1304 = vmax.xlane.f32.xlu0 %v1303
        %v1305 = vpop.xlane.xlu0 %1304
        %v1306 = vsel %vm1296, %v1291, -inf
        %1307 = vmax.xlane.f32.xlu0 %v1306
        %v1308 = vpop.xlane.xlu0 %1307
        %v1309 = vsub.f32 %v1153, %v1299
        %v1310 = vsub.f32 %v1199, %v1302
        %v1311 = vsub.f32 %v1245, %v1305
        %v1312 = vsub.f32 %v1291, %v1308
        %v1313 = vmul.f32 %v1309, 1.442695
        %v1314 = vpow.pop %v1313
        %v1315 = vmul.f32 %v1310, 1.442695
        %v1316 = vpow.pop %v1315
        %v1317 = vmul.f32 %v1311, 1.442695
        %v1318 = vpow.pop %v1317
        %v1319 = vmul.f32 %v1312, 1.442695
        %v1320 = vpow.pop %v1319
        %v1321 = vsel %vm1296, %v1314, 0.0
        %1322 = vadd.xlane.f32.xlu0 %v1321
        %v1323 = vpop.xlane.xlu0 %1322
        %v1324 = vsel %vm1296, %v1316, 0.0
        %1325 = vadd.xlane.f32.xlu0 %v1324
        %v1326 = vpop.xlane.xlu0 %1325
        %v1327 = vsel %vm1296, %v1318, 0.0
        %1328 = vadd.xlane.f32.xlu0 %v1327
        %v1329 = vpop.xlane.xlu0 %1328
        %v1330 = vsel %vm1296, %v1320, 0.0
        %1331 = vadd.xlane.f32.xlu0 %v1330
        %v1332 = vpop.xlane.xlu0 %1331
        %v1333 = vrcp.pop %v1323
        %v1334 = vrcp.pop %v1326
        %v1335 = vrcp.pop %v1329
        %v1336 = vrcp.pop %v1332
        %v1337 = vmul.f32 %v1314, %v1333
        %v1338 = vmul.f32 %v1316, %v1334
        %v1339 = vmul.f32 %v1318, %v1335
        %v1340 = vmul.f32 %v1320, %v1336
        %v1341 = vpack.c.bf16 %v1337, %v1337
        %v1342 = vpack.c.bf16 %v1338, %v1338
        %v1343 = vpack.c.bf16 %v1339, %v1339
        %v1344 = vpack.c.bf16 %v1340, %v1340
        %v1346 = vsel %vm1296, %v1341, 0
        %1348 = vmatprep.subr.bf16.mxu0 0
        %1349 = vmatpush1.bf16.msra.mxu0 %v1077
        %1350 = vmatprep.subr.bf16.mxu0 0
        %1351 = vmatpush1.bf16.msra.mxu0 0
        %1352 = vmatprep.subr.bf16.mxu0 0
        %1353 = vmatpush1.bf16.msra.mxu0 0
        %1354 = vmatprep.subr.bf16.mxu0 0
        %1355 = vmatpush1.bf16.msra.mxu0 0
        %1356 = vmatprep.subr.bf16.mxu0 0
        %1357 = vmatpush1.bf16.msra.mxu0 0
        %1358 = vmatprep.subr.bf16.mxu0 0
        %1359 = vmatpush1.bf16.msra.mxu0 0
        %1360 = vmatprep.subr.bf16.mxu0 0
        %1361 = vmatpush1.bf16.msra.mxu0 0
        %1362 = vmatprep.subr.bf16.mxu0 0
        %1363 = vmatpush1.bf16.msra.mxu0 0
        %1364 = vmatprep.subr.bf16.mxu0 0
        %1365 = vmatpush1.bf16.msra.mxu0 0
        %1366 = vmatprep.subr.bf16.mxu0 0
        %1367 = vmatpush1.bf16.msra.mxu0 0
        %1368 = vmatprep.subr.bf16.mxu0 0
        %1369 = vmatpush1.bf16.msra.mxu0 0
        %1370 = vmatprep.subr.bf16.mxu0 0
        %1371 = vmatpush1.bf16.msra.mxu0 0
        %1372 = vmatprep.subr.bf16.mxu0 0
        %1373 = vmatpush1.bf16.msra.mxu0 0
        %1374 = vmatprep.subr.bf16.mxu0 0
        %1375 = vmatpush1.bf16.msra.mxu0 0
        %1376 = vmatprep.subr.bf16.mxu0 0
        %1377 = vmatpush1.bf16.msra.mxu0 0
        %1378 = vmatprep.subr.bf16.mxu0 0
        %1379 = vmatpush1.bf16.msra.mxu0 0
        %1380 = vmatprep.mubr.bf16.mxu0 0
        %1381 = vmatmul.mubr.bf16.gmra.mrb[0].mxu0 %v1346
        %v1382 = vpop.f32.mrb[0].mxu0
        %v1383 = vadd.f32 0.0, %v1382
        %v1384 = vpop.f32.mrb[0].mxu0
        %v1385 = vpop.f32.mrb[0].mxu0
        %v1386 = vpop.f32.mrb[0].mxu0
        %1387 = vdwg.mxu0
        %v1389 = vsel %vm1296, %v1342, 0
        %1391 = vmatprep.subr.bf16.mxu0 0
        %1392 = vmatpush1.bf16.msra.mxu0 %v1094
        %1393 = vmatprep.subr.bf16.mxu0 0
        %1394 = vmatpush1.bf16.msra.mxu0 0
        %1395 = vmatprep.subr.bf16.mxu0 0
        %1396 = vmatpush1.bf16.msra.mxu0 0
        %1397 = vmatprep.subr.bf16.mxu0 0
        %1398 = vmatpush1.bf16.msra.mxu0 0
        %1399 = vmatprep.subr.bf16.mxu0 0
        %1400 = vmatpush1.bf16.msra.mxu0 0
        %1401 = vmatprep.subr.bf16.mxu0 0
        %1402 = vmatpush1.bf16.msra.mxu0 0
        %1403 = vmatprep.subr.bf16.mxu0 0
        %1404 = vmatpush1.bf16.msra.mxu0 0
        %1405 = vmatprep.subr.bf16.mxu0 0
        %1406 = vmatpush1.bf16.msra.mxu0 0
        %1407 = vmatprep.subr.bf16.mxu0 0
        %1408 = vmatpush1.bf16.msra.mxu0 0
        %1409 = vmatprep.subr.bf16.mxu0 0
        %1410 = vmatpush1.bf16.msra.mxu0 0
        %1411 = vmatprep.subr.bf16.mxu0 0
        %1412 = vmatpush1.bf16.msra.mxu0 0
        %1413 = vmatprep.subr.bf16.mxu0 0
        %1414 = vmatpush1.bf16.msra.mxu0 0
        %1415 = vmatprep.subr.bf16.mxu0 0
        %1416 = vmatpush1.bf16.msra.mxu0 0
        %1417 = vmatprep.subr.bf16.mxu0 0
        %1418 = vmatpush1.bf16.msra.mxu0 0
        %1419 = vmatprep.subr.bf16.mxu0 0
        %1420 = vmatpush1.bf16.msra.mxu0 0
        %1421 = vmatprep.subr.bf16.mxu0 0
        %1422 = vmatpush1.bf16.msra.mxu0 0
        %1423 = vmatprep.mubr.bf16.mxu0 0
        %1424 = vmatmul.mubr.bf16.gmra.mrb[0].mxu0 %v1389
        %v1425 = vpop.f32.mrb[0].mxu0
        %v1426 = vadd.f32 0.0, %v1425
        %v1427 = vpop.f32.mrb[0].mxu0
        %v1428 = vpop.f32.mrb[0].mxu0
        %v1429 = vpop.f32.mrb[0].mxu0
        %1430 = vdwg.mxu0
        %v1432 = vsel %vm1296, %v1343, 0
        %1434 = vmatprep.subr.bf16.mxu0 0
        %1435 = vmatpush1.bf16.msra.mxu0 %v1097
        %1436 = vmatprep.subr.bf16.mxu0 0
        %1437 = vmatpush1.bf16.msra.mxu0 0
        %1438 = vmatprep.subr.bf16.mxu0 0
        %1439 = vmatpush1.bf16.msra.mxu0 0
        %1440 = vmatprep.subr.bf16.mxu0 0
        %1441 = vmatpush1.bf16.msra.mxu0 0
        %1442 = vmatprep.subr.bf16.mxu0 0
        %1443 = vmatpush1.bf16.msra.mxu0 0
        %1444 = vmatprep.subr.bf16.mxu0 0
        %1445 = vmatpush1.bf16.msra.mxu0 0
        %1446 = vmatprep.subr.bf16.mxu0 0
        %1447 = vmatpush1.bf16.msra.mxu0 0
        %1448 = vmatprep.subr.bf16.mxu0 0
        %1449 = vmatpush1.bf16.msra.mxu0 0
        %1450 = vmatprep.subr.bf16.mxu0 0
        %1451 = vmatpush1.bf16.msra.mxu0 0
        %1452 = vmatprep.subr.bf16.mxu0 0
        %1453 = vmatpush1.bf16.msra.mxu0 0
        %1454 = vmatprep.subr.bf16.mxu0 0
        %1455 = vmatpush1.bf16.msra.mxu0 0
        %1456 = vmatprep.subr.bf16.mxu0 0
        %1457 = vmatpush1.bf16.msra.mxu0 0
        %1458 = vmatprep.subr.bf16.mxu0 0
        %1459 = vmatpush1.bf16.msra.mxu0 0
        %1460 = vmatprep.subr.bf16.mxu0 0
        %1461 = vmatpush1.bf16.msra.mxu0 0
        %1462 = vmatprep.subr.bf16.mxu0 0
        %1463 = vmatpush1.bf16.msra.mxu0 0
        %1464 = vmatprep.subr.bf16.mxu0 0
        %1465 = vmatpush1.bf16.msra.mxu0 0
        %1466 = vmatprep.mubr.bf16.mxu0 0
        %1467 = vmatmul.mubr.bf16.gmra.mrb[0].mxu0 %v1432
        %v1468 = vpop.f32.mrb[0].mxu0
        %v1469 = vadd.f32 0.0, %v1468
        %v1470 = vpop.f32.mrb[0].mxu0
        %v1471 = vpop.f32.mrb[0].mxu0
        %v1472 = vpop.f32.mrb[0].mxu0
        %1473 = vdwg.mxu0
        %v1475 = vsel %vm1296, %v1344, 0
        %1477 = vmatprep.subr.bf16.mxu0 0
        %1478 = vmatpush1.bf16.msra.mxu0 %v1100
        %1479 = vmatprep.subr.bf16.mxu0 0
        %1480 = vmatpush1.bf16.msra.mxu0 0
        %1481 = vmatprep.subr.bf16.mxu0 0
        %1482 = vmatpush1.bf16.msra.mxu0 0
        %1483 = vmatprep.subr.bf16.mxu0 0
        %1484 = vmatpush1.bf16.msra.mxu0 0
        %1485 = vmatprep.subr.bf16.mxu0 0
        %1486 = vmatpush1.bf16.msra.mxu0 0
        %1487 = vmatprep.subr.bf16.mxu0 0
        %1488 = vmatpush1.bf16.msra.mxu0 0
        %1489 = vmatprep.subr.bf16.mxu0 0
        %1490 = vmatpush1.bf16.msra.mxu0 0
        %1491 = vmatprep.subr.bf16.mxu0 0
        %1492 = vmatpush1.bf16.msra.mxu0 0
        %1493 = vmatprep.subr.bf16.mxu0 0
        %1494 = vmatpush1.bf16.msra.mxu0 0
        %1495 = vmatprep.subr.bf16.mxu0 0
        %1496 = vmatpush1.bf16.msra.mxu0 0
        %1497 = vmatprep.subr.bf16.mxu0 0
        %1498 = vmatpush1.bf16.msra.mxu0 0
        %1499 = vmatprep.subr.bf16.mxu0 0
        %1500 = vmatpush1.bf16.msra.mxu0 0
        %1501 = vmatprep.subr.bf16.mxu0 0
        %1502 = vmatpush1.bf16.msra.mxu0 0
        %1503 = vmatprep.subr.bf16.mxu0 0
        %1504 = vmatpush1.bf16.msra.mxu0 0
        %1505 = vmatprep.subr.bf16.mxu0 0
        %1506 = vmatpush1.bf16.msra.mxu0 0
        %1507 = vmatprep.subr.bf16.mxu0 0
        %1508 = vmatpush1.bf16.msra.mxu0 0
        %1509 = vmatprep.mubr.bf16.mxu0 0
        %1510 = vmatmul.mubr.bf16.gmra.mrb[0].mxu0 %v1475
        %v1511 = vpop.f32.mrb[0].mxu0
        %v1512 = vadd.f32 0.0, %v1511
        %v1513 = vpop.f32.mrb[0].mxu0
        %v1514 = vpop.f32.mrb[0].mxu0
        %v1515 = vpop.f32.mrb[0].mxu0
        %1516 = vdwg.mxu0
        %1518 = vrot.lane.b32.xlu0 %v1426, 32
        %v1519 = vpop.permute.xlu0 %1518
        %1522 = vrot.lane.b32.xlu0 %v1469, 64
        %v1523 = vpop.permute.xlu0 %1522
        %1526 = vrot.lane.b32.xlu0 %v1512, 96
        %v1527 = vpop.permute.xlu0 %1526
        %v1529 = vsel %vm1111, %v1383, %v1519
        %vm1530 = vcmask 523264
        %v1531 = vsel %vm1530, %v1529, %v1523
        %vm1532 = vcmask 785408
        %v1533 = vsel %vm1532, %v1531, %v1527
        %v1534 = vpack.c.bf16 %v1533, %v1533
        %v1535 = vld [vmem:[#allocation10] sm:$0xf]
        %v1536 = vld [vmem:[#allocation10 + $0x4] sm:$0xf]
        %v1537 = vld [vmem:[#allocation10 + $0x8] sm:$0xf]
        %v1538 = vld [vmem:[#allocation10 + $0xc] sm:$0xf]
        %v1539 = vld [vmem:[#allocation10 + $0x10] sm:$0xf]
        %v1540 = vld [vmem:[#allocation10 + $0x14] sm:$0xf]
        %v1541 = vld [vmem:[#allocation10 + $0x18] sm:$0xf]
        %v1542 = vld [vmem:[#allocation10 + $0x1c] sm:$0xf]
        %v1543 = vld [vmem:[#allocation10 + $0x20] sm:$0xf]
        %v1544 = vld [vmem:[#allocation10 + $0x24] sm:$0xf]
        %v1545 = vld [vmem:[#allocation10 + $0x28] sm:$0xf]
        %v1546 = vld [vmem:[#allocation10 + $0x2c] sm:$0xf]
        %v1547 = vld [vmem:[#allocation10 + $0x30] sm:$0xf]
        %v1548 = vld [vmem:[#allocation10 + $0x34] sm:$0xf]
        %v1549 = vld [vmem:[#allocation10 + $0x38] sm:$0xf]
        %v1550 = vld [vmem:[#allocation10 + $0x3c] sm:$0xf]
        %v1551 = vld [vmem:[%s14] sm:$0x1]
        %v1553 = vlaneseq
        %v1554 = vshrl.u32 %v1553, 7
        %v1555 = vsub.s32 0, %v1554
        %v1556 = vrot.slane %v1551, %v1555
        %v1574 = vunpack.c.l.b16 %v1535
        %v1575 = vunpack.c.l.b16 %v1536
        %v1576 = vunpack.c.l.b16 %v1537
        %v1577 = vunpack.c.l.b16 %v1538
        %v1578 = vunpack.c.l.b16 %v1539
        %v1579 = vunpack.c.l.b16 %v1540
        %v1580 = vunpack.c.l.b16 %v1541
        %v1581 = vunpack.c.l.b16 %v1542
        %v1582 = vunpack.c.l.b16 %v1543
        %v1583 = vunpack.c.l.b16 %v1544
        %v1584 = vunpack.c.l.b16 %v1545
        %v1585 = vunpack.c.l.b16 %v1546
        %v1586 = vunpack.c.l.b16 %v1547
        %v1587 = vunpack.c.l.b16 %v1548
        %v1588 = vunpack.c.l.b16 %v1549
        %v1589 = vunpack.c.l.b16 %v1550
        %v1590 = vpack.c.b16 %v1575, %v1574
        %v1591 = vpack.c.b16 %v1577, %v1576
        %v1592 = vpack.c.b16 %v1579, %v1578
        %v1593 = vpack.c.b16 %v1581, %v1580
        %v1594 = vpack.c.b16 %v1583, %v1582
        %v1595 = vpack.c.b16 %v1585, %v1584
        %v1596 = vpack.c.b16 %v1587, %v1586
        %v1597 = vpack.c.b16 %v1589, %v1588
        %1606 = vmatprep.subr.bf16.mxu0 0
        %1607 = vmatpush1.bf16.msra.mxu0 %v1590
        %1608 = vmatprep.subr.bf16.mxu0 0
        %1609 = vmatpush1.bf16.msra.mxu0 %v1591
        %1610 = vmatprep.subr.bf16.mxu0 0
        %1611 = vmatpush1.bf16.msra.mxu0 %v1592
        %1612 = vmatprep.subr.bf16.mxu0 0
        %1613 = vmatpush1.bf16.msra.mxu0 %v1593
        %1614 = vmatprep.subr.bf16.mxu0 0
        %1615 = vmatpush1.bf16.msra.mxu0 %v1594
        %1616 = vmatprep.subr.bf16.mxu0 0
        %1617 = vmatpush1.bf16.msra.mxu0 %v1595
        %1618 = vmatprep.subr.bf16.mxu0 0
        %1619 = vmatpush1.bf16.msra.mxu0 %v1596
        %1620 = vmatprep.subr.bf16.mxu0 0
        %1621 = vmatpush1.bf16.msra.mxu0 %v1597
        %1622 = vmatprep.subr.bf16.mxu0 0
        %1623 = vmatpush1.bf16.msra.mxu0 0
        %1624 = vmatprep.subr.bf16.mxu0 0
        %1625 = vmatpush1.bf16.msra.mxu0 0
        %1626 = vmatprep.subr.bf16.mxu0 0
        %1627 = vmatpush1.bf16.msra.mxu0 0
        %1628 = vmatprep.subr.bf16.mxu0 0
        %1629 = vmatpush1.bf16.msra.mxu0 0
        %1630 = vmatprep.subr.bf16.mxu0 0
        %1631 = vmatpush1.bf16.msra.mxu0 0
        %1632 = vmatprep.subr.bf16.mxu0 0
        %1633 = vmatpush1.bf16.msra.mxu0 0
        %1634 = vmatprep.subr.bf16.mxu0 0
        %1635 = vmatpush1.bf16.msra.mxu0 0
        %1636 = vmatprep.subr.bf16.mxu0 0
        %1637 = vmatpush1.bf16.msra.mxu0 0
        %1638 = vmatprep.mubr.bf16.mxu0 0
        %1639 = vmatmul.mubr.bf16.gmra.mrb[0].mxu0 %v1534
        %v1640 = vpop.f32.mrb[0].mxu0
        %v1641 = vadd.f32 %v1556, %v1640
        %v1642 = vpop.f32.mrb[0].mxu0
        %v1643 = vpop.f32.mrb[0].mxu0
        %v1644 = vpop.f32.mrb[0].mxu0
        %1645 = vdwg.mxu0
        %v1646 = vadd.f32 %v1641, %v744
        %v1647 = vld [vmem:[%s7] sm:$0x1]
        %v1648 = vld [vmem:[%s8] sm:$0x1]
        %1649 = vadd.xlane.f32.xlu0 %v1646
        %v1650 = vpop.xlane.xlu0 %1649
        %v1651 = vmul.f32 %v1650, %v749
        %v1652 = vsub.f32 %v1646, %v1651
        %v1653 = vmul.f32 %v1652, %v1652
        %1654 = vadd.xlane.f32.xlu0 %v1653
        %v1655 = vpop.xlane.xlu0 %1654
        %v1656 = vmul.f32 %v1655, %v749
        %v1657 = vadd.f32 %v1656, 1e-05
        %v1658 = vrsqrt.pop %v1657
        %v1659 = vmul.f32 %v1652, %v1658
        %v1661 = vlaneseq
        %v1662 = vshrl.u32 %v1661, 7
        %v1663 = vsub.s32 0, %v1662
        %v1664 = vrot.slane %v1647, %v1663
        %v1666 = vmul.f32 %v1659, %v1664
        %v1668 = vlaneseq
        %v1669 = vshrl.u32 %v1668, 7
        %v1670 = vsub.s32 0, %v1669
        %v1671 = vrot.slane %v1648, %v1670
        %v1673 = vadd.f32 %v1666, %v1671
        %v1674 = vpack.c.bf16 %v1673, %v1673
        %v1675 = vld [vmem:[#allocation11] sm:$0xff]
        %v1676 = vld [vmem:[#allocation11 + $0x8] sm:$0xff]
        %v1677 = vld [vmem:[#allocation11 + $0x10] sm:$0xff]
        %v1678 = vld [vmem:[#allocation11 + $0x18] sm:$0xff]
        %v1679 = vld [vmem:[#allocation11 + $0x20] sm:$0xff]
        %v1680 = vld [vmem:[#allocation11 + $0x28] sm:$0xff]
        %v1681 = vld [vmem:[#allocation11 + $0x30] sm:$0xff]
        %v1682 = vld [vmem:[#allocation11 + $0x38] sm:$0xff]
        %v1683 = vld [vmem:[#allocation11 + $0x40] sm:$0xff]
        %v1684 = vld [vmem:[#allocation11 + $0x48] sm:$0xff]
        %v1685 = vld [vmem:[#allocation11 + $0x50] sm:$0xff]
        %v1686 = vld [vmem:[#allocation11 + $0x58] sm:$0xff]
        %v1687 = vld [vmem:[#allocation11 + $0x60] sm:$0xff]
        %v1688 = vld [vmem:[#allocation11 + $0x68] sm:$0xff]
        %v1689 = vld [vmem:[#allocation11 + $0x70] sm:$0xff]
        %v1690 = vld [vmem:[#allocation11 + $0x78] sm:$0xff]
        %v1691 = vld [vmem:[#allocation11 + $0x80] sm:$0xff]
        %v1692 = vld [vmem:[#allocation11 + $0x88] sm:$0xff]
        %v1693 = vld [vmem:[#allocation11 + $0x90] sm:$0xff]
        %v1694 = vld [vmem:[#allocation11 + $0x98] sm:$0xff]
        %v1695 = vld [vmem:[#allocation11 + $0xa0] sm:$0xff]
        %v1696 = vld [vmem:[#allocation11 + $0xa8] sm:$0xff]
        %v1697 = vld [vmem:[#allocation11 + $0xb0] sm:$0xff]
        %v1698 = vld [vmem:[#allocation11 + $0xb8] sm:$0xff]
        %v1699 = vld [vmem:[#allocation11 + $0xc0] sm:$0xff]
        %v1700 = vld [vmem:[#allocation11 + $0xc8] sm:$0xff]
        %v1701 = vld [vmem:[#allocation11 + $0xd0] sm:$0xff]
        %v1702 = vld [vmem:[#allocation11 + $0xd8] sm:$0xff]
        %v1703 = vld [vmem:[#allocation11 + $0xe0] sm:$0xff]
        %v1704 = vld [vmem:[#allocation11 + $0xe8] sm:$0xff]
        %v1705 = vld [vmem:[#allocation11 + $0xf0] sm:$0xff]
        %v1706 = vld [vmem:[#allocation11 + $0xf8] sm:$0xff]
        %v1707 = vld [vmem:[%s16] sm:$0xf]
        %v1709 = vlaneseq
        %v1710 = vshrl.u32 %v1709, 7
        %v1711 = vsub.s32 0, %v1710
        %v1712 = vrot.slane %v1707, %v1711
        %v1713 = vlaneseq
        %v1714 = vshrl.u32 %v1713, 7
        %v1715 = vsub.s32 1, %v1714
        %v1716 = vrot.slane %v1707, %v1715
        %v1717 = vlaneseq
        %v1718 = vshrl.u32 %v1717, 7
        %v1719 = vsub.s32 2, %v1718
        %v1720 = vrot.slane %v1707, %v1719
        %v1721 = vlaneseq
        %v1722 = vshrl.u32 %v1721, 7
        %v1723 = vsub.s32 3, %v1722
        %v1724 = vrot.slane %v1707, %v1723
        %v1761 = vunpack.c.l.b16 %v1675
        %v1762 = vunpack.c.h.b16 %v1675
        %v1763 = vunpack.c.l.b16 %v1676
        %v1764 = vunpack.c.h.b16 %v1676
        %v1765 = vunpack.c.l.b16 %v1677
        %v1766 = vunpack.c.h.b16 %v1677
        %v1767 = vunpack.c.l.b16 %v1678
        %v1768 = vunpack.c.h.b16 %v1678
        %v1769 = vunpack.c.l.b16 %v1679
        %v1770 = vunpack.c.h.b16 %v1679
        %v1771 = vunpack.c.l.b16 %v1680
        %v1772 = vunpack.c.h.b16 %v1680
        %v1773 = vunpack.c.l.b16 %v1681
        %v1774 = vunpack.c.h.b16 %v1681
        %v1775 = vunpack.c.l.b16 %v1682
        %v1776 = vunpack.c.h.b16 %v1682
        %v1777 = vunpack.c.l.b16 %v1683
        %v1778 = vunpack.c.h.b16 %v1683
        %v1779 = vunpack.c.l.b16 %v1684
        %v1780 = vunpack.c.h.b16 %v1684
        %v1781 = vunpack.c.l.b16 %v1685
        %v1782 = vunpack.c.h.b16 %v1685
        %v1783 = vunpack.c.l.b16 %v1686
        %v1784 = vunpack.c.h.b16 %v1686
        %v1785 = vunpack.c.l.b16 %v1687
        %v1786 = vunpack.c.h.b16 %v1687
        %v1787 = vunpack.c.l.b16 %v1688
        %v1788 = vunpack.c.h.b16 %v1688
        %v1789 = vunpack.c.l.b16 %v1689
        %v1790 = vunpack.c.h.b16 %v1689
        %v1791 = vunpack.c.l.b16 %v1690
        %v1792 = vunpack.c.h.b16 %v1690
        %v1793 = vunpack.c.l.b16 %v1691
        %v1794 = vunpack.c.h.b16 %v1691
        %v1795 = vunpack.c.l.b16 %v1692
        %v1796 = vunpack.c.h.b16 %v1692
        %v1797 = vunpack.c.l.b16 %v1693
        %v1798 = vunpack.c.h.b16 %v1693
        %v1799 = vunpack.c.l.b16 %v1694
        %v1800 = vunpack.c.h.b16 %v1694
        %v1801 = vunpack.c.l.b16 %v1695
        %v1802 = vunpack.c.h.b16 %v1695
        %v1803 = vunpack.c.l.b16 %v1696
        %v1804 = vunpack.c.h.b16 %v1696
        %v1805 = vunpack.c.l.b16 %v1697
        %v1806 = vunpack.c.h.b16 %v1697
        %v1807 = vunpack.c.l.b16 %v1698
        %v1808 = vunpack.c.h.b16 %v1698
        %v1809 = vunpack.c.l.b16 %v1699
        %v1810 = vunpack.c.h.b16 %v1699
        %v1811 = vunpack.c.l.b16 %v1700
        %v1812 = vunpack.c.h.b16 %v1700
        %v1813 = vunpack.c.l.b16 %v1701
        %v1814 = vunpack.c.h.b16 %v1701
        %v1815 = vunpack.c.l.b16 %v1702
        %v1816 = vunpack.c.h.b16 %v1702
        %v1817 = vunpack.c.l.b16 %v1703
        %v1818 = vunpack.c.h.b16 %v1703
        %v1819 = vunpack.c.l.b16 %v1704
        %v1820 = vunpack.c.h.b16 %v1704
        %v1821 = vunpack.c.l.b16 %v1705
        %v1822 = vunpack.c.h.b16 %v1705
        %v1823 = vunpack.c.l.b16 %v1706
        %v1824 = vunpack.c.h.b16 %v1706
        %v1825 = vpack.c.b16 %v1765, %v1761
        %v1826 = vpack.c.b16 %v1766, %v1762
        %v1827 = vpack.c.b16 %v1767, %v1763
        %v1828 = vpack.c.b16 %v1768, %v1764
        %v1829 = vpack.c.b16 %v1773, %v1769
        %v1830 = vpack.c.b16 %v1774, %v1770
        %v1831 = vpack.c.b16 %v1775, %v1771
        %v1832 = vpack.c.b16 %v1776, %v1772
        %v1833 = vpack.c.b16 %v1781, %v1777
        %v1834 = vpack.c.b16 %v1782, %v1778
        %v1835 = vpack.c.b16 %v1783, %v1779
        %v1836 = vpack.c.b16 %v1784, %v1780
        %v1837 = vpack.c.b16 %v1789, %v1785
        %v1838 = vpack.c.b16 %v1790, %v1786
        %v1839 = vpack.c.b16 %v1791, %v1787
        %v1840 = vpack.c.b16 %v1792, %v1788
        %v1841 = vpack.c.b16 %v1797, %v1793
        %v1842 = vpack.c.b16 %v1798, %v1794
        %v1843 = vpack.c.b16 %v1799, %v1795
        %v1844 = vpack.c.b16 %v1800, %v1796
        %v1845 = vpack.c.b16 %v1805, %v1801
        %v1846 = vpack.c.b16 %v1806, %v1802
        %v1847 = vpack.c.b16 %v1807, %v1803
        %v1848 = vpack.c.b16 %v1808, %v1804
        %v1849 = vpack.c.b16 %v1813, %v1809
        %v1850 = vpack.c.b16 %v1814, %v1810
        %v1851 = vpack.c.b16 %v1815, %v1811
        %v1852 = vpack.c.b16 %v1816, %v1812
        %v1853 = vpack.c.b16 %v1821, %v1817
        %v1854 = vpack.c.b16 %v1822, %v1818
        %v1855 = vpack.c.b16 %v1823, %v1819
        %v1856 = vpack.c.b16 %v1824, %v1820
        %1889 = vmatprep.subr.bf16.mxu0 %v1826
        %1890 = vmatpush1.bf16.msra.mxu0 %v1825
        %1891 = vmatprep.subr.bf16.mxu0 %v1830
        %1892 = vmatpush1.bf16.msra.mxu0 %v1829
        %1893 = vmatprep.subr.bf16.mxu0 %v1834
        %1894 = vmatpush1.bf16.msra.mxu0 %v1833
        %1895 = vmatprep.subr.bf16.mxu0 %v1838
        %1896 = vmatpush1.bf16.msra.mxu0 %v1837
        %1897 = vmatprep.subr.bf16.mxu0 %v1842
        %1898 = vmatpush1.bf16.msra.mxu0 %v1841
        %1899 = vmatprep.subr.bf16.mxu0 %v1846
        %1900 = vmatpush1.bf16.msra.mxu0 %v1845
        %1901 = vmatprep.subr.bf16.mxu0 %v1850
        %1902 = vmatpush1.bf16.msra.mxu0 %v1849
        %1903 = vmatprep.subr.bf16.mxu0 %v1854
        %1904 = vmatpush1.bf16.msra.mxu0 %v1853
        %1905 = vmatprep.subr.bf16.mxu0 0
        %1906 = vmatpush1.bf16.msra.mxu0 0
        %1907 = vmatprep.subr.bf16.mxu0 0
        %1908 = vmatpush1.bf16.msra.mxu0 0
        %1909 = vmatprep.subr.bf16.mxu0 0
        %1910 = vmatpush1.bf16.msra.mxu0 0
        %1911 = vmatprep.subr.bf16.mxu0 0
        %1912 = vmatpush1.bf16.msra.mxu0 0
        %1913 = vmatprep.subr.bf16.mxu0 0
        %1914 = vmatpush1.bf16.msra.mxu0 0
        %1915 = vmatprep.subr.bf16.mxu0 0
        %1916 = vmatpush1.bf16.msra.mxu0 0
        %1917 = vmatprep.subr.bf16.mxu0 0
        %1918 = vmatpush1.bf16.msra.mxu0 0
        %1919 = vmatprep.subr.bf16.mxu0 0
        %1920 = vmatpush1.bf16.msra.mxu0 0
        %1921 = vmatprep.mubr.bf16.mxu0 0
        %1922 = vmatmul.mubr.bf16.gmra.mrb[0].mxu0 %v1674
        %v1923 = vpop.f32.mrb[0].mxu0
        %v1924 = vadd.f32 %v1712, %v1923
        %v1925 = vpop.f32.mrb[0].mxu0
        %v1926 = vadd.f32 %v1716, %v1925
        %v1927 = vpop.f32.mrb[0].mxu0
        %v1928 = vpop.f32.mrb[0].mxu0
        %1929 = vdwg.mxu0
        %1930 = vmatprep.subr.bf16.mxu0 %v1828
        %1931 = vmatpush1.bf16.msra.mxu0 %v1827
        %1932 = vmatprep.subr.bf16.mxu0 %v1832
        %1933 = vmatpush1.bf16.msra.mxu0 %v1831
        %1934 = vmatprep.subr.bf16.mxu0 %v1836
        %1935 = vmatpush1.bf16.msra.mxu0 %v1835
        %1936 = vmatprep.subr.bf16.mxu0 %v1840
        %1937 = vmatpush1.bf16.msra.mxu0 %v1839
        %1938 = vmatprep.subr.bf16.mxu0 %v1844
        %1939 = vmatpush1.bf16.msra.mxu0 %v1843
        %1940 = vmatprep.subr.bf16.mxu0 %v1848
        %1941 = vmatpush1.bf16.msra.mxu0 %v1847
        %1942 = vmatprep.subr.bf16.mxu0 %v1852
        %1943 = vmatpush1.bf16.msra.mxu0 %v1851
        %1944 = vmatprep.subr.bf16.mxu0 %v1856
        %1945 = vmatpush1.bf16.msra.mxu0 %v1855
        %1946 = vmatprep.subr.bf16.mxu0 0
        %1947 = vmatpush1.bf16.msra.mxu0 0
        %1948 = vmatprep.subr.bf16.mxu0 0
        %1949 = vmatpush1.bf16.msra.mxu0 0
        %1950 = vmatprep.subr.bf16.mxu0 0
        %1951 = vmatpush1.bf16.msra.mxu0 0
        %1952 = vmatprep.subr.bf16.mxu0 0
        %1953 = vmatpush1.bf16.msra.mxu0 0
        %1954 = vmatprep.subr.bf16.mxu0 0
        %1955 = vmatpush1.bf16.msra.mxu0 0
        %1956 = vmatprep.subr.bf16.mxu0 0
        %1957 = vmatpush1.bf16.msra.mxu0 0
        %1958 = vmatprep.subr.bf16.mxu0 0
        %1959 = vmatpush1.bf16.msra.mxu0 0
        %1960 = vmatprep.subr.bf16.mxu0 0
        %1961 = vmatpush1.bf16.msra.mxu0 0
        %1962 = vmatprep.mubr.bf16.mxu0 0
        %1963 = vmatmul.mubr.bf16.gmra.mrb[0].mxu0 %v1674
        %v1964 = vpop.f32.mrb[0].mxu0
        %v1965 = vadd.f32 %v1720, %v1964
        %v1966 = vpop.f32.mrb[0].mxu0
        %v1967 = vadd.f32 %v1724, %v1966
        %v1968 = vpop.f32.mrb[0].mxu0
        %v1969 = vpop.f32.mrb[0].mxu0
        %1970 = vdwg.mxu0
        %v1971 = vmul.f32 %v1924, %v1924
        %v1972 = vmul.f32 %v1926, %v1926
        %v1973 = vmul.f32 %v1965, %v1965
        %v1974 = vmul.f32 %v1967, %v1967
        %v1975 = vmul.f32 %v1924, %v1971
        %v1976 = vmul.f32 %v1926, %v1972
        %v1977 = vmul.f32 %v1965, %v1973
        %v1978 = vmul.f32 %v1967, %v1974
        %v1979 = vmul.f32 %v1975, 0.044715
        %v1980 = vmul.f32 %v1976, 0.044715
        %v1981 = vmul.f32 %v1977, 0.044715
        %v1982 = vmul.f32 %v1978, 0.044715
        %v1983 = vadd.f32 %v1924, %v1979
        %v1984 = vadd.f32 %v1926, %v1980
        %v1985 = vadd.f32 %v1965, %v1981
        %v1986 = vadd.f32 %v1967, %v1982
        %v1987 = vmul.f32 %v1983, 0.7978846
        %v1988 = vmul.f32 %v1984, 0.7978846
        %v1989 = vmul.f32 %v1985, 0.7978846
        %v1990 = vmul.f32 %v1986, 0.7978846
        %v1991 = vtanh.pop %v1987
        %v1992 = vtanh.pop %v1988
        %v1993 = vtanh.pop %v1989
        %v1994 = vtanh.pop %v1990
        %v1995 = vadd.f32 %v1991, 1.0
        %v1996 = vadd.f32 %v1992, 1.0
        %v1997 = vadd.f32 %v1993, 1.0
        %v1998 = vadd.f32 %v1994, 1.0
        %v1999 = vmul.f32 %v1995, 0.5
        %v2000 = vmul.f32 %v1996, 0.5
        %v2001 = vmul.f32 %v1997, 0.5
        %v2002 = vmul.f32 %v1998, 0.5
        %v2003 = vmul.f32 %v1924, %v1999
        %v2004 = vmul.f32 %v1926, %v2000
        %v2005 = vmul.f32 %v1965, %v2001
        %v2006 = vmul.f32 %v1967, %v2002
        %v2007 = vpack.c.bf16 %v2003, %v2003
        %v2008 = vpack.c.bf16 %v2004, %v2004
        %v2009 = vpack.c.bf16 %v2005, %v2005
        %v2010 = vpack.c.bf16 %v2006, %v2006
        %v2011 = vld [vmem:[#allocation13] sm:$0xf]
        %v2012 = vld [vmem:[#allocation13 + $0x4] sm:$0xf]
        %v2013 = vld [vmem:[#allocation13 + $0x8] sm:$0xf]
        %v2014 = vld [vmem:[#allocation13 + $0xc] sm:$0xf]
        %v2015 = vld [vmem:[#allocation13 + $0x10] sm:$0xf]
        %v2016 = vld [vmem:[#allocation13 + $0x14] sm:$0xf]
        %v2017 = vld [vmem:[#allocation13 + $0x18] sm:$0xf]
        %v2018 = vld [vmem:[#allocation13 + $0x1c] sm:$0xf]
        %v2019 = vld [vmem:[#allocation13 + $0x20] sm:$0xf]
        %v2020 = vld [vmem:[#allocation13 + $0x24] sm:$0xf]
        %v2021 = vld [vmem:[#allocation13 + $0x28] sm:$0xf]
        %v2022 = vld [vmem:[#allocation13 + $0x2c] sm:$0xf]
        %v2023 = vld [vmem:[#allocation13 + $0x30] sm:$0xf]
        %v2024 = vld [vmem:[#allocation13 + $0x34] sm:$0xf]
        %v2025 = vld [vmem:[#allocation13 + $0x38] sm:$0xf]
        %v2026 = vld [vmem:[#allocation13 + $0x3c] sm:$0xf]
        %v2027 = vld [vmem:[#allocation13 + $0x40] sm:$0xf]
        %v2028 = vld [vmem:[#allocation13 + $0x44] sm:$0xf]
        %v2029 = vld [vmem:[#allocation13 + $0x48] sm:$0xf]
        %v2030 = vld [vmem:[#allocation13 + $0x4c] sm:$0xf]
        %v2031 = vld [vmem:[#allocation13 + $0x50] sm:$0xf]
        %v2032 = vld [vmem:[#allocation13 + $0x54] sm:$0xf]
        %v2033 = vld [vmem:[#allocation13 + $0x58] sm:$0xf]
        %v2034 = vld [vmem:[#allocation13 + $0x5c] sm:$0xf]
        %v2035 = vld [vmem:[#allocation13 + $0x60] sm:$0xf]
        %v2036 = vld [vmem:[#allocation13 + $0x64] sm:$0xf]
        %v2037 = vld [vmem:[#allocation13 + $0x68] sm:$0xf]
        %v2038 = vld [vmem:[#allocation13 + $0x6c] sm:$0xf]
        %v2039 = vld [vmem:[#allocation13 + $0x70] sm:$0xf]
        %v2040 = vld [vmem:[#allocation13 + $0x74] sm:$0xf]
        %v2041 = vld [vmem:[#allocation13 + $0x78] sm:$0xf]
        %v2042 = vld [vmem:[#allocation13 + $0x7c] sm:$0xf]
        %v2043 = vld [vmem:[#allocation13 + $0x80] sm:$0xf]
        %v2044 = vld [vmem:[#allocation13 + $0x84] sm:$0xf]
        %v2045 = vld [vmem:[#allocation13 + $0x88] sm:$0xf]
        %v2046 = vld [vmem:[#allocation13 + $0x8c] sm:$0xf]
        %v2047 = vld [vmem:[#allocation13 + $0x90] sm:$0xf]
        %v2048 = vld [vmem:[#allocation13 + $0x94] sm:$0xf]
        %v2049 = vld [vmem:[#allocation13 + $0x98] sm:$0xf]
        %v2050 = vld [vmem:[#allocation13 + $0x9c] sm:$0xf]
        %v2051 = vld [vmem:[#allocation13 + $0xa0] sm:$0xf]
        %v2052 = vld [vmem:[#allocation13 + $0xa4] sm:$0xf]
        %v2053 = vld [vmem:[#allocation13 + $0xa8] sm:$0xf]
        %v2054 = vld [vmem:[#allocation13 + $0xac] sm:$0xf]
        %v2055 = vld [vmem:[#allocation13 + $0xb0] sm:$0xf]
        %v2056 = vld [vmem:[#allocation13 + $0xb4] sm:$0xf]
        %v2057 = vld [vmem:[#allocation13 + $0xb8] sm:$0xf]
        %v2058 = vld [vmem:[#allocation13 + $0xbc] sm:$0xf]
        %v2059 = vld [vmem:[#allocation13 + $0xc0] sm:$0xf]
        %v2060 = vld [vmem:[#allocation13 + $0xc4] sm:$0xf]
        %v2061 = vld [vmem:[#allocation13 + $0xc8] sm:$0xf]
        %v2062 = vld [vmem:[#allocation13 + $0xcc] sm:$0xf]
        %v2063 = vld [vmem:[#allocation13 + $0xd0] sm:$0xf]
        %v2064 = vld [vmem:[#allocation13 + $0xd4] sm:$0xf]
        %v2065 = vld [vmem:[#allocation13 + $0xd8] sm:$0xf]
        %v2066 = vld [vmem:[#allocation13 + $0xdc] sm:$0xf]
        %v2067 = vld [vmem:[#allocation13 + $0xe0] sm:$0xf]
        %v2068 = vld [vmem:[#allocation13 + $0xe4] sm:$0xf]
        %v2069 = vld [vmem:[#allocation13 + $0xe8] sm:$0xf]
        %v2070 = vld [vmem:[#allocation13 + $0xec] sm:$0xf]
        %v2071 = vld [vmem:[#allocation13 + $0xf0] sm:$0xf]
        %v2072 = vld [vmem:[#allocation13 + $0xf4] sm:$0xf]
        %v2073 = vld [vmem:[#allocation13 + $0xf8] sm:$0xf]
        %v2074 = vld [vmem:[#allocation13 + $0xfc] sm:$0xf]
        %v2075 = vld [vmem:[%s18] sm:$0x1]
        %v2077 = vlaneseq
        %v2078 = vshrl.u32 %v2077, 7
        %v2079 = vsub.s32 0, %v2078
        %v2080 = vrot.slane %v2075, %v2079
        %v2146 = vunpack.c.l.b16 %v2011
        %v2147 = vunpack.c.l.b16 %v2012
        %v2148 = vunpack.c.l.b16 %v2013
        %v2149 = vunpack.c.l.b16 %v2014
        %v2150 = vunpack.c.l.b16 %v2015
        %v2151 = vunpack.c.l.b16 %v2016
        %v2152 = vunpack.c.l.b16 %v2017
        %v2153 = vunpack.c.l.b16 %v2018
        %v2154 = vunpack.c.l.b16 %v2019
        %v2155 = vunpack.c.l.b16 %v2020
        %v2156 = vunpack.c.l.b16 %v2021
        %v2157 = vunpack.c.l.b16 %v2022
        %v2158 = vunpack.c.l.b16 %v2023
        %v2159 = vunpack.c.l.b16 %v2024
        %v2160 = vunpack.c.l.b16 %v2025
        %v2161 = vunpack.c.l.b16 %v2026
        %v2162 = vunpack.c.l.b16 %v2027
        %v2163 = vunpack.c.l.b16 %v2028
        %v2164 = vunpack.c.l.b16 %v2029
        %v2165 = vunpack.c.l.b16 %v2030
        %v2166 = vunpack.c.l.b16 %v2031
        %v2167 = vunpack.c.l.b16 %v2032
        %v2168 = vunpack.c.l.b16 %v2033
        %v2169 = vunpack.c.l.b16 %v2034
        %v2170 = vunpack.c.l.b16 %v2035
        %v2171 = vunpack.c.l.b16 %v2036
        %v2172 = vunpack.c.l.b16 %v2037
        %v2173 = vunpack.c.l.b16 %v2038
        %v2174 = vunpack.c.l.b16 %v2039
        %v2175 = vunpack.c.l.b16 %v2040
        %v2176 = vunpack.c.l.b16 %v2041
        %v2177 = vunpack.c.l.b16 %v2042
        %v2178 = vunpack.c.l.b16 %v2043
        %v2179 = vunpack.c.l.b16 %v2044
        %v2180 = vunpack.c.l.b16 %v2045
        %v2181 = vunpack.c.l.b16 %v2046
        %v2182 = vunpack.c.l.b16 %v2047
        %v2183 = vunpack.c.l.b16 %v2048
        %v2184 = vunpack.c.l.b16 %v2049
        %v2185 = vunpack.c.l.b16 %v2050
        %v2186 = vunpack.c.l.b16 %v2051
        %v2187 = vunpack.c.l.b16 %v2052
        %v2188 = vunpack.c.l.b16 %v2053
        %v2189 = vunpack.c.l.b16 %v2054
        %v2190 = vunpack.c.l.b16 %v2055
        %v2191 = vunpack.c.l.b16 %v2056
        %v2192 = vunpack.c.l.b16 %v2057
        %v2193 = vunpack.c.l.b16 %v2058
        %v2194 = vunpack.c.l.b16 %v2059
        %v2195 = vunpack.c.l.b16 %v2060
        %v2196 = vunpack.c.l.b16 %v2061
        %v2197 = vunpack.c.l.b16 %v2062
        %v2198 = vunpack.c.l.b16 %v2063
        %v2199 = vunpack.c.l.b16 %v2064
        %v2200 = vunpack.c.l.b16 %v2065
        %v2201 = vunpack.c.l.b16 %v2066
        %v2202 = vunpack.c.l.b16 %v2067
        %v2203 = vunpack.c.l.b16 %v2068
        %v2204 = vunpack.c.l.b16 %v2069
        %v2205 = vunpack.c.l.b16 %v2070
        %v2206 = vunpack.c.l.b16 %v2071
        %v2207 = vunpack.c.l.b16 %v2072
        %v2208 = vunpack.c.l.b16 %v2073
        %v2209 = vunpack.c.l.b16 %v2074
        %v2210 = vpack.c.b16 %v2147, %v2146
        %v2211 = vpack.c.b16 %v2149, %v2148
        %v2212 = vpack.c.b16 %v2151, %v2150
        %v2213 = vpack.c.b16 %v2153, %v2152
        %v2214 = vpack.c.b16 %v2155, %v2154
        %v2215 = vpack.c.b16 %v2157, %v2156
        %v2216 = vpack.c.b16 %v2159, %v2158
        %v2217 = vpack.c.b16 %v2161, %v2160
        %v2218 = vpack.c.b16 %v2163, %v2162
        %v2219 = vpack.c.b16 %v2165, %v2164
        %v2220 = vpack.c.b16 %v2167, %v2166
        %v2221 = vpack.c.b16 %v2169, %v2168
        %v2222 = vpack.c.b16 %v2171, %v2170
        %v2223 = vpack.c.b16 %v2173, %v2172
        %v2224 = vpack.c.b16 %v2175, %v2174
        %v2225 = vpack.c.b16 %v2177, %v2176
        %v2226 = vpack.c.b16 %v2179, %v2178
        %v2227 = vpack.c.b16 %v2181, %v2180
        %v2228 = vpack.c.b16 %v2183, %v2182
        %v2229 = vpack.c.b16 %v2185, %v2184
        %v2230 = vpack.c.b16 %v2187, %v2186
        %v2231 = vpack.c.b16 %v2189, %v2188
        %v2232 = vpack.c.b16 %v2191, %v2190
        %v2233 = vpack.c.b16 %v2193, %v2192
        %v2234 = vpack.c.b16 %v2195, %v2194
        %v2235 = vpack.c.b16 %v2197, %v2196
        %v2236 = vpack.c.b16 %v2199, %v2198
        %v2237 = vpack.c.b16 %v2201, %v2200
        %v2238 = vpack.c.b16 %v2203, %v2202
        %v2239 = vpack.c.b16 %v2205, %v2204
        %v2240 = vpack.c.b16 %v2207, %v2206
        %v2241 = vpack.c.b16 %v2209, %v2208
        %2274 = vmatprep.subr.bf16.mxu0 0
        %2275 = vmatpush1.bf16.msra.mxu0 %v2210
        %2276 = vmatprep.subr.bf16.mxu0 0
        %2277 = vmatpush1.bf16.msra.mxu0 %v2211
        %2278 = vmatprep.subr.bf16.mxu0 0
        %2279 = vmatpush1.bf16.msra.mxu0 %v2212
        %2280 = vmatprep.subr.bf16.mxu0 0
        %2281 = vmatpush1.bf16.msra.mxu0 %v2213
        %2282 = vmatprep.subr.bf16.mxu0 0
        %2283 = vmatpush1.bf16.msra.mxu0 %v2214
        %2284 = vmatprep.subr.bf16.mxu0 0
        %2285 = vmatpush1.bf16.msra.mxu0 %v2215
        %2286 = vmatprep.subr.bf16.mxu0 0
        %2287 = vmatpush1.bf16.msra.mxu0 %v2216
        %2288 = vmatprep.subr.bf16.mxu0 0
        %2289 = vmatpush1.bf16.msra.mxu0 %v2217
        %2290 = vmatprep.subr.bf16.mxu0 0
        %2291 = vmatpush1.bf16.msra.mxu0 %v2218
        %2292 = vmatprep.subr.bf16.mxu0 0
        %2293 = vmatpush1.bf16.msra.mxu0 %v2219
        %2294 = vmatprep.subr.bf16.mxu0 0
        %2295 = vmatpush1.bf16.msra.mxu0 %v2220
        %2296 = vmatprep.subr.bf16.mxu0 0
        %2297 = vmatpush1.bf16.msra.mxu0 %v2221
        %2298 = vmatprep.subr.bf16.mxu0 0
        %2299 = vmatpush1.bf16.msra.mxu0 %v2222
        %2300 = vmatprep.subr.bf16.mxu0 0
        %2301 = vmatpush1.bf16.msra.mxu0 %v2223
        %2302 = vmatprep.subr.bf16.mxu0 0
        %2303 = vmatpush1.bf16.msra.mxu0 %v2224
        %2304 = vmatprep.subr.bf16.mxu0 0
        %2305 = vmatpush1.bf16.msra.mxu0 %v2225
        %2306 = vmatprep.mubr.bf16.mxu0 %v2008
        %2307 = vmatmul.mubr.bf16.gmra.mrb[0].mxu0 %v2007
        %v2308 = vpop.f32.mrb[0].mxu0
        %v2309 = vadd.f32 %v2080, %v2308
        %v2310 = vpop.f32.mrb[0].mxu0
        %v2311 = vpop.f32.mrb[0].mxu0
        %v2312 = vpop.f32.mrb[0].mxu0
        %2313 = vdwg.mxu0
        %2314 = vmatprep.subr.bf16.mxu0 0
        %2315 = vmatpush1.bf16.msra.mxu0 %v2226
        %2316 = vmatprep.subr.bf16.mxu0 0
        %2317 = vmatpush1.bf16.msra.mxu0 %v2227
        %2318 = vmatprep.subr.bf16.mxu0 0
        %2319 = vmatpush1.bf16.msra.mxu0 %v2228
        %2320 = vmatprep.subr.bf16.mxu0 0
        %2321 = vmatpush1.bf16.msra.mxu0 %v2229
        %2322 = vmatprep.subr.bf16.mxu0 0
        %2323 = vmatpush1.bf16.msra.mxu0 %v2230
        %2324 = vmatprep.subr.bf16.mxu0 0
        %2325 = vmatpush1.bf16.msra.mxu0 %v2231
        %2326 = vmatprep.subr.bf16.mxu0 0
        %2327 = vmatpush1.bf16.msra.mxu0 %v2232
        %2328 = vmatprep.subr.bf16.mxu0 0
        %2329 = vmatpush1.bf16.msra.mxu0 %v2233
        %2330 = vmatprep.subr.bf16.mxu0 0
        %2331 = vmatpush1.bf16.msra.mxu0 %v2234
        %2332 = vmatprep.subr.bf16.mxu0 0
        %2333 = vmatpush1.bf16.msra.mxu0 %v2235
        %2334 = vmatprep.subr.bf16.mxu0 0
        %2335 = vmatpush1.bf16.msra.mxu0 %v2236
        %2336 = vmatprep.subr.bf16.mxu0 0
        %2337 = vmatpush1.bf16.msra.mxu0 %v2237
        %2338 = vmatprep.subr.bf16.mxu0 0
        %2339 = vmatpush1.bf16.msra.mxu0 %v2238
        %2340 = vmatprep.subr.bf16.mxu0 0
        %2341 = vmatpush1.bf16.msra.mxu0 %v2239
        %2342 = vmatprep.subr.bf16.mxu0 0
        %2343 = vmatpush1.bf16.msra.mxu0 %v2240
        %2344 = vmatprep.subr.bf16.mxu0 0
        %2345 = vmatpush1.bf16.msra.mxu0 %v2241
        %2346 = vmatprep.mubr.bf16.mxu0 %v2010
        %2347 = vmatmul.mubr.bf16.gmra.mrb[0].mxu0 %v2009
        %v2348 = vpop.f32.mrb[0].mxu0
        %v2349 = vadd.f32 %v2309, %v2348
        %v2350 = vpop.f32.mrb[0].mxu0
        %v2351 = vpop.f32.mrb[0].mxu0
        %v2352 = vpop.f32.mrb[0].mxu0
        %2353 = vdwg.mxu0
        %v2354 = vadd.f32 %v2349, %v1646
        %2355 = vst [vmem:[%s737] sm:$0xff] %v2354
        %s2356 = sand.u32 %s463, 1
        %s2357 = scalar_lea.sflag [#allocation4], %s2356
        %s2358 = sand.u32 %s463, 1
        %s2359 = smul.addr %s2358, 8
        %s2360 = scalar_lea.vmem [#allocation14], %s2359
        // Predicated region
        $region125: #{tpu_custom_call.1} parent=95 // pred_check
          %p2361 = pneg %p473
        $region126: #{tpu_custom_call.1} parent=95 // pred_check_branch
          %2363 = sbr.rel (%p2361) target = $region128
        $region127: #{tpu_custom_call.1} parent=95 // pred_region
          %s2365 = ssub.s32 128, 128
          %2366 = vsyncadd %s2357, %s2365
          %s2367 = smul.addr %s41, 128
          %s2368 = scalar_lea.hbm %s19, %s2367
          %s2370 = sshll.u32 %s2360, 4
          %s2371 = int_to_ptr.vmem [resolvable:$true] %s2370
          %2373 = dma.vmem_to_hbm [thread:$0]  %s2371, 128, %s2368, %s2357
        $region128: #{tpu_custom_call.1} parent=95 // pred_fallthru
          _
      $region96: #{tpu_custom_call.1} parent=5 // pred_fallthru
        _
      %p2374 = scmp.le.s32.totalorder 2, %s36
      // Predicated region
      $region129: #{tpu_custom_call.1} parent=5 // pred_check
        %p2375 = pneg %p2374
      $region130: #{tpu_custom_call.1} parent=5 // pred_check_branch
        %2377 = sbr.rel (%p2375) target = $region132
      $region131: #{tpu_custom_call.1} parent=5 // pred_region
        %s2378 = ssub.s32 %s36, 2
        // Predicated region
        $region133: #{tpu_custom_call.1} parent=131 // pred_check
          %p2379 = pneg %p479
        $region134: #{tpu_custom_call.1} parent=131 // pred_check_branch
          %2381 = sbr.rel (%p2379) target = $region136
        $region135: #{tpu_custom_call.1} parent=131 // pred_region
          %s2382 = sand.u32 %s464, 1
          %s2383 = scalar_lea.sflag [#allocation4], %s2382
          %s2384 = sand.u32 %s464, 1
          %s2385 = smul.addr %s2384, 8
          %s2386 = scalar_lea.vmem [#allocation14], %s2385
          %2387 = dma.done %s2383, 128
        $region136: #{tpu_custom_call.1} parent=131 // pred_fallthru
          _
      $region132: #{tpu_custom_call.1} parent=5 // pred_fallthru
        _
    $region6: #{tpu_custom_call.1} parent=1 // loop_footer
      %s40 = sadd.s32 1, %s36
    $region7: #{tpu_custom_call.1} parent=1 // loop_footer_branch
      %35 = sbr.rel target = $region3
    $region8: #{tpu_custom_call.1} parent=1 // loop_exit
      _
    %2388 = vsyncpa [#allocation3], 1
    %s2389 = scalar_lea.sflag [#allocation3], 1
    %2390 = vsyncpa %s2389, 1
    %2391 = vsyncpa [#allocation6], 1
    %s2392 = scalar_lea.sflag [#allocation6], 1
    %2393 = vsyncpa %s2392, 1
    %2394 = vsyncpa [#allocation9], 1
    %2395 = vsyncpa [#allocation12], 1
    %2396 = vsyncpa [#allocation4], 1
    %s2397 = scalar_lea.sflag [#allocation4], 1
    %2398 = vsyncpa %s2397, 1

// kernel: tpu_custom_call.1
$region0: #{tpu_custom_call.1}
  #allocation0 [shape = 'u32[]', space=smem, size = 0x4, offset = 0x4, fixed_abs, tag = 'smem constant byte address 0x4 - core index']
  #allocation1 [shape = 'u32[144,128]{1,0:T(1,128)}', space=vmem, size = 0x12000, scoped, tag = 'internal scratch']
  %s0 = inlined_call_operand.hbm [shape: bf16[2,8,128], index: 0, kind: input, shape index: {}]
  %s1 = inlined_call_operand.hbm [shape: f32[2,8,128], index: 1, kind: input, shape index: {}]
  %s2 = inlined_call_operand.vmem [shape: f32[2,1,16], index: 2, kind: input, shape index: {}]
  %s3 = inlined_call_operand.vmem [shape: f32[1,128], index: 3, kind: input, shape index: {}]
  %s4 = inlined_call_operand.vmem [shape: f32[1,128], index: 4, kind: input, shape index: {}]
  %s5 = inlined_call_operand.vmem [shape: f32[1,128], index: 5, kind: input, shape index: {}]
  %s6 = inlined_call_operand.vmem [shape: f32[1,128], index: 6, kind: input, shape index: {}]
  %s7 = inlined_call_operand.vmem [shape: f32[1,128], index: 7, kind: input, shape index: {}]
  %s8 = inlined_call_operand.vmem [shape: f32[1,128], index: 8, kind: input, shape index: {}]
  %s9 = inlined_call_operand.hbm [shape: bf16[128,128], index: 9, kind: input, shape index: {}]
  %s10 = inlined_call_operand.vmem [shape: f32[1,128], index: 10, kind: input, shape index: {}]
  %s11 = inlined_call_operand.hbm [shape: bf16[128,256], index: 11, kind: input, shape index: {}]
  %s12 = inlined_call_operand.vmem [shape: f32[1,256], index: 12, kind: input, shape index: {}]
  %s13 = inlined_call_operand.hbm [shape: bf16[128,128], index: 13, kind: input, shape index: {}]
  %s14 = inlined_call_operand.vmem [shape: f32[1,128], index: 14, kind: input, shape index: {}]
  %s15 = inlined_call_operand.hbm [shape: bf16[128,512], index: 15, kind: input, shape index: {}]
  %s16 = inlined_call_operand.vmem [shape: f32[1,512], index: 16, kind: input, shape index: {}]
  %s17 = inlined_call_operand.hbm [shape: bf16[512,128], index: 17, kind: input, shape index: {}]
  %s18 = inlined_call_operand.vmem [shape: f32[1,128], index: 18, kind: input, shape index: {}]
  %s19 = inlined_call_operand.hbm [shape: f32[2,8,128], index: 19, kind: output, shape index: {}]
  %s20 = sld [smem:[#allocation0]]
  $region137: #{tpu_custom_call.1} parent=0
    _
  %s22 = ssub.s32 1, %s20
  %s23 = scalar_select 0, %s22, %s20
  $region1: #{tpu_custom_call.1} parent=0
    #allocation2 [shape = 'u8[4096]{0}', space=vmem, size = 0x1000, scoped, tag = 'input window, operand 0']
    #allocation3 [shape = 's32[2]{0}', space=sflag, size = 0x8, scoped, tag = 'scoped memory for tpu_custom_call.1']
    #allocation4 [shape = 's32[2]{0}', space=sflag, size = 0x8, scoped, tag = 'scoped memory for tpu_custom_call.1']
    #allocation5 [shape = 'u8[8192]{0}', space=vmem, size = 0x2000, scoped, tag = 'input window, operand 1']
    #allocation6 [shape = 's32[2]{0}', space=sflag, size = 0x8, scoped, tag = 'scoped memory for tpu_custom_call.1']
    #allocation7 [shape = 'u8[32768]{0}', space=vmem, size = 0x8000, scoped, tag = 'input window, operand 9, single buffered']
    #allocation8 [shape = 'u8[65536]{0}', space=vmem, size = 0x10000, scoped, tag = 'input window, operand 11, single buffered']
    #allocation9 [shape = 's32[1]{0}', space=sflag, size = 0x4, scoped, tag = 'scoped memory for tpu_custom_call.1']
    #allocation10 [shape = 'u8[32768]{0}', space=vmem, size = 0x8000, scoped, tag = 'input window, operand 13, single buffered']
    #allocation11 [shape = 'u8[131072]{0}', space=vmem, size = 0x20000, scoped, tag = 'input window, operand 15, single buffered']
    #allocation12 [shape = 's32[1]{0}', space=sflag, size = 0x4, scoped, tag = 'scoped memory for tpu_custom_call.1']
    #allocation13 [shape = 'u8[131072]{0}', space=vmem, size = 0x20000, scoped, tag = 'input window, operand 17, single buffered']
    #allocation14 [shape = 'u8[8192]{0}', space=vmem, size = 0x2000, scoped, tag = 'output window, operand 0']
    %24 = vsyncpa [#allocation3], 0
    %s25 = scalar_lea.sflag [#allocation3], 1
    %26 = vsyncpa %s25, 0
    %27 = vsyncpa [#allocation6], 0
    %s28 = scalar_lea.sflag [#allocation6], 1
    %29 = vsyncpa %s28, 0
    %30 = vsyncpa [#allocation9], 0
    %31 = vsyncpa [#allocation12], 0
    %32 = vsyncpa [#allocation4], 0
    %s33 = scalar_lea.sflag [#allocation4], 1
    %34 = vsyncpa %s33, 0
    loop: start=0, step=1, limit=4
    $region2: #{tpu_custom_call.1} parent=1 // loop_pre_header
      _
    $region3: #{tpu_custom_call.1} parent=1 // loop_header
      %s36 = sphi 0, %s40
      %p37 = scmp.ge.s32.totalorder %s36, 4
      %s46 = sphi 0, %s48
      %s49 = sphi 0, %s46
      %s50 = sphi 0, %s49
      %s66 = sphi 0, %s50
      %s72 = sphi 0, %s74
      %s75 = sphi 0, %s72
      %s76 = sphi 0, %s75
      %s92 = sphi 0, %s76
      %s98 = sphi 0, %s100
      %s101 = sphi 0, %s98
      %s102 = sphi 0, %s101
      %s118 = sphi 0, %s102
      %s122 = sphi 0, %s122
      %s124 = sphi 0, %s122
      %s125 = sphi 0, %s124
      %s139 = sphi 0, %s125
      %s143 = sphi 0, %s143
      %s145 = sphi 0, %s143
      %s146 = sphi 0, %s145
      %s160 = sphi 0, %s146
      %s164 = sphi 0, %s164
      %s166 = sphi 0, %s164
      %s167 = sphi 0, %s166
      %s181 = sphi 0, %s167
      %s185 = sphi 0, %s185
      %s187 = sphi 0, %s185
      %s188 = sphi 0, %s187
      %s202 = sphi 0, %s188
      %s206 = sphi 0, %s206
      %s208 = sphi 0, %s206
      %s209 = sphi 0, %s208
      %s223 = sphi 0, %s209
      %s227 = sphi 0, %s227
      %s229 = sphi 0, %s227
      %s230 = sphi 0, %s229
      %s244 = sphi 0, %s230
      %s248 = sphi 0, %s248
      %s250 = sphi 0, %s248
      %s251 = sphi 0, %s250
      %s265 = sphi 0, %s251
      %s269 = sphi 0, %s269
      %s271 = sphi 0, %s269
      %s272 = sphi 0, %s271
      %s286 = sphi 0, %s272
      %s290 = sphi 0, %s290
      %s292 = sphi 0, %s290
      %s293 = sphi 0, %s292
      %s307 = sphi 0, %s293
      %s311 = sphi 0, %s311
      %s313 = sphi 0, %s311
      %s314 = sphi 0, %s313
      %s328 = sphi 0, %s314
      %s332 = sphi 0, %s332
      %s334 = sphi 0, %s332
      %s335 = sphi 0, %s334
      %s349 = sphi 0, %s335
      %s353 = sphi 0, %s353
      %s355 = sphi 0, %s353
      %s356 = sphi 0, %s355
      %s370 = sphi 0, %s356
      %s374 = sphi 0, %s374
      %s376 = sphi 0, %s374
      %s377 = sphi 0, %s376
      %s391 = sphi 0, %s377
      %s395 = sphi 0, %s395
      %s397 = sphi 0, %s395
      %s398 = sphi 0, %s397
      %s412 = sphi 0, %s398
      %s416 = sphi 0, %s416
      %s418 = sphi 0, %s416
      %s419 = sphi 0, %s418
      %s433 = sphi 0, %s419
      %s437 = sphi 0, %s437
      %s439 = sphi 0, %s437
      %s440 = sphi 0, %s439
      %s454 = sphi 0, %s440
      %s460 = sphi 0, %s462
      %s463 = sphi 0, %s460
      %s464 = sphi 0, %s463
      %s480 = sphi 0, %s464
    $region4: #{tpu_custom_call.1} parent=1 // loop_header_branch
      %39 = sbr.rel (%p37) target = $region8
    $region5: #{tpu_custom_call.1} parent=1 // loop_body
      %s41 = ssub.s32 %s36, 1
      %s42 = ssub.s32 %s36, 2
      %s43 = sadd.s32 %s36, 1
      %s44 = ssub.s32 %s36, %s43
      %p45 = scmp.eq.s32.totalorder %s44, 0
      %s47 = sadd.s32 %s46, 1
      %s48 = scalar_select %p45, %s46, %s47
      %p51 = pneg %p45
      %p52 = scmp.eq.s32.totalorder %s36, 1
      %p53 = por %p51, %p52
      %p54 = scmp.ne.s32.totalorder %s46, %s49
      %p55 = scmp.eq.s32.totalorder %s36, 0
      %p56 = por %p54, %p55
      %p57 = scmp.ne.s32.totalorder %s46, %s49
      %p58 = scmp.eq.s32.totalorder %s41, 1
      %p59 = por %p57, %p58
      %p60 = scmp.ne.s32.totalorder %s49, %s50
      %p61 = scmp.eq.s32.totalorder %s41, 0
      %p62 = por %p60, %p61
      %p63 = scmp.ne.s32.totalorder %s49, %s50
      %p64 = scmp.eq.s32.totalorder %s42, 1
      %p65 = por %p63, %p64
      %p67 = scmp.ne.s32.totalorder %s50, %s66
      %p68 = scmp.eq.s32.totalorder %s42, 0
      %p69 = por %p67, %p68
      %s70 = ssub.s32 %s36, %s43
      %p71 = scmp.eq.s32.totalorder %s70, 0
      %s73 = sadd.s32 %s72, 1
      %s74 = scalar_select %p71, %s72, %s73
      %p77 = pneg %p71
      %p78 = scmp.eq.s32.totalorder %s36, 1
      %p79 = por %p77, %p78
      %p80 = scmp.ne.s32.totalorder %s72, %s75
      %p81 = scmp.eq.s32.totalorder %s36, 0
      %p82 = por %p80, %p81
      %p83 = scmp.ne.s32.totalorder %s72, %s75
      %p84 = scmp.eq.s32.totalorder %s41, 1
      %p85 = por %p83, %p84
      %p86 = scmp.ne.s32.totalorder %s75, %s76
      %p87 = scmp.eq.s32.totalorder %s41, 0
      %p88 = por %p86, %p87
      %p89 = scmp.ne.s32.totalorder %s75, %s76
      %p90 = scmp.eq.s32.totalorder %s42, 1
      %p91 = por %p89, %p90
      %p93 = scmp.ne.s32.totalorder %s76, %s92
      %p94 = scmp.eq.s32.totalorder %s42, 0
      %p95 = por %p93, %p94
      %s96 = ssub.s32 %s36, %s43
      %p97 = scmp.eq.s32.totalorder %s96, 0
      %s99 = sadd.s32 %s98, 1
      %s100 = scalar_select %p97, %s98, %s99
      %p103 = pneg %p97
      %p104 = scmp.eq.s32.totalorder %s36, 1
      %p105 = por %p103, %p104
      %p106 = scmp.ne.s32.totalorder %s98, %s101
      %p107 = scmp.eq.s32.totalorder %s36, 0
      %p108 = por %p106, %p107
      %p109 = scmp.ne.s32.totalorder %s98, %s101
      %p110 = scmp.eq.s32.totalorder %s41, 1
      %p111 = por %p109, %p110
      %p112 = scmp.ne.s32.totalorder %s101, %s102
      %p113 = scmp.eq.s32.totalorder %s41, 0
      %p114 = por %p112, %p113
      %p115 = scmp.ne.s32.totalorder %s101, %s102
      %p116 = scmp.eq.s32.totalorder %s42, 1
      %p117 = por %p115, %p116
      %p119 = scmp.ne.s32.totalorder %s102, %s118
      %p120 = scmp.eq.s32.totalorder %s42, 0
      %p121 = por %p119, %p120
      %s123 = sadd.s32 %s122, 1
      %p126 = scmp.eq.s32.totalorder %s36, 1
      %p127 = scmp.ne.s32.totalorder %s122, %s124
      %p128 = scmp.eq.s32.totalorder %s36, 0
      %p129 = por %p127, %p128
      %p130 = scmp.ne.s32.totalorder %s122, %s124
      %p131 = scmp.eq.s32.totalorder %s41, 1
      %p132 = por %p130, %p131
      %p133 = scmp.ne.s32.totalorder %s124, %s125
      %p134 = scmp.eq.s32.totalorder %s41, 0
      %p135 = por %p133, %p134
      %p136 = scmp.ne.s32.totalorder %s124, %s125
      %p137 = scmp.eq.s32.totalorder %s42, 1
      %p138 = por %p136, %p137
      %p140 = scmp.ne.s32.totalorder %s125, %s139
      %p141 = scmp.eq.s32.totalorder %s42, 0
      %p142 = por %p140, %p141
      %s144 = sadd.s32 %s143, 1
      %p147 = scmp.eq.s32.totalorder %s36, 1
      %p148 = scmp.ne.s32.totalorder %s143, %s145
      %p149 = scmp.eq.s32.totalorder %s36, 0
      %p150 = por %p148, %p149
      %p151 = scmp.ne.s32.totalorder %s143, %s145
      %p152 = scmp.eq.s32.totalorder %s41, 1
      %p153 = por %p151, %p152
      %p154 = scmp.ne.s32.totalorder %s145, %s146
      %p155 = scmp.eq.s32.totalorder %s41, 0
      %p156 = por %p154, %p155
      %p157 = scmp.ne.s32.totalorder %s145, %s146
      %p158 = scmp.eq.s32.totalorder %s42, 1
      %p159 = por %p157, %p158
      %p161 = scmp.ne.s32.totalorder %s146, %s160
      %p162 = scmp.eq.s32.totalorder %s42, 0
      %p163 = por %p161, %p162
      %s165 = sadd.s32 %s164, 1
      %p168 = scmp.eq.s32.totalorder %s36, 1
      %p169 = scmp.ne.s32.totalorder %s164, %s166
      %p170 = scmp.eq.s32.totalorder %s36, 0
      %p171 = por %p169, %p170
      %p172 = scmp.ne.s32.totalorder %s164, %s166
      %p173 = scmp.eq.s32.totalorder %s41, 1
      %p174 = por %p172, %p173
      %p175 = scmp.ne.s32.totalorder %s166, %s167
      %p176 = scmp.eq.s32.totalorder %s41, 0
      %p177 = por %p175, %p176
      %p178 = scmp.ne.s32.totalorder %s166, %s167
      %p179 = scmp.eq.s32.totalorder %s42, 1
      %p180 = por %p178, %p179
      %p182 = scmp.ne.s32.totalorder %s167, %s181
      %p183 = scmp.eq.s32.totalorder %s42, 0
      %p184 = por %p182, %p183
      %s186 = sadd.s32 %s185, 1
      %p189 = scmp.eq.s32.totalorder %s36, 1
      %p190 = scmp.ne.s32.totalorder %s185, %s187
      %p191 = scmp.eq.s32.totalorder %s36, 0
      %p192 = por %p190, %p191
      %p193 = scmp.ne.s32.totalorder %s185, %s187
      %p194 = scmp.eq.s32.totalorder %s41, 1
      %p195 = por %p193, %p194
      %p196 = scmp.ne.s32.totalorder %s187, %s188
      %p197 = scmp.eq.s32.totalorder %s41, 0
      %p198 = por %p196, %p197
      %p199 = scmp.ne.s32.totalorder %s187, %s188
      %p200 = scmp.eq.s32.totalorder %s42, 1
      %p201 = por %p199, %p200
      %p203 = scmp.ne.s32.totalorder %s188, %s202
      %p204 = scmp.eq.s32.totalorder %s42, 0
      %p205 = por %p203, %p204
      %s207 = sadd.s32 %s206, 1
      %p210 = scmp.eq.s32.totalorder %s36, 1
      %p211 = scmp.ne.s32.totalorder %s206, %s208
      %p212 = scmp.eq.s32.totalorder %s36, 0
      %p213 = por %p211, %p212
      %p214 = scmp.ne.s32.totalorder %s206, %s208
      %p215 = scmp.eq.s32.totalorder %s41, 1
      %p216 = por %p214, %p215
      %p217 = scmp.ne.s32.totalorder %s208, %s209
      %p218 = scmp.eq.s32.totalorder %s41, 0
      %p219 = por %p217, %p218
      %p220 = scmp.ne.s32.totalorder %s208, %s209
      %p221 = scmp.eq.s32.totalorder %s42, 1
      %p222 = por %p220, %p221
      %p224 = scmp.ne.s32.totalorder %s209, %s223
      %p225 = scmp.eq.s32.totalorder %s42, 0
      %p226 = por %p224, %p225
      %s228 = sadd.s32 %s227, 1
      %p231 = scmp.eq.s32.totalorder %s36, 1
      %p232 = scmp.ne.s32.totalorder %s227, %s229
      %p233 = scmp.eq.s32.totalorder %s36, 0
      %p234 = por %p232, %p233
      %p235 = scmp.ne.s32.totalorder %s227, %s229
      %p236 = scmp.eq.s32.totalorder %s41, 1
      %p237 = por %p235, %p236
      %p238 = scmp.ne.s32.totalorder %s229, %s230
      %p239 = scmp.eq.s32.totalorder %s41, 0
      %p240 = por %p238, %p239
      %p241 = scmp.ne.s32.totalorder %s229, %s230
      %p242 = scmp.eq.s32.totalorder %s42, 1
      %p243 = por %p241, %p242
      %p245 = scmp.ne.s32.totalorder %s230, %s244
      %p246 = scmp.eq.s32.totalorder %s42, 0
      %p247 = por %p245, %p246
      %s249 = sadd.s32 %s248, 1
      %p252 = scmp.eq.s32.totalorder %s36, 1
      %p253 = scmp.ne.s32.totalorder %s248, %s250
      %p254 = scmp.eq.s32.totalorder %s36, 0
      %p255 = por %p253, %p254
      %p256 = scmp.ne.s32.totalorder %s248, %s250
      %p257 = scmp.eq.s32.totalorder %s41, 1
      %p258 = por %p256, %p257
      %p259 = scmp.ne.s32.totalorder %s250, %s251
      %p260 = scmp.eq.s32.totalorder %s41, 0
      %p261 = por %p259, %p260
      %p262 = scmp.ne.s32.totalorder %s250, %s251
      %p263 = scmp.eq.s32.totalorder %s42, 1
      %p264 = por %p262, %p263
      %p266 = scmp.ne.s32.totalorder %s251, %s265
      %p267 = scmp.eq.s32.totalorder %s42, 0
      %p268 = por %p266, %p267
      %s270 = sadd.s32 %s269, 1
      %p273 = scmp.eq.s32.totalorder %s36, 1
      %p274 = scmp.ne.s32.totalorder %s269, %s271
      %p275 = scmp.eq.s32.totalorder %s36, 0
      %p276 = por %p274, %p275
      %p277 = scmp.ne.s32.totalorder %s269, %s271
      %p278 = scmp.eq.s32.totalorder %s41, 1
      %p279 = por %p277, %p278
      %p280 = scmp.ne.s32.totalorder %s271, %s272
      %p281 = scmp.eq.s32.totalorder %s41, 0
      %p282 = por %p280, %p281
      %p283 = scmp.ne.s32.totalorder %s271, %s272
      %p284 = scmp.eq.s32.totalorder %s42, 1
      %p285 = por %p283, %p284
      %p287 = scmp.ne.s32.totalorder %s272, %s286
      %p288 = scmp.eq.s32.totalorder %s42, 0
      %p289 = por %p287, %p288
      %s291 = sadd.s32 %s290, 1
      %p294 = scmp.eq.s32.totalorder %s36, 1
      %p295 = scmp.ne.s32.totalorder %s290, %s292
      %p296 = scmp.eq.s32.totalorder %s36, 0
      %p297 = por %p295, %p296
      %p298 = scmp.ne.s32.totalorder %s290, %s292
      %p299 = scmp.eq.s32.totalorder %s41, 1
      %p300 = por %p298, %p299
      %p301 = scmp.ne.s32.totalorder %s292, %s293
      %p302 = scmp.eq.s32.totalorder %s41, 0
      %p303 = por %p301, %p302
      %p304 = scmp.ne.s32.totalorder %s292, %s293
      %p305 = scmp.eq.s32.totalorder %s42, 1
      %p306 = por %p304, %p305
      %p308 = scmp.ne.s32.totalorder %s293, %s307
      %p309 = scmp.eq.s32.totalorder %s42, 0
      %p310 = por %p308, %p309
      %s312 = sadd.s32 %s311, 1
      %p315 = scmp.eq.s32.totalorder %s36, 1
      %p316 = scmp.ne.s32.totalorder %s311, %s313
      %p317 = scmp.eq.s32.totalorder %s36, 0
      %p318 = por %p316, %p317
      %p319 = scmp.ne.s32.totalorder %s311, %s313
      %p320 = scmp.eq.s32.totalorder %s41, 1
      %p321 = por %p319, %p320
      %p322 = scmp.ne.s32.totalorder %s313, %s314
      %p323 = scmp.eq.s32.totalorder %s41, 0
      %p324 = por %p322, %p323
      %p325 = scmp.ne.s32.totalorder %s313, %s314
      %p326 = scmp.eq.s32.totalorder %s42, 1
      %p327 = por %p325, %p326
      %p329 = scmp.ne.s32.totalorder %s314, %s328
      %p330 = scmp.eq.s32.totalorder %s42, 0
      %p331 = por %p329, %p330
      %s333 = sadd.s32 %s332, 1
      %p336 = scmp.eq.s32.totalorder %s36, 1
      %p337 = scmp.ne.s32.totalorder %s332, %s334
      %p338 = scmp.eq.s32.totalorder %s36, 0
      %p339 = por %p337, %p338
      %p340 = scmp.ne.s32.totalorder %s332, %s334
      %p341 = scmp.eq.s32.totalorder %s41, 1
      %p342 = por %p340, %p341
      %p343 = scmp.ne.s32.totalorder %s334, %s335
      %p344 = scmp.eq.s32.totalorder %s41, 0
      %p345 = por %p343, %p344
      %p346 = scmp.ne.s32.totalorder %s334, %s335
      %p347 = scmp.eq.s32.totalorder %s42, 1
      %p348 = por %p346, %p347
      %p350 = scmp.ne.s32.totalorder %s335, %s349
      %p351 = scmp.eq.s32.totalorder %s42, 0
      %p352 = por %p350, %p351
      %s354 = sadd.s32 %s353, 1
      %p357 = scmp.eq.s32.totalorder %s36, 1
      %p358 = scmp.ne.s32.totalorder %s353, %s355
      %p359 = scmp.eq.s32.totalorder %s36, 0
      %p360 = por %p358, %p359
      %p361 = scmp.ne.s32.totalorder %s353, %s355
      %p362 = scmp.eq.s32.totalorder %s41, 1
      %p363 = por %p361, %p362
      %p364 = scmp.ne.s32.totalorder %s355, %s356
      %p365 = scmp.eq.s32.totalorder %s41, 0
      %p366 = por %p364, %p365
      %p367 = scmp.ne.s32.totalorder %s355, %s356
      %p368 = scmp.eq.s32.totalorder %s42, 1
      %p369 = por %p367, %p368
      %p371 = scmp.ne.s32.totalorder %s356, %s370
      %p372 = scmp.eq.s32.totalorder %s42, 0
      %p373 = por %p371, %p372
      %s375 = sadd.s32 %s374, 1
      %p378 = scmp.eq.s32.totalorder %s36, 1
      %p379 = scmp.ne.s32.totalorder %s374, %s376
      %p380 = scmp.eq.s32.totalorder %s36, 0
      %p381 = por %p379, %p380
      %p382 = scmp.ne.s32.totalorder %s374, %s376
      %p383 = scmp.eq.s32.totalorder %s41, 1
      %p384 = por %p382, %p383
      %p385 = scmp.ne.s32.totalorder %s376, %s377
      %p386 = scmp.eq.s32.totalorder %s41, 0
      %p387 = por %p385, %p386
      %p388 = scmp.ne.s32.totalorder %s376, %s377
      %p389 = scmp.eq.s32.totalorder %s42, 1
      %p390 = por %p388, %p389
      %p392 = scmp.ne.s32.totalorder %s377, %s391
      %p393 = scmp.eq.s32.totalorder %s42, 0
      %p394 = por %p392, %p393
      %s396 = sadd.s32 %s395, 1
      %p399 = scmp.eq.s32.totalorder %s36, 1
      %p400 = scmp.ne.s32.totalorder %s395, %s397
      %p401 = scmp.eq.s32.totalorder %s36, 0
      %p402 = por %p400, %p401
      %p403 = scmp.ne.s32.totalorder %s395, %s397
      %p404 = scmp.eq.s32.totalorder %s41, 1
      %p405 = por %p403, %p404
      %p406 = scmp.ne.s32.totalorder %s397, %s398
      %p407 = scmp.eq.s32.totalorder %s41, 0
      %p408 = por %p406, %p407
      %p409 = scmp.ne.s32.totalorder %s397, %s398
      %p410 = scmp.eq.s32.totalorder %s42, 1
      %p411 = por %p409, %p410
      %p413 = scmp.ne.s32.totalorder %s398, %s412
      %p414 = scmp.eq.s32.totalorder %s42, 0
      %p415 = por %p413, %p414
      %s417 = sadd.s32 %s416, 1
      %p420 = scmp.eq.s32.totalorder %s36, 1
      %p421 = scmp.ne.s32.totalorder %s416, %s418
      %p422 = scmp.eq.s32.totalorder %s36, 0
      %p423 = por %p421, %p422
      %p424 = scmp.ne.s32.totalorder %s416, %s418
      %p425 = scmp.eq.s32.totalorder %s41, 1
      %p426 = por %p424, %p425
      %p427 = scmp.ne.s32.totalorder %s418, %s419
      %p428 = scmp.eq.s32.totalorder %s41, 0
      %p429 = por %p427, %p428
      %p430 = scmp.ne.s32.totalorder %s418, %s419
      %p431 = scmp.eq.s32.totalorder %s42, 1
      %p432 = por %p430, %p431
      %p434 = scmp.ne.s32.totalorder %s419, %s433
      %p435 = scmp.eq.s32.totalorder %s42, 0
      %p436 = por %p434, %p435
      %s438 = sadd.s32 %s437, 1
      %p441 = scmp.eq.s32.totalorder %s36, 1
      %p442 = scmp.ne.s32.totalorder %s437, %s439
      %p443 = scmp.eq.s32.totalorder %s36, 0
      %p444 = por %p442, %p443
      %p445 = scmp.ne.s32.totalorder %s437, %s439
      %p446 = scmp.eq.s32.totalorder %s41, 1
      %p447 = por %p445, %p446
      %p448 = scmp.ne.s32.totalorder %s439, %s440
      %p449 = scmp.eq.s32.totalorder %s41, 0
      %p450 = por %p448, %p449
      %p451 = scmp.ne.s32.totalorder %s439, %s440
      %p452 = scmp.eq.s32.totalorder %s42, 1
      %p453 = por %p451, %p452
      %p455 = scmp.ne.s32.totalorder %s440, %s454
      %p456 = scmp.eq.s32.totalorder %s42, 0
      %p457 = por %p455, %p456
      %s458 = ssub.s32 %s36, %s43
      %p459 = scmp.eq.s32.totalorder %s458, 0
      %s461 = sadd.s32 %s460, 1
      %s462 = scalar_select %p459, %s460, %s461
      %p465 = pneg %p459
      %p466 = scmp.eq.s32.totalorder %s36, 1
      %p467 = por %p465, %p466
      %p468 = scmp.ne.s32.totalorder %s460, %s463
      %p469 = scmp.eq.s32.totalorder %s36, 0
      %p470 = por %p468, %p469
      %p471 = scmp.ne.s32.totalorder %s460, %s463
      %p472 = scmp.eq.s32.totalorder %s41, 1
      %p473 = por %p471, %p472
      %p474 = scmp.ne.s32.totalorder %s463, %s464
      %p475 = scmp.eq.s32.totalorder %s41, 0
      %p476 = por %p474, %p475
      %p477 = scmp.ne.s32.totalorder %s463, %s464
      %p478 = scmp.eq.s32.totalorder %s42, 1
      %p479 = por %p477, %p478
      %p481 = scmp.ne.s32.totalorder %s464, %s480
      %p482 = scmp.eq.s32.totalorder %s42, 0
      %p483 = por %p481, %p482
      %p484 = scmp.le.s32.totalorder 1, %s36
      %p485 = scmp.lt.s32.totalorder %s36, 3
      %p486 = pnand %p484, %p485
      %p487 = pneg %p486
      // Predicated region
      $region9: #{tpu_custom_call.1} parent=5 // pred_check
        _
      $region10: #{tpu_custom_call.1} parent=5 // pred_check_branch
        %489 = sbr.rel (%p486) target = $region12
      $region11: #{tpu_custom_call.1} parent=5 // pred_region
        %s490 = ssub.s32 %s36, 1
        // Predicated region
        $region13: #{tpu_custom_call.1} parent=11 // pred_check
          %p491 = pneg %p135
        $region14: #{tpu_custom_call.1} parent=11 // pred_check_branch
          %493 = sbr.rel (%p491) target = $region16
        $region15: #{tpu_custom_call.1} parent=11 // pred_region
          _
        $region16: #{tpu_custom_call.1} parent=11 // pred_fallthru
          _
        // Predicated region
        $region17: #{tpu_custom_call.1} parent=11 // pred_check
          %p494 = pneg %p156
        $region18: #{tpu_custom_call.1} parent=11 // pred_check_branch
          %496 = sbr.rel (%p494) target = $region20
        $region19: #{tpu_custom_call.1} parent=11 // pred_region
          _
        $region20: #{tpu_custom_call.1} parent=11 // pred_fallthru
          _
        // Predicated region
        $region21: #{tpu_custom_call.1} parent=11 // pred_check
          %p497 = pneg %p177
        $region22: #{tpu_custom_call.1} parent=11 // pred_check_branch
          %499 = sbr.rel (%p497) target = $region24
        $region23: #{tpu_custom_call.1} parent=11 // pred_region
          _
        $region24: #{tpu_custom_call.1} parent=11 // pred_fallthru
          _
        // Predicated region
        $region25: #{tpu_custom_call.1} parent=11 // pred_check
          %p500 = pneg %p198
        $region26: #{tpu_custom_call.1} parent=11 // pred_check_branch
          %502 = sbr.rel (%p500) target = $region28
        $region27: #{tpu_custom_call.1} parent=11 // pred_region
          _
        $region28: #{tpu_custom_call.1} parent=11 // pred_fallthru
          _
        // Predicated region
        $region29: #{tpu_custom_call.1} parent=11 // pred_check
          %p503 = pneg %p219
        $region30: #{tpu_custom_call.1} parent=11 // pred_check_branch
          %505 = sbr.rel (%p503) target = $region32
        $region31: #{tpu_custom_call.1} parent=11 // pred_region
          _
        $region32: #{tpu_custom_call.1} parent=11 // pred_fallthru
          _
        // Predicated region
        $region33: #{tpu_custom_call.1} parent=11 // pred_check
          %p506 = pneg %p240
        $region34: #{tpu_custom_call.1} parent=11 // pred_check_branch
          %508 = sbr.rel (%p506) target = $region36
        $region35: #{tpu_custom_call.1} parent=11 // pred_region
          _
        $region36: #{tpu_custom_call.1} parent=11 // pred_fallthru
          _
        // Predicated region
        $region37: #{tpu_custom_call.1} parent=11 // pred_check
          %p509 = pneg %p261
        $region38: #{tpu_custom_call.1} parent=11 // pred_check_branch
          %511 = sbr.rel (%p509) target = $region40
        $region39: #{tpu_custom_call.1} parent=11 // pred_region
          %s513 = ssub.s32 1024, 1024
          %514 = vsyncadd [#allocation6], %s513
          %s515 = sshll.u32 [#allocation7], 4
          %s516 = int_to_ptr.vmem [resolvable:$true] %s515
          %521 = dma.hbm_to_vmem [thread:$0]  %s9, 1024, %s516, [#allocation6], 64, 64, 4
        $region40: #{tpu_custom_call.1} parent=11 // pred_fallthru
          _
        // Predicated region
        $region41: #{tpu_custom_call.1} parent=11 // pred_check
          %p522 = pneg %p282
        $region42: #{tpu_custom_call.1} parent=11 // pred_check_branch
          %524 = sbr.rel (%p522) target = $region44
        $region43: #{tpu_custom_call.1} parent=11 // pred_region
          _
        $region44: #{tpu_custom_call.1} parent=11 // pred_fallthru
          _
        // Predicated region
        $region45: #{tpu_custom_call.1} parent=11 // pred_check
          %p525 = pneg %p303
        $region46: #{tpu_custom_call.1} parent=11 // pred_check_branch
          %527 = sbr.rel (%p525) target = $region48
        $region47: #{tpu_custom_call.1} parent=11 // pred_region
          %s529 = ssub.s32 2048, 2048
          %530 = vsyncadd [#allocation9], %s529
          %s531 = sshll.u32 [#allocation8], 4
          %s532 = int_to_ptr.vmem [resolvable:$true] %s531
          %537 = dma.hbm_to_vmem [thread:$0]  %s11, 2048, %s532, [#allocation9], 128, 128, 8
        $region48: #{tpu_custom_call.1} parent=11 // pred_fallthru
          _
        // Predicated region
        $region49: #{tpu_custom_call.1} parent=11 // pred_check
          %p538 = pneg %p324
        $region50: #{tpu_custom_call.1} parent=11 // pred_check_branch
          %540 = sbr.rel (%p538) target = $region52
        $region51: #{tpu_custom_call.1} parent=11 // pred_region
          _
        $region52: #{tpu_custom_call.1} parent=11 // pred_fallthru
          _
        // Predicated region
        $region53: #{tpu_custom_call.1} parent=11 // pred_check
          %p541 = pneg %p345
        $region54: #{tpu_custom_call.1} parent=11 // pred_check_branch
          %543 = sbr.rel (%p541) target = $region56
        $region55: #{tpu_custom_call.1} parent=11 // pred_region
          %s545 = ssub.s32 1024, 1024
          %546 = vsyncadd [#allocation9], %s545
          %s547 = sshll.u32 [#allocation10], 4
          %s548 = int_to_ptr.vmem [resolvable:$true] %s547
          %553 = dma.hbm_to_vmem [thread:$0]  %s13, 1024, %s548, [#allocation9], 64, 64, 4
        $region56: #{tpu_custom_call.1} parent=11 // pred_fallthru
          _
        // Predicated region
        $region57: #{tpu_custom_call.1} parent=11 // pred_check
          %p554 = pneg %p366
        $region58: #{tpu_custom_call.1} parent=11 // pred_check_branch
          %556 = sbr.rel (%p554) target = $region60
        $region59: #{tpu_custom_call.1} parent=11 // pred_region
          _
        $region60: #{tpu_custom_call.1} parent=11 // pred_fallthru
          _
        // Predicated region
        $region61: #{tpu_custom_call.1} parent=11 // pred_check
          %p557 = pneg %p387
        $region62: #{tpu_custom_call.1} parent=11 // pred_check_branch
          %559 = sbr.rel (%p557) target = $region64
        $region63: #{tpu_custom_call.1} parent=11 // pred_region
          %s561 = ssub.s32 4096, 4096
          %562 = vsyncadd [#allocation12], %s561
          %s563 = sshll.u32 [#allocation11], 4
          %s564 = int_to_ptr.vmem [resolvable:$true] %s563
          %569 = dma.hbm_to_vmem [thread:$0]  %s15, 4096, %s564, [#allocation12], 256, 256, 16
        $region64: #{tpu_custom_call.1} parent=11 // pred_fallthru
          _
        // Predicated region
        $region65: #{tpu_custom_call.1} parent=11 // pred_check
          %p570 = pneg %p408
        $region66: #{tpu_custom_call.1} parent=11 // pred_check_branch
          %572 = sbr.rel (%p570) target = $region68
        $region67: #{tpu_custom_call.1} parent=11 // pred_region
          _
        $region68: #{tpu_custom_call.1} parent=11 // pred_fallthru
          _
        // Predicated region
        $region69: #{tpu_custom_call.1} parent=11 // pred_check
          %p573 = pneg %p429
        $region70: #{tpu_custom_call.1} parent=11 // pred_check_branch
          %575 = sbr.rel (%p573) target = $region72
        $region71: #{tpu_custom_call.1} parent=11 // pred_region
          %s577 = ssub.s32 4096, 4096
          %578 = vsyncadd [#allocation12], %s577
          %s579 = sshll.u32 [#allocation13], 4
          %s580 = int_to_ptr.vmem [resolvable:$true] %s579
          %585 = dma.hbm_to_vmem [thread:$0]  %s17, 4096, %s580, [#allocation12], 64, 64, 4
        $region72: #{tpu_custom_call.1} parent=11 // pred_fallthru
          _
        // Predicated region
        $region73: #{tpu_custom_call.1} parent=11 // pred_check
          %p586 = pneg %p450
        $region74: #{tpu_custom_call.1} parent=11 // pred_check_branch
          %588 = sbr.rel (%p586) target = $region76
        $region75: #{tpu_custom_call.1} parent=11 // pred_region
          _
        $region76: #{tpu_custom_call.1} parent=11 // pred_fallthru
          _
      $region12: #{tpu_custom_call.1} parent=5 // pred_fallthru
        _
      %p589 = scmp.lt.s32.totalorder %s36, 2
      // Predicated region
      $region77: #{tpu_custom_call.1} parent=5 // pred_check
        %p590 = pneg %p589
      $region78: #{tpu_custom_call.1} parent=5 // pred_check_branch
        %592 = sbr.rel (%p590) target = $region80
      $region79: #{tpu_custom_call.1} parent=5 // pred_region
        // Predicated region
        $region81: #{tpu_custom_call.1} parent=79 // pred_check
          %p593 = pneg %p56
        $region82: #{tpu_custom_call.1} parent=79 // pred_check_branch
          %595 = sbr.rel (%p593) target = $region84
        $region83: #{tpu_custom_call.1} parent=79 // pred_region
          %s596 = sand.u32 %s46, 1
          %s597 = scalar_lea.sflag [#allocation3], %s596
          %s598 = sand.u32 %s46, 1
          %s599 = smul.addr %s598, 4
          %s600 = scalar_lea.vmem [#allocation2], %s599
          %s602 = ssub.s32 64, 64
          %603 = vsyncadd %s597, %s602
          %s604 = smul.addr %s36, 64
          %s605 = scalar_lea.hbm %s0, %s604
          %s607 = sshll.u32 %s600, 4
          %s608 = int_to_ptr.vmem [resolvable:$true] %s607
          %610 = dma.hbm_to_vmem [thread:$0]  %s605, 64, %s608, %s597
        $region84: #{tpu_custom_call.1} parent=79 // pred_fallthru
          _
        // Predicated region
        $region85: #{tpu_custom_call.1} parent=79 // pred_check
          %p611 = pneg %p82
        $region86: #{tpu_custom_call.1} parent=79 // pred_check_branch
          %613 = sbr.rel (%p611) target = $region88
        $region87: #{tpu_custom_call.1} parent=79 // pred_region
          %s614 = sand.u32 %s36, 1
          %s615 = scalar_lea.sflag [#allocation6], %s614
          %s616 = sand.u32 %s72, 1
          %s617 = smul.addr %s616, 8
          %s618 = scalar_lea.vmem [#allocation5], %s617
          %s620 = ssub.s32 128, 128
          %621 = vsyncadd %s615, %s620
          %s622 = smul.addr %s36, 128
          %s623 = scalar_lea.hbm %s1, %s622
          %s625 = sshll.u32 %s618, 4
          %s626 = int_to_ptr.vmem [resolvable:$true] %s625
          %628 = dma.hbm_to_vmem [thread:$0]  %s623, 128, %s626, %s615
        $region88: #{tpu_custom_call.1} parent=79 // pred_fallthru
          _
        // Predicated region
        $region89: #{tpu_custom_call.1} parent=79 // pred_check
          %p629 = pneg %p108
        $region90: #{tpu_custom_call.1} parent=79 // pred_check_branch
          %631 = sbr.rel (%p629) target = $region92
        $region91: #{tpu_custom_call.1} parent=79 // pred_region
          %p632 = scmp.lt.s32.totalorder %s36, 1
          %s633 = scalar_select %p632, %s36, 1
          %s634 = scalar_lea.vmem %s2, %s633
        $region92: #{tpu_custom_call.1} parent=79 // pred_fallthru
          _
      $region80: #{tpu_custom_call.1} parent=5 // pred_fallthru
        _
      %p635 = scmp.le.s32.totalorder 1, %s36
      %p636 = scmp.lt.s32.totalorder %s36, 3
      %p637 = pnand %p635, %p636
      %p638 = pneg %p637
      // Predicated region
      $region93: #{tpu_custom_call.1} parent=5 // pred_check
        _
      $region94: #{tpu_custom_call.1} parent=5 // pred_check_branch
        %640 = sbr.rel (%p637) target = $region96
      $region95: #{tpu_custom_call.1} parent=5 // pred_region
        %s641 = ssub.s32 %s36, 1
        %s642 = sand.u32 %s49, 1
        %s643 = scalar_lea.sflag [#allocation3], %s642
        %s644 = sand.u32 %s49, 1
        %s645 = smul.addr %s644, 4
        %s646 = scalar_lea.vmem [#allocation2], %s645
        // Predicated region
        $region97: #{tpu_custom_call.1} parent=95 // pred_check
          %p647 = pneg %p62
        $region98: #{tpu_custom_call.1} parent=95 // pred_check_branch
          %649 = sbr.rel (%p647) target = $region100
        $region99: #{tpu_custom_call.1} parent=95 // pred_region
          %650 = dma.done %s643, 64
        $region100: #{tpu_custom_call.1} parent=95 // pred_fallthru
          _
        %s651 = sand.u32 %s41, 1
        %s652 = scalar_lea.sflag [#allocation6], %s651
        %s653 = sand.u32 %s75, 1
        %s654 = smul.addr %s653, 8
        %s655 = scalar_lea.vmem [#allocation5], %s654
        // Predicated region
        $region101: #{tpu_custom_call.1} parent=95 // pred_check
          %p656 = pneg %p88
        $region102: #{tpu_custom_call.1} parent=95 // pred_check_branch
          %658 = sbr.rel (%p656) target = $region104
        $region103: #{tpu_custom_call.1} parent=95 // pred_region
          %659 = dma.done %s652, 128
        $region104: #{tpu_custom_call.1} parent=95 // pred_fallthru
          _
        // Predicated region
        $region105: #{tpu_custom_call.1} parent=95 // pred_check
          %p660 = pneg %p261
        $region106: #{tpu_custom_call.1} parent=95 // pred_check_branch
          %662 = sbr.rel (%p660) target = $region108
        $region107: #{tpu_custom_call.1} parent=95 // pred_region
          %663 = dma.done [#allocation6], 1024
        $region108: #{tpu_custom_call.1} parent=95 // pred_fallthru
          _
        // Predicated region
        $region109: #{tpu_custom_call.1} parent=95 // pred_check
          %p664 = pneg %p303
        $region110: #{tpu_custom_call.1} parent=95 // pred_check_branch
          %666 = sbr.rel (%p664) target = $region112
        $region111: #{tpu_custom_call.1} parent=95 // pred_region
          %667 = dma.done [#allocation9], 2048
        $region112: #{tpu_custom_call.1} parent=95 // pred_fallthru
          _
        // Predicated region
        $region113: #{tpu_custom_call.1} parent=95 // pred_check
          %p668 = pneg %p345
        $region114: #{tpu_custom_call.1} parent=95 // pred_check_branch
          %670 = sbr.rel (%p668) target = $region116
        $region115: #{tpu_custom_call.1} parent=95 // pred_region
          %671 = dma.done [#allocation9], 1024
        $region116: #{tpu_custom_call.1} parent=95 // pred_fallthru
          _
        // Predicated region
        $region117: #{tpu_custom_call.1} parent=95 // pred_check
          %p672 = pneg %p387
        $region118: #{tpu_custom_call.1} parent=95 // pred_check_branch
          %674 = sbr.rel (%p672) target = $region120
        $region119: #{tpu_custom_call.1} parent=95 // pred_region
          %675 = dma.done [#allocation12], 4096
        $region120: #{tpu_custom_call.1} parent=95 // pred_fallthru
          _
        // Predicated region
        $region121: #{tpu_custom_call.1} parent=95 // pred_check
          %p676 = pneg %p429
        $region122: #{tpu_custom_call.1} parent=95 // pred_check_branch
          %678 = sbr.rel (%p676) target = $region124
        $region123: #{tpu_custom_call.1} parent=95 // pred_region
          %679 = dma.done [#allocation12], 4096
        $region124: #{tpu_custom_call.1} parent=95 // pred_fallthru
          _
        %s680 = sand.u32 %s49, 1
        %s681 = scalar_lea.sflag [#allocation3], %s680
        %s682 = sand.u32 %s49, 1
        %s683 = smul.addr %s682, 4
        %s684 = scalar_lea.vmem [#allocation2], %s683
        %p685 = pneg %p62
        %p686 = pneg %p59
        %s687 = sand.u32 %s41, 1
        %s688 = scalar_lea.sflag [#allocation6], %s687
        %s689 = sand.u32 %s75, 1
        %s690 = smul.addr %s689, 8
        %s691 = scalar_lea.vmem [#allocation5], %s690
        %p692 = pneg %p88
        %p693 = pneg %p85
        %p694 = scmp.lt.s32.totalorder %s41, 1
        %s695 = scalar_select %p694, %s41, 1
        %s696 = scalar_lea.vmem %s2, %s695
        %p697 = pneg %p114
        %p698 = pneg %p111
        %p699 = pneg %p135
        %p700 = pneg %p132
        %p701 = pneg %p156
        %p702 = pneg %p153
        %p703 = pneg %p177
        %p704 = pneg %p174
        %p705 = pneg %p198
        %p706 = pneg %p195
        %p707 = pneg %p219
        %p708 = pneg %p216
        %p709 = pneg %p240
        %p710 = pneg %p237
        %p711 = pneg %p261
        %p712 = pneg %p258
        %p713 = pneg %p282
        %p714 = pneg %p279
        %p715 = pneg %p303
        %p716 = pneg %p300
        %p717 = pneg %p324
        %p718 = pneg %p321
        %p719 = pneg %p345
        %p720 = pneg %p342
        %p721 = pneg %p366
        %p722 = pneg %p363
        %p723 = pneg %p387
        %p724 = pneg %p384
        %p725 = pneg %p408
        %p726 = pneg %p405
        %p727 = pneg %p429
        %p728 = pneg %p426
        %p729 = pneg %p450
        %p730 = pneg %p447
        %p731 = pneg %p476
        %p732 = pneg %p473
        %s733 = sand.u32 %s463, 1
        %s734 = scalar_lea.sflag [#allocation4], %s733
        %s735 = sand.u32 %s463, 1
        %s736 = smul.addr %s735, 8
        %s737 = scalar_lea.vmem [#allocation14], %s736
        %p738 = scmp.lt.s32.totalorder %s41, 1
        %s739 = scalar_select %p738, %s41, 1
        %s740 = scalar_lea.vmem %s2, %s739
        %v742 = vld [vmem:[%s646] sm:$0xf]
        %v743 = vunpack.c.l.bf16 %v742
        %v744 = vld [vmem:[%s655] sm:$0xff]
        %v745 = vld [vmem:[%s3] sm:$0x1]
        %v746 = vld [vmem:[%s4] sm:$0x1]
        %747 = vadd.xlane.f32.xlu0 %v743
        %v748 = vpop.xlane.xlu0 %747
        %v749 = vrcp.pop 128.0
        %v750 = vmul.f32 %v748, %v749
        %v751 = vsub.f32 %v743, %v750
        %v752 = vmul.f32 %v751, %v751
        %753 = vadd.xlane.f32.xlu0 %v752
        %v754 = vpop.xlane.xlu0 %753
        %v755 = vmul.f32 %v754, %v749
        %v756 = vadd.f32 %v755, 1e-05
        %v757 = vrsqrt.pop %v756
        %v758 = vmul.f32 %v751, %v757
        %v760 = vlaneseq
        %v761 = vshrl.u32 %v760, 7
        %v762 = vsub.s32 0, %v761
        %v763 = vrot.slane %v745, %v762
        %v765 = vmul.f32 %v758, %v763
        %v767 = vlaneseq
        %v768 = vshrl.u32 %v767, 7
        %v769 = vsub.s32 0, %v768
        %v770 = vrot.slane %v746, %v769
        %v772 = vadd.f32 %v765, %v770
        %v773 = vpack.c.bf16 %v772, %v772
        %774 = vadd.xlane.f32.xlu0 %v744
        %v775 = vpop.xlane.xlu0 %774
        %v776 = vmul.f32 %v775, %v749
        %v777 = vsub.f32 %v744, %v776
        %v778 = vmul.f32 %v777, %v777
        %779 = vadd.xlane.f32.xlu0 %v778
        %v780 = vpop.xlane.xlu0 %779
        %v781 = vmul.f32 %v780, %v749
        %v782 = vadd.f32 %v781, 1e-05
        %v783 = vrsqrt.pop %v782
        %v784 = vmul.f32 %v777, %v783
        %v785 = vmul.f32 %v784, %v763
        %v786 = vadd.f32 %v785, %v770
        %v787 = vpack.c.bf16 %v786, %v786
        %v789 = vrot.slane %v787, 4
        %vm790 = vcmask 1043456
        %v793 = vsel %vm790, %v773, %v789
        %v795 = vld [vmem:[%s5] sm:$0x1]
        %v796 = vld [vmem:[%s6] sm:$0x1]
        %v798 = vlaneseq
        %v799 = vshrl.u32 %v798, 7
        %v800 = vsub.s32 0, %v799
        %v801 = vrot.slane %v795, %v800
        %v803 = vmul.f32 %v784, %v801
        %v805 = vlaneseq
        %v806 = vshrl.u32 %v805, 7
        %v807 = vsub.s32 0, %v806
        %v808 = vrot.slane %v796, %v807
        %v810 = vadd.f32 %v803, %v808
        %v811 = vpack.c.bf16 %v810, %v810
        %v812 = vld [vmem:[#allocation7] sm:$0xf]
        %v813 = vld [vmem:[#allocation7 + $0x4] sm:$0xf]
        %v814 = vld [vmem:[#allocation7 + $0x8] sm:$0xf]
        %v815 = vld [vmem:[#allocation7 + $0xc] sm:$0xf]
        %v816 = vld [vmem:[#allocation7 + $0x10] sm:$0xf]
        %v817 = vld [vmem:[#allocation7 + $0x14] sm:$0xf]
        %v818 = vld [vmem:[#allocation7 + $0x18] sm:$0xf]
        %v819 = vld [vmem:[#allocation7 + $0x1c] sm:$0xf]
        %v820 = vld [vmem:[#allocation7 + $0x20] sm:$0xf]
        %v821 = vld [vmem:[#allocation7 + $0x24] sm:$0xf]
        %v822 = vld [vmem:[#allocation7 + $0x28] sm:$0xf]
        %v823 = vld [vmem:[#allocation7 + $0x2c] sm:$0xf]
        %v824 = vld [vmem:[#allocation7 + $0x30] sm:$0xf]
        %v825 = vld [vmem:[#allocation7 + $0x34] sm:$0xf]
        %v826 = vld [vmem:[#allocation7 + $0x38] sm:$0xf]
        %v827 = vld [vmem:[#allocation7 + $0x3c] sm:$0xf]
        %v828 = vld [vmem:[%s10] sm:$0x1]
        %v830 = vlaneseq
        %v831 = vshrl.u32 %v830, 7
        %v832 = vsub.s32 0, %v831
        %v833 = vrot.slane %v828, %v832
        %v851 = vunpack.c.l.b16 %v812
        %v852 = vunpack.c.l.b16 %v813
        %v853 = vunpack.c.l.b16 %v814
        %v854 = vunpack.c.l.b16 %v815
        %v855 = vunpack.c.l.b16 %v816
        %v856 = vunpack.c.l.b16 %v817
        %v857 = vunpack.c.l.b16 %v818
        %v858 = vunpack.c.l.b16 %v819
        %v859 = vunpack.c.l.b16 %v820
        %v860 = vunpack.c.l.b16 %v821
        %v861 = vunpack.c.l.b16 %v822
        %v862 = vunpack.c.l.b16 %v823
        %v863 = vunpack.c.l.b16 %v824
        %v864 = vunpack.c.l.b16 %v825
        %v865 = vunpack.c.l.b16 %v826
        %v866 = vunpack.c.l.b16 %v827
        %v867 = vpack.c.b16 %v852, %v851
        %v868 = vpack.c.b16 %v854, %v853
        %v869 = vpack.c.b16 %v856, %v855
        %v870 = vpack.c.b16 %v858, %v857
        %v871 = vpack.c.b16 %v860, %v859
        %v872 = vpack.c.b16 %v862, %v861
        %v873 = vpack.c.b16 %v864, %v863
        %v874 = vpack.c.b16 %v866, %v865
        %883 = vmatprep.subr.bf16.mxu0 0
        %884 = vmatpush1.bf16.msra.mxu0 %v867
        %885 = vmatprep.subr.bf16.mxu0 0
        %886 = vmatpush1.bf16.msra.mxu0 %v868
        %887 = vmatprep.subr.bf16.mxu0 0
        %888 = vmatpush1.bf16.msra.mxu0 %v869
        %889 = vmatprep.subr.bf16.mxu0 0
        %890 = vmatpush1.bf16.msra.mxu0 %v870
        %891 = vmatprep.subr.bf16.mxu0 0
        %892 = vmatpush1.bf16.msra.mxu0 %v871
        %893 = vmatprep.subr.bf16.mxu0 0
        %894 = vmatpush1.bf16.msra.mxu0 %v872
        %895 = vmatprep.subr.bf16.mxu0 0
        %896 = vmatpush1.bf16.msra.mxu0 %v873
        %897 = vmatprep.subr.bf16.mxu0 0
        %898 = vmatpush1.bf16.msra.mxu0 %v874
        %899 = vmatprep.subr.bf16.mxu0 0
        %900 = vmatpush1.bf16.msra.mxu0 0
        %901 = vmatprep.subr.bf16.mxu0 0
        %902 = vmatpush1.bf16.msra.mxu0 0
        %903 = vmatprep.subr.bf16.mxu0 0
        %904 = vmatpush1.bf16.msra.mxu0 0
        %905 = vmatprep.subr.bf16.mxu0 0
        %906 = vmatpush1.bf16.msra.mxu0 0
        %907 = vmatprep.subr.bf16.mxu0 0
        %908 = vmatpush1.bf16.msra.mxu0 0
        %909 = vmatprep.subr.bf16.mxu0 0
        %910 = vmatpush1.bf16.msra.mxu0 0
        %911 = vmatprep.subr.bf16.mxu0 0
        %912 = vmatpush1.bf16.msra.mxu0 0
        %913 = vmatprep.subr.bf16.mxu0 0
        %914 = vmatpush1.bf16.msra.mxu0 0
        %915 = vmatprep.mubr.bf16.mxu0 0
        %916 = vmatmul.mubr.bf16.gmra.mrb[0].mxu0 %v811
        %v917 = vpop.f32.mrb[0].mxu0
        %v918 = vadd.f32 %v833, %v917
        %v919 = vpop.f32.mrb[0].mxu0
        %v920 = vpop.f32.mrb[0].mxu0
        %v921 = vpop.f32.mrb[0].mxu0
        %922 = vdwg.mxu0
        %v923 = vmul.f32 %v918, 0.17677669
        %v924 = vpack.c.bf16 %v923, %v923
        %v925 = vld [vmem:[#allocation8] sm:$0xff]
        %v926 = vld [vmem:[#allocation8 + $0x8] sm:$0xff]
        %v927 = vld [vmem:[#allocation8 + $0x10] sm:$0xff]
        %v928 = vld [vmem:[#allocation8 + $0x18] sm:$0xff]
        %v929 = vld [vmem:[#allocation8 + $0x20] sm:$0xff]
        %v930 = vld [vmem:[#allocation8 + $0x28] sm:$0xff]
        %v931 = vld [vmem:[#allocation8 + $0x30] sm:$0xff]
        %v932 = vld [vmem:[#allocation8 + $0x38] sm:$0xff]
        %v933 = vld [vmem:[#allocation8 + $0x40] sm:$0xff]
        %v934 = vld [vmem:[#allocation8 + $0x48] sm:$0xff]
        %v935 = vld [vmem:[#allocation8 + $0x50] sm:$0xff]
        %v936 = vld [vmem:[#allocation8 + $0x58] sm:$0xff]
        %v937 = vld [vmem:[#allocation8 + $0x60] sm:$0xff]
        %v938 = vld [vmem:[#allocation8 + $0x68] sm:$0xff]
        %v939 = vld [vmem:[#allocation8 + $0x70] sm:$0xff]
        %v940 = vld [vmem:[#allocation8 + $0x78] sm:$0xff]
        %v941 = vld [vmem:[%s12] sm:$0x3]
        %v943 = vlaneseq
        %v944 = vshrl.u32 %v943, 7
        %v945 = vsub.s32 0, %v944
        %v946 = vrot.slane %v941, %v945
        %v947 = vlaneseq
        %v948 = vshrl.u32 %v947, 7
        %v949 = vsub.s32 1, %v948
        %v950 = vrot.slane %v941, %v949
        %v969 = vunpack.c.l.b16 %v925
        %v970 = vunpack.c.h.b16 %v925
        %v971 = vunpack.c.l.b16 %v926
        %v972 = vunpack.c.h.b16 %v926
        %v973 = vunpack.c.l.b16 %v927
        %v974 = vunpack.c.h.b16 %v927
        %v975 = vunpack.c.l.b16 %v928
        %v976 = vunpack.c.h.b16 %v928
        %v977 = vunpack.c.l.b16 %v929
        %v978 = vunpack.c.h.b16 %v929
        %v979 = vunpack.c.l.b16 %v930
        %v980 = vunpack.c.h.b16 %v930
        %v981 = vunpack.c.l.b16 %v931
        %v982 = vunpack.c.h.b16 %v931
        %v983 = vunpack.c.l.b16 %v932
        %v984 = vunpack.c.h.b16 %v932
        %v985 = vunpack.c.l.b16 %v933
        %v986 = vunpack.c.h.b16 %v933
        %v987 = vunpack.c.l.b16 %v934
        %v988 = vunpack.c.h.b16 %v934
        %v989 = vunpack.c.l.b16 %v935
        %v990 = vunpack.c.h.b16 %v935
        %v991 = vunpack.c.l.b16 %v936
        %v992 = vunpack.c.h.b16 %v936
        %v993 = vunpack.c.l.b16 %v937
        %v994 = vunpack.c.h.b16 %v937
        %v995 = vunpack.c.l.b16 %v938
        %v996 = vunpack.c.h.b16 %v938
        %v997 = vunpack.c.l.b16 %v939
        %v998 = vunpack.c.h.b16 %v939
        %v999 = vunpack.c.l.b16 %v940
        %v1000 = vunpack.c.h.b16 %v940
        %v1001 = vpack.c.b16 %v971, %v969
        %v1002 = vpack.c.b16 %v972, %v970
        %v1003 = vpack.c.b16 %v975, %v973
        %v1004 = vpack.c.b16 %v976, %v974
        %v1005 = vpack.c.b16 %v979, %v977
        %v1006 = vpack.c.b16 %v980, %v978
        %v1007 = vpack.c.b16 %v983, %v981
        %v1008 = vpack.c.b16 %v984, %v982
        %v1009 = vpack.c.b16 %v987, %v985
        %v1010 = vpack.c.b16 %v988, %v986
        %v1011 = vpack.c.b16 %v991, %v989
        %v1012 = vpack.c.b16 %v992, %v990
        %v1013 = vpack.c.b16 %v995, %v993
        %v1014 = vpack.c.b16 %v996, %v994
        %v1015 = vpack.c.b16 %v999, %v997
        %v1016 = vpack.c.b16 %v1000, %v998
        %1033 = vmatprep.subr.bf16.mxu0 %v1002
        %1034 = vmatpush1.bf16.msra.mxu0 %v1001
        %1035 = vmatprep.subr.bf16.mxu0 %v1004
        %1036 = vmatpush1.bf16.msra.mxu0 %v1003
        %1037 = vmatprep.subr.bf16.mxu0 %v1006
        %1038 = vmatpush1.bf16.msra.mxu0 %v1005
        %1039 = vmatprep.subr.bf16.mxu0 %v1008
        %1040 = vmatpush1.bf16.msra.mxu0 %v1007
        %1041 = vmatprep.subr.bf16.mxu0 %v1010
        %1042 = vmatpush1.bf16.msra.mxu0 %v1009
        %1043 = vmatprep.subr.bf16.mxu0 %v1012
        %1044 = vmatpush1.bf16.msra.mxu0 %v1011
        %1045 = vmatprep.subr.bf16.mxu0 %v1014
        %1046 = vmatpush1.bf16.msra.mxu0 %v1013
        %1047 = vmatprep.subr.bf16.mxu0 %v1016
        %1048 = vmatpush1.bf16.msra.mxu0 %v1015
        %1049 = vmatprep.subr.bf16.mxu0 0
        %1050 = vmatpush1.bf16.msra.mxu0 0
        %1051 = vmatprep.subr.bf16.mxu0 0
        %1052 = vmatpush1.bf16.msra.mxu0 0
        %1053 = vmatprep.subr.bf16.mxu0 0
        %1054 = vmatpush1.bf16.msra.mxu0 0
        %1055 = vmatprep.subr.bf16.mxu0 0
        %1056 = vmatpush1.bf16.msra.mxu0 0
        %1057 = vmatprep.subr.bf16.mxu0 0
        %1058 = vmatpush1.bf16.msra.mxu0 0
        %1059 = vmatprep.subr.bf16.mxu0 0
        %1060 = vmatpush1.bf16.msra.mxu0 0
        %1061 = vmatprep.subr.bf16.mxu0 0
        %1062 = vmatpush1.bf16.msra.mxu0 0
        %1063 = vmatprep.subr.bf16.mxu0 0
        %1064 = vmatpush1.bf16.msra.mxu0 0
        %1065 = vmatprep.mubr.bf16.mxu0 0
        %1066 = vmatmul.mubr.bf16.gmra.mrb[0].mxu0 %v793
        %v1067 = vpop.f32.mrb[0].mxu0
        %v1068 = vadd.f32 %v946, %v1067
        %v1069 = vpop.f32.mrb[0].mxu0
        %v1070 = vadd.f32 %v950, %v1069
        %v1071 = vpop.f32.mrb[0].mxu0
        %v1072 = vadd.f32 %v946, %v1071
        %v1073 = vpop.f32.mrb[0].mxu0
        %v1074 = vadd.f32 %v950, %v1073
        %1075 = vdwg.mxu0
        %v1076 = vpack.c.bf16 %v1072, %v1068
        %v1077 = vpack.c.bf16 %v1074, %v1070
        %1079 = vrot.lane.b32.xlu0 %v924, 96
        %v1080 = vpop.permute.xlu0 %1079
        %1081 = vrot.lane.b32.xlu0 %v924, 64
        %v1082 = vpop.permute.xlu0 %1081
        %1083 = vrot.lane.b32.xlu0 %v924, 32
        %v1084 = vpop.permute.xlu0 %1083
        %1086 = vrot.lane.b32.xlu0 %v1076, 96
        %v1087 = vpop.permute.xlu0 %1086
        %1088 = vrot.lane.b32.xlu0 %v1076, 64
        %v1089 = vpop.permute.xlu0 %1088
        %1090 = vrot.lane.b32.xlu0 %v1076, 32
        %v1091 = vpop.permute.xlu0 %1090
        %1093 = vrot.lane.b32.xlu0 %v1077, 96
        %v1094 = vpop.permute.xlu0 %1093
        %1096 = vrot.lane.b32.xlu0 %v1077, 64
        %v1097 = vpop.permute.xlu0 %1096
        %1099 = vrot.lane.b32.xlu0 %v1077, 32
        %v1100 = vpop.permute.xlu0 %1099
        %v1102 = vld [vmem:[%s740] sm:$0x1]
        %vm1103 = vcmp.gt.f32.partialorder %v1102, 0.0
        %v1104 = vsel %vm1103, 0.0, -1e+09
        %v1106 = vlaneseq
        %v1107 = vshrl.u32 %v1106, 7
        %v1108 = vsub.s32 0, %v1107
        %v1109 = vrot.slane %v1104, %v1108
        %vm1111 = vcmask 261120
        %v1113 = vsel %vm1111, %v924, 0
        %v1116 = vsel %vm1111, %v1076, 0
        %1118 = vmatprep.subr.bf16.mxu0 0
        %1119 = vmatpush1.bf16.xpose.msra.mxu0 %v1116
        %1120 = vmatprep.subr.bf16.mxu0 0
        %1121 = vmatpush1.bf16.xpose.msra.mxu0 0
        %1122 = vmatprep.subr.bf16.mxu0 0
        %1123 = vmatpush1.bf16.xpose.msra.mxu0 0
        %1124 = vmatprep.subr.bf16.mxu0 0
        %1125 = vmatpush1.bf16.xpose.msra.mxu0 0
        %1126 = vmatprep.subr.bf16.mxu0 0
        %1127 = vmatpush1.bf16.xpose.msra.mxu0 0
        %1128 = vmatprep.subr.bf16.mxu0 0
        %1129 = vmatpush1.bf16.xpose.msra.mxu0 0
        %1130 = vmatprep.subr.bf16.mxu0 0
        %1131 = vmatpush1.bf16.xpose.msra.mxu0 0
        %1132 = vmatprep.subr.bf16.mxu0 0
        %1133 = vmatpush1.bf16.xpose.msra.mxu0 0
        %1134 = vmatprep.subr.bf16.mxu0 0
        %1135 = vmatpush1.bf16.xpose.msra.mxu0 0
        %1136 = vmatprep.subr.bf16.mxu0 0
        %1137 = vmatpush1.bf16.xpose.msra.mxu0 0
        %1138 = vmatprep.subr.bf16.mxu0 0
        %1139 = vmatpush1.bf16.xpose.msra.mxu0 0
        %1140 = vmatprep.subr.bf16.mxu0 0
        %1141 = vmatpush1.bf16.xpose.msra.mxu0 0
        %1142 = vmatprep.subr.bf16.mxu0 0
        %1143 = vmatpush1.bf16.xpose.msra.mxu0 0
        %1144 = vmatprep.subr.bf16.mxu0 0
        %1145 = vmatpush1.bf16.xpose.msra.mxu0 0
        %1146 = vmatprep.subr.bf16.mxu0 0
        %1147 = vmatpush1.bf16.xpose.msra.mxu0 0
        %1148 = vmatprep.subr.bf16.mxu0 0
        %1149 = vmatpush1.bf16.xpose.msra.mxu0 0
        %1150 = vmatprep.mubr.bf16.mxu0 0
        %1151 = vmatmul.mubr.bf16.gmra.mrb[0].mxu0 %v1113
        %v1152 = vpop.f32.mrb[0].mxu0
        %v1153 = vadd.f32 %v1109, %v1152
        %v1154 = vpop.f32.mrb[0].mxu0
        %v1155 = vpop.f32.mrb[0].mxu0
        %v1156 = vpop.f32.mrb[0].mxu0
        %1157 = vdwg.mxu0
        %v1159 = vsel %vm1111, %v1080, 0
        %v1162 = vsel %vm1111, %v1087, 0
        %1164 = vmatprep.subr.bf16.mxu0 0
        %1165 = vmatpush1.bf16.xpose.msra.mxu0 %v1162
        %1166 = vmatprep.subr.bf16.mxu0 0
        %1167 = vmatpush1.bf16.xpose.msra.mxu0 0
        %1168 = vmatprep.subr.bf16.mxu0 0
        %1169 = vmatpush1.bf16.xpose.msra.mxu0 0
        %1170 = vmatprep.subr.bf16.mxu0 0
        %1171 = vmatpush1.bf16.xpose.msra.mxu0 0
        %1172 = vmatprep.subr.bf16.mxu0 0
        %1173 = vmatpush1.bf16.xpose.msra.mxu0 0
        %1174 = vmatprep.subr.bf16.mxu0 0
        %1175 = vmatpush1.bf16.xpose.msra.mxu0 0
        %1176 = vmatprep.subr.bf16.mxu0 0
        %1177 = vmatpush1.bf16.xpose.msra.mxu0 0
        %1178 = vmatprep.subr.bf16.mxu0 0
        %1179 = vmatpush1.bf16.xpose.msra.mxu0 0
        %1180 = vmatprep.subr.bf16.mxu0 0
        %1181 = vmatpush1.bf16.xpose.msra.mxu0 0
        %1182 = vmatprep.subr.bf16.mxu0 0
        %1183 = vmatpush1.bf16.xpose.msra.mxu0 0
        %1184 = vmatprep.subr.bf16.mxu0 0
        %1185 = vmatpush1.bf16.xpose.msra.mxu0 0
        %1186 = vmatprep.subr.bf16.mxu0 0
        %1187 = vmatpush1.bf16.xpose.msra.mxu0 0
        %1188 = vmatprep.subr.bf16.mxu0 0
        %1189 = vmatpush1.bf16.xpose.msra.mxu0 0
        %1190 = vmatprep.subr.bf16.mxu0 0
        %1191 = vmatpush1.bf16.xpose.msra.mxu0 0
        %1192 = vmatprep.subr.bf16.mxu0 0
        %1193 = vmatpush1.bf16.xpose.msra.mxu0 0
        %1194 = vmatprep.subr.bf16.mxu0 0
        %1195 = vmatpush1.bf16.xpose.msra.mxu0 0
        %1196 = vmatprep.mubr.bf16.mxu0 0
        %1197 = vmatmul.mubr.bf16.gmra.mrb[0].mxu0 %v1159
        %v1198 = vpop.f32.mrb[0].mxu0
        %v1199 = vadd.f32 %v1109, %v1198
        %v1200 = vpop.f32.mrb[0].mxu0
        %v1201 = vpop.f32.mrb[0].mxu0
        %v1202 = vpop.f32.mrb[0].mxu0
        %1203 = vdwg.mxu0
        %v1205 = vsel %vm1111, %v1082, 0
        %v1208 = vsel %vm1111, %v1089, 0
        %1210 = vmatprep.subr.bf16.mxu0 0
        %1211 = vmatpush1.bf16.xpose.msra.mxu0 %v1208
        %1212 = vmatprep.subr.bf16.mxu0 0
        %1213 = vmatpush1.bf16.xpose.msra.mxu0 0
        %1214 = vmatprep.subr.bf16.mxu0 0
        %1215 = vmatpush1.bf16.xpose.msra.mxu0 0
        %1216 = vmatprep.subr.bf16.mxu0 0
        %1217 = vmatpush1.bf16.xpose.msra.mxu0 0
        %1218 = vmatprep.subr.bf16.mxu0 0
        %1219 = vmatpush1.bf16.xpose.msra.mxu0 0
        %1220 = vmatprep.subr.bf16.mxu0 0
        %1221 = vmatpush1.bf16.xpose.msra.mxu0 0
        %1222 = vmatprep.subr.bf16.mxu0 0
        %1223 = vmatpush1.bf16.xpose.msra.mxu0 0
        %1224 = vmatprep.subr.bf16.mxu0 0
        %1225 = vmatpush1.bf16.xpose.msra.mxu0 0
        %1226 = vmatprep.subr.bf16.mxu0 0
        %1227 = vmatpush1.bf16.xpose.msra.mxu0 0
        %1228 = vmatprep.subr.bf16.mxu0 0
        %1229 = vmatpush1.bf16.xpose.msra.mxu0 0
        %1230 = vmatprep.subr.bf16.mxu0 0
        %1231 = vmatpush1.bf16.xpose.msra.mxu0 0
        %1232 = vmatprep.subr.bf16.mxu0 0
        %1233 = vmatpush1.bf16.xpose.msra.mxu0 0
        %1234 = vmatprep.subr.bf16.mxu0 0
        %1235 = vmatpush1.bf16.xpose.msra.mxu0 0
        %1236 = vmatprep.subr.bf16.mxu0 0
        %1237 = vmatpush1.bf16.xpose.msra.mxu0 0
        %1238 = vmatprep.subr.bf16.mxu0 0
        %1239 = vmatpush1.bf16.xpose.msra.mxu0 0
        %1240 = vmatprep.subr.bf16.mxu0 0
        %1241 = vmatpush1.bf16.xpose.msra.mxu0 0
        %1242 = vmatprep.mubr.bf16.mxu0 0
        %1243 = vmatmul.mubr.bf16.gmra.mrb[0].mxu0 %v1205
        %v1244 = vpop.f32.mrb[0].mxu0
        %v1245 = vadd.f32 %v1109, %v1244
        %v1246 = vpop.f32.mrb[0].mxu0
        %v1247 = vpop.f32.mrb[0].mxu0
        %v1248 = vpop.f32.mrb[0].mxu0
        %1249 = vdwg.mxu0
        %v1251 = vsel %vm1111, %v1084, 0
        %v1254 = vsel %vm1111, %v1091, 0
        %1256 = vmatprep.subr.bf16.mxu0 0
        %1257 = vmatpush1.bf16.xpose.msra.mxu0 %v1254
        %1258 = vmatprep.subr.bf16.mxu0 0
        %1259 = vmatpush1.bf16.xpose.msra.mxu0 0
        %1260 = vmatprep.subr.bf16.mxu0 0
        %1261 = vmatpush1.bf16.xpose.msra.mxu0 0
        %1262 = vmatprep.subr.bf16.mxu0 0
        %1263 = vmatpush1.bf16.xpose.msra.mxu0 0
        %1264 = vmatprep.subr.bf16.mxu0 0
        %1265 = vmatpush1.bf16.xpose.msra.mxu0 0
        %1266 = vmatprep.subr.bf16.mxu0 0
        %1267 = vmatpush1.bf16.xpose.msra.mxu0 0
        %1268 = vmatprep.subr.bf16.mxu0 0
        %1269 = vmatpush1.bf16.xpose.msra.mxu0 0
        %1270 = vmatprep.subr.bf16.mxu0 0
        %1271 = vmatpush1.bf16.xpose.msra.mxu0 0
        %1272 = vmatprep.subr.bf16.mxu0 0
        %1273 = vmatpush1.bf16.xpose.msra.mxu0 0
        %1274 = vmatprep.subr.bf16.mxu0 0
        %1275 = vmatpush1.bf16.xpose.msra.mxu0 0
        %1276 = vmatprep.subr.bf16.mxu0 0
        %1277 = vmatpush1.bf16.xpose.msra.mxu0 0
        %1278 = vmatprep.subr.bf16.mxu0 0
        %1279 = vmatpush1.bf16.xpose.msra.mxu0 0
        %1280 = vmatprep.subr.bf16.mxu0 0
        %1281 = vmatpush1.bf16.xpose.msra.mxu0 0
        %1282 = vmatprep.subr.bf16.mxu0 0
        %1283 = vmatpush1.bf16.xpose.msra.mxu0 0
        %1284 = vmatprep.subr.bf16.mxu0 0
        %1285 = vmatpush1.bf16.xpose.msra.mxu0 0
        %1286 = vmatprep.subr.bf16.mxu0 0
        %1287 = vmatpush1.bf16.xpose.msra.mxu0 0
        %1288 = vmatprep.mubr.bf16.mxu0 0
        %1289 = vmatmul.mubr.bf16.gmra.mrb[0].mxu0 %v1251
        %v1290 = vpop.f32.mrb[0].mxu0
        %v1291 = vadd.f32 %v1109, %v1290
        %v1292 = vpop.f32.mrb[0].mxu0
        %v1293 = vpop.f32.mrb[0].mxu0
        %v1294 = vpop.f32.mrb[0].mxu0
        %1295 = vdwg.mxu0
        %vm1296 = vcmask 130048
        %v1297 = vsel %vm1296, %v1153, -inf
        %1298 = vmax.xlane.f32.xlu0 %v1297
        %v1299 = vpop.xlane.xlu0 %1298
        %v1300 = vsel %vm1296, %v1199, -inf
        %1301 = vmax.xlane.f32.xlu0 %v1300
        %v1302 = vpop.xlane.xlu0 %1301
        %v1303 = vsel %vm1296, %v1245, -inf
        %1304 = vmax.xlane.f32.xlu0 %v1303
        %v1305 = vpop.xlane.xlu0 %1304
        %v1306 = vsel %vm1296, %v1291, -inf
        %1307 = vmax.xlane.f32.xlu0 %v1306
        %v1308 = vpop.xlane.xlu0 %1307
        %v1309 = vsub.f32 %v1153, %v1299
        %v1310 = vsub.f32 %v1199, %v1302
        %v1311 = vsub.f32 %v1245, %v1305
        %v1312 = vsub.f32 %v1291, %v1308
        %v1313 = vmul.f32 %v1309, 1.442695
        %v1314 = vpow.pop %v1313
        %v1315 = vmul.f32 %v1310, 1.442695
        %v1316 = vpow.pop %v1315
        %v1317 = vmul.f32 %v1311, 1.442695
        %v1318 = vpow.pop %v1317
        %v1319 = vmul.f32 %v1312, 1.442695
        %v1320 = vpow.pop %v1319
        %v1321 = vsel %vm1296, %v1314, 0.0
        %1322 = vadd.xlane.f32.xlu0 %v1321
        %v1323 = vpop.xlane.xlu0 %1322
        %v1324 = vsel %vm1296, %v1316, 0.0
        %1325 = vadd.xlane.f32.xlu0 %v1324
        %v1326 = vpop.xlane.xlu0 %1325
        %v1327 = vsel %vm1296, %v1318, 0.0
        %1328 = vadd.xlane.f32.xlu0 %v1327
        %v1329 = vpop.xlane.xlu0 %1328
        %v1330 = vsel %vm1296, %v1320, 0.0
        %1331 = vadd.xlane.f32.xlu0 %v1330
        %v1332 = vpop.xlane.xlu0 %1331
        %v1333 = vrcp.pop %v1323
        %v1334 = vrcp.pop %v1326
        %v1335 = vrcp.pop %v1329
        %v1336 = vrcp.pop %v1332
        %v1337 = vmul.f32 %v1314, %v1333
        %v1338 = vmul.f32 %v1316, %v1334
        %v1339 = vmul.f32 %v1318, %v1335
        %v1340 = vmul.f32 %v1320, %v1336
        %v1341 = vpack.c.bf16 %v1337, %v1337
        %v1342 = vpack.c.bf16 %v1338, %v1338
        %v1343 = vpack.c.bf16 %v1339, %v1339
        %v1344 = vpack.c.bf16 %v1340, %v1340
        %v1346 = vsel %vm1296, %v1341, 0
        %1348 = vmatprep.subr.bf16.mxu0 0
        %1349 = vmatpush1.bf16.msra.mxu0 %v1077
        %1350 = vmatprep.subr.bf16.mxu0 0
        %1351 = vmatpush1.bf16.msra.mxu0 0
        %1352 = vmatprep.subr.bf16.mxu0 0
        %1353 = vmatpush1.bf16.msra.mxu0 0
        %1354 = vmatprep.subr.bf16.mxu0 0
        %1355 = vmatpush1.bf16.msra.mxu0 0
        %1356 = vmatprep.subr.bf16.mxu0 0
        %1357 = vmatpush1.bf16.msra.mxu0 0
        %1358 = vmatprep.subr.bf16.mxu0 0
        %1359 = vmatpush1.bf16.msra.mxu0 0
        %1360 = vmatprep.subr.bf16.mxu0 0
        %1361 = vmatpush1.bf16.msra.mxu0 0
        %1362 = vmatprep.subr.bf16.mxu0 0
        %1363 = vmatpush1.bf16.msra.mxu0 0
        %1364 = vmatprep.subr.bf16.mxu0 0
        %1365 = vmatpush1.bf16.msra.mxu0 0
        %1366 = vmatprep.subr.bf16.mxu0 0
        %1367 = vmatpush1.bf16.msra.mxu0 0
        %1368 = vmatprep.subr.bf16.mxu0 0
        %1369 = vmatpush1.bf16.msra.mxu0 0
        %1370 = vmatprep.subr.bf16.mxu0 0
        %1371 = vmatpush1.bf16.msra.mxu0 0
        %1372 = vmatprep.subr.bf16.mxu0 0
        %1373 = vmatpush1.bf16.msra.mxu0 0
        %1374 = vmatprep.subr.bf16.mxu0 0
        %1375 = vmatpush1.bf16.msra.mxu0 0
        %1376 = vmatprep.subr.bf16.mxu0 0
        %1377 = vmatpush1.bf16.msra.mxu0 0
        %1378 = vmatprep.subr.bf16.mxu0 0
        %1379 = vmatpush1.bf16.msra.mxu0 0
        %1380 = vmatprep.mubr.bf16.mxu0 0
        %1381 = vmatmul.mubr.bf16.gmra.mrb[0].mxu0 %v1346
        %v1382 = vpop.f32.mrb[0].mxu0
        %v1383 = vadd.f32 0.0, %v1382
        %v1384 = vpop.f32.mrb[0].mxu0
        %v1385 = vpop.f32.mrb[0].mxu0
        %v1386 = vpop.f32.mrb[0].mxu0
        %1387 = vdwg.mxu0
        %v1389 = vsel %vm1296, %v1342, 0
        %1391 = vmatprep.subr.bf16.mxu0 0
        %1392 = vmatpush1.bf16.msra.mxu0 %v1094
        %1393 = vmatprep.subr.bf16.mxu0 0
        %1394 = vmatpush1.bf16.msra.mxu0 0
        %1395 = vmatprep.subr.bf16.mxu0 0
        %1396 = vmatpush1.bf16.msra.mxu0 0
        %1397 = vmatprep.subr.bf16.mxu0 0
        %1398 = vmatpush1.bf16.msra.mxu0 0
        %1399 = vmatprep.subr.bf16.mxu0 0
        %1400 = vmatpush1.bf16.msra.mxu0 0
        %1401 = vmatprep.subr.bf16.mxu0 0
        %1402 = vmatpush1.bf16.msra.mxu0 0
        %1403 = vmatprep.subr.bf16.mxu0 0
        %1404 = vmatpush1.bf16.msra.mxu0 0
        %1405 = vmatprep.subr.bf16.mxu0 0
        %1406 = vmatpush1.bf16.msra.mxu0 0
        %1407 = vmatprep.subr.bf16.mxu0 0
        %1408 = vmatpush1.bf16.msra.mxu0 0
        %1409 = vmatprep.subr.bf16.mxu0 0
        %1410 = vmatpush1.bf16.msra.mxu0 0
        %1411 = vmatprep.subr.bf16.mxu0 0
        %1412 = vmatpush1.bf16.msra.mxu0 0
        %1413 = vmatprep.subr.bf16.mxu0 0
        %1414 = vmatpush1.bf16.msra.mxu0 0
        %1415 = vmatprep.subr.bf16.mxu0 0
        %1416 = vmatpush1.bf16.msra.mxu0 0
        %1417 = vmatprep.subr.bf16.mxu0 0
        %1418 = vmatpush1.bf16.msra.mxu0 0
        %1419 = vmatprep.subr.bf16.mxu0 0
        %1420 = vmatpush1.bf16.msra.mxu0 0
        %1421 = vmatprep.subr.bf16.mxu0 0
        %1422 = vmatpush1.bf16.msra.mxu0 0
        %1423 = vmatprep.mubr.bf16.mxu0 0
        %1424 = vmatmul.mubr.bf16.gmra.mrb[0].mxu0 %v1389
        %v1425 = vpop.f32.mrb[0].mxu0
        %v1426 = vadd.f32 0.0, %v1425
        %v1427 = vpop.f32.mrb[0].mxu0
        %v1428 = vpop.f32.mrb[0].mxu0
        %v1429 = vpop.f32.mrb[0].mxu0
        %1430 = vdwg.mxu0
        %v1432 = vsel %vm1296, %v1343, 0
        %1434 = vmatprep.subr.bf16.mxu0 0
        %1435 = vmatpush1.bf16.msra.mxu0 %v1097
        %1436 = vmatprep.subr.bf16.mxu0 0
        %1437 = vmatpush1.bf16.msra.mxu0 0
        %1438 = vmatprep.subr.bf16.mxu0 0
        %1439 = vmatpush1.bf16.msra.mxu0 0
        %1440 = vmatprep.subr.bf16.mxu0 0
        %1441 = vmatpush1.bf16.msra.mxu0 0
        %1442 = vmatprep.subr.bf16.mxu0 0
        %1443 = vmatpush1.bf16.msra.mxu0 0
        %1444 = vmatprep.subr.bf16.mxu0 0
        %1445 = vmatpush1.bf16.msra.mxu0 0
        %1446 = vmatprep.subr.bf16.mxu0 0
        %1447 = vmatpush1.bf16.msra.mxu0 0
        %1448 = vmatprep.subr.bf16.mxu0 0
        %1449 = vmatpush1.bf16.msra.mxu0 0
        %1450 = vmatprep.subr.bf16.mxu0 0
        %1451 = vmatpush1.bf16.msra.mxu0 0
        %1452 = vmatprep.subr.bf16.mxu0 0
        %1453 = vmatpush1.bf16.msra.mxu0 0
        %1454 = vmatprep.subr.bf16.mxu0 0
        %1455 = vmatpush1.bf16.msra.mxu0 0
        %1456 = vmatprep.subr.bf16.mxu0 0
        %1457 = vmatpush1.bf16.msra.mxu0 0
        %1458 = vmatprep.subr.bf16.mxu0 0
        %1459 = vmatpush1.bf16.msra.mxu0 0
        %1460 = vmatprep.subr.bf16.mxu0 0
        %1461 = vmatpush1.bf16.msra.mxu0 0
        %1462 = vmatprep.subr.bf16.mxu0 0
        %1463 = vmatpush1.bf16.msra.mxu0 0
        %1464 = vmatprep.subr.bf16.mxu0 0
        %1465 = vmatpush1.bf16.msra.mxu0 0
        %1466 = vmatprep.mubr.bf16.mxu0 0
        %1467 = vmatmul.mubr.bf16.gmra.mrb[0].mxu0 %v1432
        %v1468 = vpop.f32.mrb[0].mxu0
        %v1469 = vadd.f32 0.0, %v1468
        %v1470 = vpop.f32.mrb[0].mxu0
        %v1471 = vpop.f32.mrb[0].mxu0
        %v1472 = vpop.f32.mrb[0].mxu0
        %1473 = vdwg.mxu0
        %v1475 = vsel %vm1296, %v1344, 0
        %1477 = vmatprep.subr.bf16.mxu0 0
        %1478 = vmatpush1.bf16.msra.mxu0 %v1100
        %1479 = vmatprep.subr.bf16.mxu0 0
        %1480 = vmatpush1.bf16.msra.mxu0 0
        %1481 = vmatprep.subr.bf16.mxu0 0
        %1482 = vmatpush1.bf16.msra.mxu0 0
        %1483 = vmatprep.subr.bf16.mxu0 0
        %1484 = vmatpush1.bf16.msra.mxu0 0
        %1485 = vmatprep.subr.bf16.mxu0 0
        %1486 = vmatpush1.bf16.msra.mxu0 0
        %1487 = vmatprep.subr.bf16.mxu0 0
        %1488 = vmatpush1.bf16.msra.mxu0 0
        %1489 = vmatprep.subr.bf16.mxu0 0
        %1490 = vmatpush1.bf16.msra.mxu0 0
        %1491 = vmatprep.subr.bf16.mxu0 0
        %1492 = vmatpush1.bf16.msra.mxu0 0
        %1493 = vmatprep.subr.bf16.mxu0 0
        %1494 = vmatpush1.bf16.msra.mxu0 0
        %1495 = vmatprep.subr.bf16.mxu0 0
        %1496 = vmatpush1.bf16.msra.mxu0 0
        %1497 = vmatprep.subr.bf16.mxu0 0
        %1498 = vmatpush1.bf16.msra.mxu0 0
        %1499 = vmatprep.subr.bf16.mxu0 0
        %1500 = vmatpush1.bf16.msra.mxu0 0
        %1501 = vmatprep.subr.bf16.mxu0 0
        %1502 = vmatpush1.bf16.msra.mxu0 0
        %1503 = vmatprep.subr.bf16.mxu0 0
        %1504 = vmatpush1.bf16.msra.mxu0 0
        %1505 = vmatprep.subr.bf16.mxu0 0
        %1506 = vmatpush1.bf16.msra.mxu0 0
        %1507 = vmatprep.subr.bf16.mxu0 0
        %1508 = vmatpush1.bf16.msra.mxu0 0
        %1509 = vmatprep.mubr.bf16.mxu0 0
        %1510 = vmatmul.mubr.bf16.gmra.mrb[0].mxu0 %v1475
        %v1511 = vpop.f32.mrb[0].mxu0
        %v1512 = vadd.f32 0.0, %v1511
        %v1513 = vpop.f32.mrb[0].mxu0
        %v1514 = vpop.f32.mrb[0].mxu0
        %v1515 = vpop.f32.mrb[0].mxu0
        %1516 = vdwg.mxu0
        %1518 = vrot.lane.b32.xlu0 %v1426, 32
        %v1519 = vpop.permute.xlu0 %1518
        %1522 = vrot.lane.b32.xlu0 %v1469, 64
        %v1523 = vpop.permute.xlu0 %1522
        %1526 = vrot.lane.b32.xlu0 %v1512, 96
        %v1527 = vpop.permute.xlu0 %1526
        %v1529 = vsel %vm1111, %v1383, %v1519
        %vm1530 = vcmask 523264
        %v1531 = vsel %vm1530, %v1529, %v1523
        %vm1532 = vcmask 785408
        %v1533 = vsel %vm1532, %v1531, %v1527
        %v1534 = vpack.c.bf16 %v1533, %v1533
        %v1535 = vld [vmem:[#allocation10] sm:$0xf]
        %v1536 = vld [vmem:[#allocation10 + $0x4] sm:$0xf]
        %v1537 = vld [vmem:[#allocation10 + $0x8] sm:$0xf]
        %v1538 = vld [vmem:[#allocation10 + $0xc] sm:$0xf]
        %v1539 = vld [vmem:[#allocation10 + $0x10] sm:$0xf]
        %v1540 = vld [vmem:[#allocation10 + $0x14] sm:$0xf]
        %v1541 = vld [vmem:[#allocation10 + $0x18] sm:$0xf]
        %v1542 = vld [vmem:[#allocation10 + $0x1c] sm:$0xf]
        %v1543 = vld [vmem:[#allocation10 + $0x20] sm:$0xf]
        %v1544 = vld [vmem:[#allocation10 + $0x24] sm:$0xf]
        %v1545 = vld [vmem:[#allocation10 + $0x28] sm:$0xf]
        %v1546 = vld [vmem:[#allocation10 + $0x2c] sm:$0xf]
        %v1547 = vld [vmem:[#allocation10 + $0x30] sm:$0xf]
        %v1548 = vld [vmem:[#allocation10 + $0x34] sm:$0xf]
        %v1549 = vld [vmem:[#allocation10 + $0x38] sm:$0xf]
        %v1550 = vld [vmem:[#allocation10 + $0x3c] sm:$0xf]
        %v1551 = vld [vmem:[%s14] sm:$0x1]
        %v1553 = vlaneseq
        %v1554 = vshrl.u32 %v1553, 7
        %v1555 = vsub.s32 0, %v1554
        %v1556 = vrot.slane %v1551, %v1555
        %v1574 = vunpack.c.l.b16 %v1535
        %v1575 = vunpack.c.l.b16 %v1536
        %v1576 = vunpack.c.l.b16 %v1537
        %v1577 = vunpack.c.l.b16 %v1538
        %v1578 = vunpack.c.l.b16 %v1539
        %v1579 = vunpack.c.l.b16 %v1540
        %v1580 = vunpack.c.l.b16 %v1541
        %v1581 = vunpack.c.l.b16 %v1542
        %v1582 = vunpack.c.l.b16 %v1543
        %v1583 = vunpack.c.l.b16 %v1544
        %v1584 = vunpack.c.l.b16 %v1545
        %v1585 = vunpack.c.l.b16 %v1546
        %v1586 = vunpack.c.l.b16 %v1547
        %v1587 = vunpack.c.l.b16 %v1548
        %v1588 = vunpack.c.l.b16 %v1549
        %v1589 = vunpack.c.l.b16 %v1550
        %v1590 = vpack.c.b16 %v1575, %v1574
        %v1591 = vpack.c.b16 %v1577, %v1576
        %v1592 = vpack.c.b16 %v1579, %v1578
        %v1593 = vpack.c.b16 %v1581, %v1580
        %v1594 = vpack.c.b16 %v1583, %v1582
        %v1595 = vpack.c.b16 %v1585, %v1584
        %v1596 = vpack.c.b16 %v1587, %v1586
        %v1597 = vpack.c.b16 %v1589, %v1588
        %1606 = vmatprep.subr.bf16.mxu0 0
        %1607 = vmatpush1.bf16.msra.mxu0 %v1590
        %1608 = vmatprep.subr.bf16.mxu0 0
        %1609 = vmatpush1.bf16.msra.mxu0 %v1591
        %1610 = vmatprep.subr.bf16.mxu0 0
        %1611 = vmatpush1.bf16.msra.mxu0 %v1592
        %1612 = vmatprep.subr.bf16.mxu0 0
        %1613 = vmatpush1.bf16.msra.mxu0 %v1593
        %1614 = vmatprep.subr.bf16.mxu0 0
        %1615 = vmatpush1.bf16.msra.mxu0 %v1594
        %1616 = vmatprep.subr.bf16.mxu0 0
        %1617 = vmatpush1.bf16.msra.mxu0 %v1595
        %1618 = vmatprep.subr.bf16.mxu0 0
        %1619 = vmatpush1.bf16.msra.mxu0 %v1596
        %1620 = vmatprep.subr.bf16.mxu0 0
        %1621 = vmatpush1.bf16.msra.mxu0 %v1597
        %1622 = vmatprep.subr.bf16.mxu0 0
        %1623 = vmatpush1.bf16.msra.mxu0 0
        %1624 = vmatprep.subr.bf16.mxu0 0
        %1625 = vmatpush1.bf16.msra.mxu0 0
        %1626 = vmatprep.subr.bf16.mxu0 0
        %1627 = vmatpush1.bf16.msra.mxu0 0
        %1628 = vmatprep.subr.bf16.mxu0 0
        %1629 = vmatpush1.bf16.msra.mxu0 0
        %1630 = vmatprep.subr.bf16.mxu0 0
        %1631 = vmatpush1.bf16.msra.mxu0 0
        %1632 = vmatprep.subr.bf16.mxu0 0
        %1633 = vmatpush1.bf16.msra.mxu0 0
        %1634 = vmatprep.subr.bf16.mxu0 0
        %1635 = vmatpush1.bf16.msra.mxu0 0
        %1636 = vmatprep.subr.bf16.mxu0 0
        %1637 = vmatpush1.bf16.msra.mxu0 0
        %1638 = vmatprep.mubr.bf16.mxu0 0
        %1639 = vmatmul.mubr.bf16.gmra.mrb[0].mxu0 %v1534
        %v1640 = vpop.f32.mrb[0].mxu0
        %v1641 = vadd.f32 %v1556, %v1640
        %v1642 = vpop.f32.mrb[0].mxu0
        %v1643 = vpop.f32.mrb[0].mxu0
        %v1644 = vpop.f32.mrb[0].mxu0
        %1645 = vdwg.mxu0
        %v1646 = vadd.f32 %v1641, %v744
        %v1647 = vld [vmem:[%s7] sm:$0x1]
        %v1648 = vld [vmem:[%s8] sm:$0x1]
        %1649 = vadd.xlane.f32.xlu0 %v1646
        %v1650 = vpop.xlane.xlu0 %1649
        %v1651 = vmul.f32 %v1650, %v749
        %v1652 = vsub.f32 %v1646, %v1651
        %v1653 = vmul.f32 %v1652, %v1652
        %1654 = vadd.xlane.f32.xlu0 %v1653
        %v1655 = vpop.xlane.xlu0 %1654
        %v1656 = vmul.f32 %v1655, %v749
        %v1657 = vadd.f32 %v1656, 1e-05
        %v1658 = vrsqrt.pop %v1657
        %v1659 = vmul.f32 %v1652, %v1658
        %v1661 = vlaneseq
        %v1662 = vshrl.u32 %v1661, 7
        %v1663 = vsub.s32 0, %v1662
        %v1664 = vrot.slane %v1647, %v1663
        %v1666 = vmul.f32 %v1659, %v1664
        %v1668 = vlaneseq
        %v1669 = vshrl.u32 %v1668, 7
        %v1670 = vsub.s32 0, %v1669
        %v1671 = vrot.slane %v1648, %v1670
        %v1673 = vadd.f32 %v1666, %v1671
        %v1674 = vpack.c.bf16 %v1673, %v1673
        %v1675 = vld [vmem:[#allocation11] sm:$0xff]
        %v1676 = vld [vmem:[#allocation11 + $0x8] sm:$0xff]
        %v1677 = vld [vmem:[#allocation11 + $0x10] sm:$0xff]
        %v1678 = vld [vmem:[#allocation11 + $0x18] sm:$0xff]
        %v1679 = vld [vmem:[#allocation11 + $0x20] sm:$0xff]
        %v1680 = vld [vmem:[#allocation11 + $0x28] sm:$0xff]
        %v1681 = vld [vmem:[#allocation11 + $0x30] sm:$0xff]
        %v1682 = vld [vmem:[#allocation11 + $0x38] sm:$0xff]
        %v1683 = vld [vmem:[#allocation11 + $0x40] sm:$0xff]
        %v1684 = vld [vmem:[#allocation11 + $0x48] sm:$0xff]
        %v1685 = vld [vmem:[#allocation11 + $0x50] sm:$0xff]
        %v1686 = vld [vmem:[#allocation11 + $0x58] sm:$0xff]
        %v1687 = vld [vmem:[#allocation11 + $0x60] sm:$0xff]
        %v1688 = vld [vmem:[#allocation11 + $0x68] sm:$0xff]
        %v1689 = vld [vmem:[#allocation11 + $0x70] sm:$0xff]
        %v1690 = vld [vmem:[#allocation11 + $0x78] sm:$0xff]
        %v1691 = vld [vmem:[#allocation11 + $0x80] sm:$0xff]
        %v1692 = vld [vmem:[#allocation11 + $0x88] sm:$0xff]
        %v1693 = vld [vmem:[#allocation11 + $0x90] sm:$0xff]
        %v1694 = vld [vmem:[#allocation11 + $0x98] sm:$0xff]
        %v1695 = vld [vmem:[#allocation11 + $0xa0] sm:$0xff]
        %v1696 = vld [vmem:[#allocation11 + $0xa8] sm:$0xff]
        %v1697 = vld [vmem:[#allocation11 + $0xb0] sm:$0xff]
        %v1698 = vld [vmem:[#allocation11 + $0xb8] sm:$0xff]
        %v1699 = vld [vmem:[#allocation11 + $0xc0] sm:$0xff]
        %v1700 = vld [vmem:[#allocation11 + $0xc8] sm:$0xff]
        %v1701 = vld [vmem:[#allocation11 + $0xd0] sm:$0xff]
        %v1702 = vld [vmem:[#allocation11 + $0xd8] sm:$0xff]
        %v1703 = vld [vmem:[#allocation11 + $0xe0] sm:$0xff]
        %v1704 = vld [vmem:[#allocation11 + $0xe8] sm:$0xff]
        %v1705 = vld [vmem:[#allocation11 + $0xf0] sm:$0xff]
        %v1706 = vld [vmem:[#allocation11 + $0xf8] sm:$0xff]
        %v1707 = vld [vmem:[%s16] sm:$0xf]
        %v1709 = vlaneseq
        %v1710 = vshrl.u32 %v1709, 7
        %v1711 = vsub.s32 0, %v1710
        %v1712 = vrot.slane %v1707, %v1711
        %v1713 = vlaneseq
        %v1714 = vshrl.u32 %v1713, 7
        %v1715 = vsub.s32 1, %v1714
        %v1716 = vrot.slane %v1707, %v1715
        %v1717 = vlaneseq
        %v1718 = vshrl.u32 %v1717, 7
        %v1719 = vsub.s32 2, %v1718
        %v1720 = vrot.slane %v1707, %v1719
        %v1721 = vlaneseq
        %v1722 = vshrl.u32 %v1721, 7
        %v1723 = vsub.s32 3, %v1722
        %v1724 = vrot.slane %v1707, %v1723
        %v1761 = vunpack.c.l.b16 %v1675
        %v1762 = vunpack.c.h.b16 %v1675
        %v1763 = vunpack.c.l.b16 %v1676
        %v1764 = vunpack.c.h.b16 %v1676
        %v1765 = vunpack.c.l.b16 %v1677
        %v1766 = vunpack.c.h.b16 %v1677
        %v1767 = vunpack.c.l.b16 %v1678
        %v1768 = vunpack.c.h.b16 %v1678
        %v1769 = vunpack.c.l.b16 %v1679
        %v1770 = vunpack.c.h.b16 %v1679
        %v1771 = vunpack.c.l.b16 %v1680
        %v1772 = vunpack.c.h.b16 %v1680
        %v1773 = vunpack.c.l.b16 %v1681
        %v1774 = vunpack.c.h.b16 %v1681
        %v1775 = vunpack.c.l.b16 %v1682
        %v1776 = vunpack.c.h.b16 %v1682
        %v1777 = vunpack.c.l.b16 %v1683
        %v1778 = vunpack.c.h.b16 %v1683
        %v1779 = vunpack.c.l.b16 %v1684
        %v1780 = vunpack.c.h.b16 %v1684
        %v1781 = vunpack.c.l.b16 %v1685
        %v1782 = vunpack.c.h.b16 %v1685
        %v1783 = vunpack.c.l.b16 %v1686
        %v1784 = vunpack.c.h.b16 %v1686
        %v1785 = vunpack.c.l.b16 %v1687
        %v1786 = vunpack.c.h.b16 %v1687
        %v1787 = vunpack.c.l.b16 %v1688
        %v1788 = vunpack.c.h.b16 %v1688
        %v1789 = vunpack.c.l.b16 %v1689
        %v1790 = vunpack.c.h.b16 %v1689
        %v1791 = vunpack.c.l.b16 %v1690
        %v1792 = vunpack.c.h.b16 %v1690
        %v1793 = vunpack.c.l.b16 %v1691
        %v1794 = vunpack.c.h.b16 %v1691
        %v1795 = vunpack.c.l.b16 %v1692
        %v1796 = vunpack.c.h.b16 %v1692
        %v1797 = vunpack.c.l.b16 %v1693
        %v1798 = vunpack.c.h.b16 %v1693
        %v1799 = vunpack.c.l.b16 %v1694
        %v1800 = vunpack.c.h.b16 %v1694
        %v1801 = vunpack.c.l.b16 %v1695
        %v1802 = vunpack.c.h.b16 %v1695
        %v1803 = vunpack.c.l.b16 %v1696
        %v1804 = vunpack.c.h.b16 %v1696
        %v1805 = vunpack.c.l.b16 %v1697
        %v1806 = vunpack.c.h.b16 %v1697
        %v1807 = vunpack.c.l.b16 %v1698
        %v1808 = vunpack.c.h.b16 %v1698
        %v1809 = vunpack.c.l.b16 %v1699
        %v1810 = vunpack.c.h.b16 %v1699
        %v1811 = vunpack.c.l.b16 %v1700
        %v1812 = vunpack.c.h.b16 %v1700
        %v1813 = vunpack.c.l.b16 %v1701
        %v1814 = vunpack.c.h.b16 %v1701
        %v1815 = vunpack.c.l.b16 %v1702
        %v1816 = vunpack.c.h.b16 %v1702
        %v1817 = vunpack.c.l.b16 %v1703
        %v1818 = vunpack.c.h.b16 %v1703
        %v1819 = vunpack.c.l.b16 %v1704
        %v1820 = vunpack.c.h.b16 %v1704
        %v1821 = vunpack.c.l.b16 %v1705
        %v1822 = vunpack.c.h.b16 %v1705
        %v1823 = vunpack.c.l.b16 %v1706
        %v1824 = vunpack.c.h.b16 %v1706
        %v1825 = vpack.c.b16 %v1765, %v1761
        %v1826 = vpack.c.b16 %v1766, %v1762
        %v1827 = vpack.c.b16 %v1767, %v1763
        %v1828 = vpack.c.b16 %v1768, %v1764
        %v1829 = vpack.c.b16 %v1773, %v1769
        %v1830 = vpack.c.b16 %v1774, %v1770
        %v1831 = vpack.c.b16 %v1775, %v1771
        %v1832 = vpack.c.b16 %v1776, %v1772
        %v1833 = vpack.c.b16 %v1781, %v1777
        %v1834 = vpack.c.b16 %v1782, %v1778
        %v1835 = vpack.c.b16 %v1783, %v1779
        %v1836 = vpack.c.b16 %v1784, %v1780
        %v1837 = vpack.c.b16 %v1789, %v1785
        %v1838 = vpack.c.b16 %v1790, %v1786
        %v1839 = vpack.c.b16 %v1791, %v1787
        %v1840 = vpack.c.b16 %v1792, %v1788
        %v1841 = vpack.c.b16 %v1797, %v1793
        %v1842 = vpack.c.b16 %v1798, %v1794
        %v1843 = vpack.c.b16 %v1799, %v1795
        %v1844 = vpack.c.b16 %v1800, %v1796
        %v1845 = vpack.c.b16 %v1805, %v1801
        %v1846 = vpack.c.b16 %v1806, %v1802
        %v1847 = vpack.c.b16 %v1807, %v1803
        %v1848 = vpack.c.b16 %v1808, %v1804
        %v1849 = vpack.c.b16 %v1813, %v1809
        %v1850 = vpack.c.b16 %v1814, %v1810
        %v1851 = vpack.c.b16 %v1815, %v1811
        %v1852 = vpack.c.b16 %v1816, %v1812
        %v1853 = vpack.c.b16 %v1821, %v1817
        %v1854 = vpack.c.b16 %v1822, %v1818
        %v1855 = vpack.c.b16 %v1823, %v1819
        %v1856 = vpack.c.b16 %v1824, %v1820
        %1889 = vmatprep.subr.bf16.mxu0 %v1826
        %1890 = vmatpush1.bf16.msra.mxu0 %v1825
        %1891 = vmatprep.subr.bf16.mxu0 %v1830
        %1892 = vmatpush1.bf16.msra.mxu0 %v1829
        %1893 = vmatprep.subr.bf16.mxu0 %v1834
        %1894 = vmatpush1.bf16.msra.mxu0 %v1833
        %1895 = vmatprep.subr.bf16.mxu0 %v1838
        %1896 = vmatpush1.bf16.msra.mxu0 %v1837
        %1897 = vmatprep.subr.bf16.mxu0 %v1842
        %1898 = vmatpush1.bf16.msra.mxu0 %v1841
        %1899 = vmatprep.subr.bf16.mxu0 %v1846
        %1900 = vmatpush1.bf16.msra.mxu0 %v1845
        %1901 = vmatprep.subr.bf16.mxu0 %v1850
        %1902 = vmatpush1.bf16.msra.mxu0 %v1849
        %1903 = vmatprep.subr.bf16.mxu0 %v1854
        %1904 = vmatpush1.bf16.msra.mxu0 %v1853
        %1905 = vmatprep.subr.bf16.mxu0 0
        %1906 = vmatpush1.bf16.msra.mxu0 0
        %1907 = vmatprep.subr.bf16.mxu0 0
        %1908 = vmatpush1.bf16.msra.mxu0 0
        %1909 = vmatprep.subr.bf16.mxu0 0
        %1910 = vmatpush1.bf16.msra.mxu0 0
        %1911 = vmatprep.subr.bf16.mxu0 0
        %1912 = vmatpush1.bf16.msra.mxu0 0
        %1913 = vmatprep.subr.bf16.mxu0 0
        %1914 = vmatpush1.bf16.msra.mxu0 0
        %1915 = vmatprep.subr.bf16.mxu0 0
        %1916 = vmatpush1.bf16.msra.mxu0 0
        %1917 = vmatprep.subr.bf16.mxu0 0
        %1918 = vmatpush1.bf16.msra.mxu0 0
        %1919 = vmatprep.subr.bf16.mxu0 0
        %1920 = vmatpush1.bf16.msra.mxu0 0
        %1921 = vmatprep.mubr.bf16.mxu0 0
        %1922 = vmatmul.mubr.bf16.gmra.mrb[0].mxu0 %v1674
        %v1923 = vpop.f32.mrb[0].mxu0
        %v1924 = vadd.f32 %v1712, %v1923
        %v1925 = vpop.f32.mrb[0].mxu0
        %v1926 = vadd.f32 %v1716, %v1925
        %v1927 = vpop.f32.mrb[0].mxu0
        %v1928 = vpop.f32.mrb[0].mxu0
        %1929 = vdwg.mxu0
        %1930 = vmatprep.subr.bf16.mxu0 %v1828
        %1931 = vmatpush1.bf16.msra.mxu0 %v1827
        %1932 = vmatprep.subr.bf16.mxu0 %v1832
        %1933 = vmatpush1.bf16.msra.mxu0 %v1831
        %1934 = vmatprep.subr.bf16.mxu0 %v1836
        %1935 = vmatpush1.bf16.msra.mxu0 %v1835
        %1936 = vmatprep.subr.bf16.mxu0 %v1840
        %1937 = vmatpush1.bf16.msra.mxu0 %v1839
        %1938 = vmatprep.subr.bf16.mxu0 %v1844
        %1939 = vmatpush1.bf16.msra.mxu0 %v1843
        %1940 = vmatprep.subr.bf16.mxu0 %v1848
        %1941 = vmatpush1.bf16.msra.mxu0 %v1847
        %1942 = vmatprep.subr.bf16.mxu0 %v1852
        %1943 = vmatpush1.bf16.msra.mxu0 %v1851
        %1944 = vmatprep.subr.bf16.mxu0 %v1856
        %1945 = vmatpush1.bf16.msra.mxu0 %v1855
        %1946 = vmatprep.subr.bf16.mxu0 0
        %1947 = vmatpush1.bf16.msra.mxu0 0
        %1948 = vmatprep.subr.bf16.mxu0 0
        %1949 = vmatpush1.bf16.msra.mxu0 0
        %1950 = vmatprep.subr.bf16.mxu0 0
        %1951 = vmatpush1.bf16.msra.mxu0 0
        %1952 = vmatprep.subr.bf16.mxu0 0
        %1953 = vmatpush1.bf16.msra.mxu0 0
        %1954 = vmatprep.subr.bf16.mxu0 0
        %1955 = vmatpush1.bf16.msra.mxu0 0
        %1956 = vmatprep.subr.bf16.mxu0 0
        %1957 = vmatpush1.bf16.msra.mxu0 0
        %1958 = vmatprep.subr.bf16.mxu0 0
        %1959 = vmatpush1.bf16.msra.mxu0 0
        %1960 = vmatprep.subr.bf16.mxu0 0
        %1961 = vmatpush1.bf16.msra.mxu0 0
        %1962 = vmatprep.mubr.bf16.mxu0 0
        %1963 = vmatmul.mubr.bf16.gmra.mrb[0].mxu0 %v1674
        %v1964 = vpop.f32.mrb[0].mxu0
        %v1965 = vadd.f32 %v1720, %v1964
        %v1966 = vpop.f32.mrb[0].mxu0
        %v1967 = vadd.f32 %v1724, %v1966
        %v1968 = vpop.f32.mrb[0].mxu0
        %v1969 = vpop.f32.mrb[0].mxu0
        %1970 = vdwg.mxu0
        %v1971 = vmul.f32 %v1924, %v1924
        %v1972 = vmul.f32 %v1926, %v1926
        %v1973 = vmul.f32 %v1965, %v1965
        %v1974 = vmul.f32 %v1967, %v1967
        %v1975 = vmul.f32 %v1924, %v1971
        %v1976 = vmul.f32 %v1926, %v1972
        %v1977 = vmul.f32 %v1965, %v1973
        %v1978 = vmul.f32 %v1967, %v1974
        %v1979 = vmul.f32 %v1975, 0.044715
        %v1980 = vmul.f32 %v1976, 0.044715
        %v1981 = vmul.f32 %v1977, 0.044715
        %v1982 = vmul.f32 %v1978, 0.044715
        %v1983 = vadd.f32 %v1924, %v1979
        %v1984 = vadd.f32 %v1926, %v1980
        %v1985 = vadd.f32 %v1965, %v1981
        %v1986 = vadd.f32 %v1967, %v1982
        %v1987 = vmul.f32 %v1983, 0.7978846
        %v1988 = vmul.f32 %v1984, 0.7978846
        %v1989 = vmul.f32 %v1985, 0.7978846
        %v1990 = vmul.f32 %v1986, 0.7978846
        %v1991 = vtanh.pop %v1987
        %v1992 = vtanh.pop %v1988
        %v1993 = vtanh.pop %v1989
        %v1994 = vtanh.pop %v1990
        %v1995 = vadd.f32 %v1991, 1.0
        %v1996 = vadd.f32 %v1992, 1.0
        %v1997 = vadd.f32 %v1993, 1.0
        %v1998 = vadd.f32 %v1994, 1.0
        %v1999 = vmul.f32 %v1995, 0.5
        %v2000 = vmul.f32 %v1996, 0.5
        %v2001 = vmul.f32 %v1997, 0.5
        %v2002 = vmul.f32 %v1998, 0.5
        %v2003 = vmul.f32 %v1924, %v1999
        %v2004 = vmul.f32 %v1926, %v2000
        %v2005 = vmul.f32 %v1965, %v2001
        %v2006 = vmul.f32 %v1967, %v2002
        %v2007 = vpack.c.bf16 %v2003, %v2003
        %v2008 = vpack.c.bf16 %v2004, %v2004
        %v2009 = vpack.c.bf16 %v2005, %v2005
        %v2010 = vpack.c.bf16 %v2006, %v2006
        %v2011 = vld [vmem:[#allocation13] sm:$0xf]
        %v2012 = vld [vmem:[#allocation13 + $0x4] sm:$0xf]
        %v2013 = vld [vmem:[#allocation13 + $0x8] sm:$0xf]
        %v2014 = vld [vmem:[#allocation13 + $0xc] sm:$0xf]
        %v2015 = vld [vmem:[#allocation13 + $0x10] sm:$0xf]
        %v2016 = vld [vmem:[#allocation13 + $0x14] sm:$0xf]
        %v2017 = vld [vmem:[#allocation13 + $0x18] sm:$0xf]
        %v2018 = vld [vmem:[#allocation13 + $0x1c] sm:$0xf]
        %v2019 = vld [vmem:[#allocation13 + $0x20] sm:$0xf]
        %v2020 = vld [vmem:[#allocation13 + $0x24] sm:$0xf]
        %v2021 = vld [vmem:[#allocation13 + $0x28] sm:$0xf]
        %v2022 = vld [vmem:[#allocation13 + $0x2c] sm:$0xf]
        %v2023 = vld [vmem:[#allocation13 + $0x30] sm:$0xf]
        %v2024 = vld [vmem:[#allocation13 + $0x34] sm:$0xf]
        %v2025 = vld [vmem:[#allocation13 + $0x38] sm:$0xf]
        %v2026 = vld [vmem:[#allocation13 + $0x3c] sm:$0xf]
        %v2027 = vld [vmem:[#allocation13 + $0x40] sm:$0xf]
        %v2028 = vld [vmem:[#allocation13 + $0x44] sm:$0xf]
        %v2029 = vld [vmem:[#allocation13 + $0x48] sm:$0xf]
        %v2030 = vld [vmem:[#allocation13 + $0x4c] sm:$0xf]
        %v2031 = vld [vmem:[#allocation13 + $0x50] sm:$0xf]
        %v2032 = vld [vmem:[#allocation13 + $0x54] sm:$0xf]
        %v2033 = vld [vmem:[#allocation13 + $0x58] sm:$0xf]
        %v2034 = vld [vmem:[#allocation13 + $0x5c] sm:$0xf]
        %v2035 = vld [vmem:[#allocation13 + $0x60] sm:$0xf]
        %v2036 = vld [vmem:[#allocation13 + $0x64] sm:$0xf]
        %v2037 = vld [vmem:[#allocation13 + $0x68] sm:$0xf]
        %v2038 = vld [vmem:[#allocation13 + $0x6c] sm:$0xf]
        %v2039 = vld [vmem:[#allocation13 + $0x70] sm:$0xf]
        %v2040 = vld [vmem:[#allocation13 + $0x74] sm:$0xf]
        %v2041 = vld [vmem:[#allocation13 + $0x78] sm:$0xf]
        %v2042 = vld [vmem:[#allocation13 + $0x7c] sm:$0xf]
        %v2043 = vld [vmem:[#allocation13 + $0x80] sm:$0xf]
        %v2044 = vld [vmem:[#allocation13 + $0x84] sm:$0xf]
        %v2045 = vld [vmem:[#allocation13 + $0x88] sm:$0xf]
        %v2046 = vld [vmem:[#allocation13 + $0x8c] sm:$0xf]
        %v2047 = vld [vmem:[#allocation13 + $0x90] sm:$0xf]
        %v2048 = vld [vmem:[#allocation13 + $0x94] sm:$0xf]
        %v2049 = vld [vmem:[#allocation13 + $0x98] sm:$0xf]
        %v2050 = vld [vmem:[#allocation13 + $0x9c] sm:$0xf]
        %v2051 = vld [vmem:[#allocation13 + $0xa0] sm:$0xf]
        %v2052 = vld [vmem:[#allocation13 + $0xa4] sm:$0xf]
        %v2053 = vld [vmem:[#allocation13 + $0xa8] sm:$0xf]
        %v2054 = vld [vmem:[#allocation13 + $0xac] sm:$0xf]
        %v2055 = vld [vmem:[#allocation13 + $0xb0] sm:$0xf]
        %v2056 = vld [vmem:[#allocation13 + $0xb4] sm:$0xf]
        %v2057 = vld [vmem:[#allocation13 + $0xb8] sm:$0xf]
        %v2058 = vld [vmem:[#allocation13 + $0xbc] sm:$0xf]
        %v2059 = vld [vmem:[#allocation13 + $0xc0] sm:$0xf]
        %v2060 = vld [vmem:[#allocation13 + $0xc4] sm:$0xf]
        %v2061 = vld [vmem:[#allocation13 + $0xc8] sm:$0xf]
        %v2062 = vld [vmem:[#allocation13 + $0xcc] sm:$0xf]
        %v2063 = vld [vmem:[#allocation13 + $0xd0] sm:$0xf]
        %v2064 = vld [vmem:[#allocation13 + $0xd4] sm:$0xf]
        %v2065 = vld [vmem:[#allocation13 + $0xd8] sm:$0xf]
        %v2066 = vld [vmem:[#allocation13 + $0xdc] sm:$0xf]
        %v2067 = vld [vmem:[#allocation13 + $0xe0] sm:$0xf]
        %v2068 = vld [vmem:[#allocation13 + $0xe4] sm:$0xf]
        %v2069 = vld [vmem:[#allocation13 + $0xe8] sm:$0xf]
        %v2070 = vld [vmem:[#allocation13 + $0xec] sm:$0xf]
        %v2071 = vld [vmem:[#allocation13 + $0xf0] sm:$0xf]
        %v2072 = vld [vmem:[#allocation13 + $0xf4] sm:$0xf]
        %v2073 = vld [vmem:[#allocation13 + $0xf8] sm:$0xf]
        %v2074 = vld [vmem:[#allocation13 + $0xfc] sm:$0xf]
        %v2075 = vld [vmem:[%s18] sm:$0x1]
        %v2077 = vlaneseq
        %v2078 = vshrl.u32 %v2077, 7
        %v2079 = vsub.s32 0, %v2078
        %v2080 = vrot.slane %v2075, %v2079
        %v2146 = vunpack.c.l.b16 %v2011
        %v2147 = vunpack.c.l.b16 %v2012
        %v2148 = vunpack.c.l.b16 %v2013
        %v2149 = vunpack.c.l.b16 %v2014
        %v2150 = vunpack.c.l.b16 %v2015
        %v2151 = vunpack.c.l.b16 %v2016
        %v2152 = vunpack.c.l.b16 %v2017
        %v2153 = vunpack.c.l.b16 %v2018
        %v2154 = vunpack.c.l.b16 %v2019
        %v2155 = vunpack.c.l.b16 %v2020
        %v2156 = vunpack.c.l.b16 %v2021
        %v2157 = vunpack.c.l.b16 %v2022
        %v2158 = vunpack.c.l.b16 %v2023
        %v2159 = vunpack.c.l.b16 %v2024
        %v2160 = vunpack.c.l.b16 %v2025
        %v2161 = vunpack.c.l.b16 %v2026
        %v2162 = vunpack.c.l.b16 %v2027
        %v2163 = vunpack.c.l.b16 %v2028
        %v2164 = vunpack.c.l.b16 %v2029
        %v2165 = vunpack.c.l.b16 %v2030
        %v2166 = vunpack.c.l.b16 %v2031
        %v2167 = vunpack.c.l.b16 %v2032
        %v2168 = vunpack.c.l.b16 %v2033
        %v2169 = vunpack.c.l.b16 %v2034
        %v2170 = vunpack.c.l.b16 %v2035
        %v2171 = vunpack.c.l.b16 %v2036
        %v2172 = vunpack.c.l.b16 %v2037
        %v2173 = vunpack.c.l.b16 %v2038
        %v2174 = vunpack.c.l.b16 %v2039
        %v2175 = vunpack.c.l.b16 %v2040
        %v2176 = vunpack.c.l.b16 %v2041
        %v2177 = vunpack.c.l.b16 %v2042
        %v2178 = vunpack.c.l.b16 %v2043
        %v2179 = vunpack.c.l.b16 %v2044
        %v2180 = vunpack.c.l.b16 %v2045
        %v2181 = vunpack.c.l.b16 %v2046
        %v2182 = vunpack.c.l.b16 %v2047
        %v2183 = vunpack.c.l.b16 %v2048
        %v2184 = vunpack.c.l.b16 %v2049
        %v2185 = vunpack.c.l.b16 %v2050
        %v2186 = vunpack.c.l.b16 %v2051
        %v2187 = vunpack.c.l.b16 %v2052
        %v2188 = vunpack.c.l.b16 %v2053
        %v2189 = vunpack.c.l.b16 %v2054
        %v2190 = vunpack.c.l.b16 %v2055
        %v2191 = vunpack.c.l.b16 %v2056
        %v2192 = vunpack.c.l.b16 %v2057
        %v2193 = vunpack.c.l.b16 %v2058
        %v2194 = vunpack.c.l.b16 %v2059
        %v2195 = vunpack.c.l.b16 %v2060
        %v2196 = vunpack.c.l.b16 %v2061
        %v2197 = vunpack.c.l.b16 %v2062
        %v2198 = vunpack.c.l.b16 %v2063
        %v2199 = vunpack.c.l.b16 %v2064
        %v2200 = vunpack.c.l.b16 %v2065
        %v2201 = vunpack.c.l.b16 %v2066
        %v2202 = vunpack.c.l.b16 %v2067
        %v2203 = vunpack.c.l.b16 %v2068
        %v2204 = vunpack.c.l.b16 %v2069
        %v2205 = vunpack.c.l.b16 %v2070
        %v2206 = vunpack.c.l.b16 %v2071
        %v2207 = vunpack.c.l.b16 %v2072
        %v2208 = vunpack.c.l.b16 %v2073
        %v2209 = vunpack.c.l.b16 %v2074
        %v2210 = vpack.c.b16 %v2147, %v2146
        %v2211 = vpack.c.b16 %v2149, %v2148
        %v2212 = vpack.c.b16 %v2151, %v2150
        %v2213 = vpack.c.b16 %v2153, %v2152
        %v2214 = vpack.c.b16 %v2155, %v2154
        %v2215 = vpack.c.b16 %v2157, %v2156
        %v2216 = vpack.c.b16 %v2159, %v2158
        %v2217 = vpack.c.b16 %v2161, %v2160
        %v2218 = vpack.c.b16 %v2163, %v2162
        %v2219 = vpack.c.b16 %v2165, %v2164
        %v2220 = vpack.c.b16 %v2167, %v2166
        %v2221 = vpack.c.b16 %v2169, %v2168
        %v2222 = vpack.c.b16 %v2171, %v2170
        %v2223 = vpack.c.b16 %v2173, %v2172
        %v2224 = vpack.c.b16 %v2175, %v2174
        %v2225 = vpack.c.b16 %v2177, %v2176
        %v2226 = vpack.c.b16 %v2179, %v2178
        %v2227 = vpack.c.b16 %v2181, %v2180
        %v2228 = vpack.c.b16 %v2183, %v2182
        %v2229 = vpack.c.b16 %v2185, %v2184
        %v2230 = vpack.c.b16 %v2187, %v2186
        %v2231 = vpack.c.b16 %v2189, %v2188
        %v2232 = vpack.c.b16 %v2191, %v2190
        %v2233 = vpack.c.b16 %v2193, %v2192
        %v2234 = vpack.c.b16 %v2195, %v2194
        %v2235 = vpack.c.b16 %v2197, %v2196
        %v2236 = vpack.c.b16 %v2199, %v2198
        %v2237 = vpack.c.b16 %v2201, %v2200
        %v2238 = vpack.c.b16 %v2203, %v2202
        %v2239 = vpack.c.b16 %v2205, %v2204
        %v2240 = vpack.c.b16 %v2207, %v2206
        %v2241 = vpack.c.b16 %v2209, %v2208
        %2274 = vmatprep.subr.bf16.mxu0 0
        %2275 = vmatpush1.bf16.msra.mxu0 %v2210
        %2276 = vmatprep.subr.bf16.mxu0 0
        %2277 = vmatpush1.bf16.msra.mxu0 %v2211
        %2278 = vmatprep.subr.bf16.mxu0 0
        %2279 = vmatpush1.bf16.msra.mxu0 %v2212
        %2280 = vmatprep.subr.bf16.mxu0 0
        %2281 = vmatpush1.bf16.msra.mxu0 %v2213
        %2282 = vmatprep.subr.bf16.mxu0 0
        %2283 = vmatpush1.bf16.msra.mxu0 %v2214
        %2284 = vmatprep.subr.bf16.mxu0 0
        %2285 = vmatpush1.bf16.msra.mxu0 %v2215
        %2286 = vmatprep.subr.bf16.mxu0 0
        %2287 = vmatpush1.bf16.msra.mxu0 %v2216
        %2288 = vmatprep.subr.bf16.mxu0 0
        %2289 = vmatpush1.bf16.msra.mxu0 %v2217
        %2290 = vmatprep.subr.bf16.mxu0 0
        %2291 = vmatpush1.bf16.msra.mxu0 %v2218
        %2292 = vmatprep.subr.bf16.mxu0 0
        %2293 = vmatpush1.bf16.msra.mxu0 %v2219
        %2294 = vmatprep.subr.bf16.mxu0 0
        %2295 = vmatpush1.bf16.msra.mxu0 %v2220
        %2296 = vmatprep.subr.bf16.mxu0 0
        %2297 = vmatpush1.bf16.msra.mxu0 %v2221
        %2298 = vmatprep.subr.bf16.mxu0 0
        %2299 = vmatpush1.bf16.msra.mxu0 %v2222
        %2300 = vmatprep.subr.bf16.mxu0 0
        %2301 = vmatpush1.bf16.msra.mxu0 %v2223
        %2302 = vmatprep.subr.bf16.mxu0 0
        %2303 = vmatpush1.bf16.msra.mxu0 %v2224
        %2304 = vmatprep.subr.bf16.mxu0 0
        %2305 = vmatpush1.bf16.msra.mxu0 %v2225
        %2306 = vmatprep.mubr.bf16.mxu0 %v2008
        %2307 = vmatmul.mubr.bf16.gmra.mrb[0].mxu0 %v2007
        %v2308 = vpop.f32.mrb[0].mxu0
        %v2309 = vadd.f32 %v2080, %v2308
        %v2310 = vpop.f32.mrb[0].mxu0
        %v2311 = vpop.f32.mrb[0].mxu0
        %v2312 = vpop.f32.mrb[0].mxu0
        %2313 = vdwg.mxu0
        %2314 = vmatprep.subr.bf16.mxu0 0
        %2315 = vmatpush1.bf16.msra.mxu0 %v2226
        %2316 = vmatprep.subr.bf16.mxu0 0
        %2317 = vmatpush1.bf16.msra.mxu0 %v2227
        %2318 = vmatprep.subr.bf16.mxu0 0
        %2319 = vmatpush1.bf16.msra.mxu0 %v2228
        %2320 = vmatprep.subr.bf16.mxu0 0
        %2321 = vmatpush1.bf16.msra.mxu0 %v2229
        %2322 = vmatprep.subr.bf16.mxu0 0
        %2323 = vmatpush1.bf16.msra.mxu0 %v2230
        %2324 = vmatprep.subr.bf16.mxu0 0
        %2325 = vmatpush1.bf16.msra.mxu0 %v2231
        %2326 = vmatprep.subr.bf16.mxu0 0
        %2327 = vmatpush1.bf16.msra.mxu0 %v2232
        %2328 = vmatprep.subr.bf16.mxu0 0
        %2329 = vmatpush1.bf16.msra.mxu0 %v2233
        %2330 = vmatprep.subr.bf16.mxu0 0
        %2331 = vmatpush1.bf16.msra.mxu0 %v2234
        %2332 = vmatprep.subr.bf16.mxu0 0
        %2333 = vmatpush1.bf16.msra.mxu0 %v2235
        %2334 = vmatprep.subr.bf16.mxu0 0
        %2335 = vmatpush1.bf16.msra.mxu0 %v2236
        %2336 = vmatprep.subr.bf16.mxu0 0
        %2337 = vmatpush1.bf16.msra.mxu0 %v2237
        %2338 = vmatprep.subr.bf16.mxu0 0
        %2339 = vmatpush1.bf16.msra.mxu0 %v2238
        %2340 = vmatprep.subr.bf16.mxu0 0
        %2341 = vmatpush1.bf16.msra.mxu0 %v2239
        %2342 = vmatprep.subr.bf16.mxu0 0
        %2343 = vmatpush1.bf16.msra.mxu0 %v2240
        %2344 = vmatprep.subr.bf16.mxu0 0
        %2345 = vmatpush1.bf16.msra.mxu0 %v2241
        %2346 = vmatprep.mubr.bf16.mxu0 %v2010
        %2347 = vmatmul.mubr.bf16.gmra.mrb[0].mxu0 %v2009
        %v2348 = vpop.f32.mrb[0].mxu0
        %v2349 = vadd.f32 %v2309, %v2348
        %v2350 = vpop.f32.mrb[0].mxu0
        %v2351 = vpop.f32.mrb[0].mxu0
        %v2352 = vpop.f32.mrb[0].mxu0
        %2353 = vdwg.mxu0
        %v2354 = vadd.f32 %v2349, %v1646
        %2355 = vst [vmem:[%s737] sm:$0xff] %v2354
        %s2356 = sand.u32 %s463, 1
        %s2357 = scalar_lea.sflag [#allocation4], %s2356
        %s2358 = sand.u32 %s463, 1
        %s2359 = smul.addr %s2358, 8
        %s2360 = scalar_lea.vmem [#allocation14], %s2359
        // Predicated region
        $region125: #{tpu_custom_call.1} parent=95 // pred_check
          %p2361 = pneg %p473
        $region126: #{tpu_custom_call.1} parent=95 // pred_check_branch
          %2363 = sbr.rel (%p2361) target = $region128
        $region127: #{tpu_custom_call.1} parent=95 // pred_region
          %s2365 = ssub.s32 128, 128
          %2366 = vsyncadd %s2357, %s2365
          %s2367 = smul.addr %s41, 128
          %s2368 = scalar_lea.hbm %s19, %s2367
          %s2370 = sshll.u32 %s2360, 4
          %s2371 = int_to_ptr.vmem [resolvable:$true] %s2370
          %2373 = dma.vmem_to_hbm [thread:$0]  %s2371, 128, %s2368, %s2357
        $region128: #{tpu_custom_call.1} parent=95 // pred_fallthru
          _
      $region96: #{tpu_custom_call.1} parent=5 // pred_fallthru
        _
      %p2374 = scmp.le.s32.totalorder 2, %s36
      // Predicated region
      $region129: #{tpu_custom_call.1} parent=5 // pred_check
        %p2375 = pneg %p2374
      $region130: #{tpu_custom_call.1} parent=5 // pred_check_branch
        %2377 = sbr.rel (%p2375) target = $region132
      $region131: #{tpu_custom_call.1} parent=5 // pred_region
        %s2378 = ssub.s32 %s36, 2
        // Predicated region
        $region133: #{tpu_custom_call.1} parent=131 // pred_check
          %p2379 = pneg %p479
        $region134: #{tpu_custom_call.1} parent=131 // pred_check_branch
          %2381 = sbr.rel (%p2379) target = $region136
        $region135: #{tpu_custom_call.1} parent=131 // pred_region
          %s2382 = sand.u32 %s464, 1
          %s2383 = scalar_lea.sflag [#allocation4], %s2382
          %s2384 = sand.u32 %s464, 1
          %s2385 = smul.addr %s2384, 8
          %s2386 = scalar_lea.vmem [#allocation14], %s2385
          %2387 = dma.done %s2383, 128
        $region136: #{tpu_custom_call.1} parent=131 // pred_fallthru
          _
      $region132: #{tpu_custom_call.1} parent=5 // pred_fallthru
        _
    $region6: #{tpu_custom_call.1} parent=1 // loop_footer
      %s40 = sadd.s32 1, %s36
    $region7: #{tpu_custom_call.1} parent=1 // loop_footer_branch
      %35 = sbr.rel target = $region3
    $region8: #{tpu_custom_call.1} parent=1 // loop_exit
      _
    %2388 = vsyncpa [#allocation3], 1
    %s2389 = scalar_lea.sflag [#allocation3], 1
    %2390 = vsyncpa %s2389, 1
    %2391 = vsyncpa [#allocation6], 1
    %s2392 = scalar_lea.sflag [#allocation6], 1
    %2393 = vsyncpa %s2392, 1
    %2394 = vsyncpa [#allocation9], 1
    %2395 = vsyncpa [#allocation12], 1
    %2396 = vsyncpa [#allocation4], 1
    %s2397 = scalar_lea.sflag [#allocation4], 1
    %2398 = vsyncpa %s2397, 1

</llo_original>
